<compile_context>
chip_gen: v7x
topology: tpu7x:2x2x1
jax: 0.10.0
libtpu: 0.0.40
codegen_flags: <defaults>
</compile_context>

<pallas_src>
import numpy as np
import jax
import jax.numpy as jnp
from jax.experimental import pallas as pl
from jax.experimental.pallas import tpu as pltpu


_VMEM_LIMIT = 32 * 1024 * 1024   # bytes; safe on v5e/v6e (128 MiB) and v7x (64 MiB)


# ----------------------------- Pallas kernels ------------------------------

def _conv_relu_kernel(xs_ref, w_ref, b_ref, o_ref):
    """One P-tile: o = relu(xs @ w + b); bf16 matmul, f32 accumulate."""
    z = jnp.dot(xs_ref[...], w_ref[...], preferred_element_type=jnp.float32)
    o_ref[...] = jnp.maximum(z + b_ref[...], 0.0).astype(o_ref.dtype)


def _conv_stats_kernel(xs_ref, w_ref, b_ref, z_ref, sum_ref, ssq_ref):
    """One P-tile: z = xs @ w + b, plus per-tile per-channel sum / sum(z^2)."""
    z = jnp.dot(xs_ref[...], w_ref[...], preferred_element_type=jnp.float32)
    z = z + b_ref[...]
    z_ref[...] = z
    s = jnp.sum(z, axis=0, keepdims=True)        # (1, C)
    q = jnp.sum(z * z, axis=0, keepdims=True)    # (1, C)
    # Stats blocks are (1, 8, C) so the trailing block dims stay (8, C)
    # tile-friendly; the wrapper only consumes sublane row 0.
    sum_ref[...] = jnp.broadcast_to(s, sum_ref.shape)
    ssq_ref[...] = jnp.broadcast_to(q, ssq_ref.shape)


def _conv_residual_kernel(xs_ref, w_ref, b_ref, r_ref, o_ref):
    """One P-tile of the last layer: o = xs @ w + b + residual (single write)."""
    z = jnp.dot(xs_ref[...], w_ref[...], preferred_element_type=jnp.float32)
    o_ref[...] = z + b_ref[...] + r_ref[...]


def _bn_relu_kernel(z_ref, scale_ref, shift_ref, o_ref):
    """One P-tile: o = relu(z * scale + shift)  (BN folded into scale/shift)."""
    o_ref[...] = jnp.maximum(
        z_ref[...] * scale_ref[...] + shift_ref[...], 0.0).astype(o_ref.dtype)


# ------------------------------- glue / wrappers ----------------------------

def _choose_tile(P, max_tile=1024):
    """Largest power-of-two row tile <= max_tile (and <= P/2 when possible)."""
    target = min(max_tile, max(8, P // 2))
    for tp in (4096, 2048, 1024, 512, 256, 128, 64, 32, 16, 8):
        if tp <= target and P % tp == 0:
            return tp
    return P


def _im2col(x_nhwc):
    """(N,H,W,Cin) -> (N*H*W, 9*Cin): fused patch matrix for 3x3, pad=1 conv."""
    N, H, W, Cin = x_nhwc.shape
    xp = jnp.pad(x_nhwc, ((0, 0), (1, 1), (1, 1), (0, 0)))
    taps = [xp[:, dy:dy + H, dx:dx + W, :] for dy in range(3) for dx in range(3)]
    return jnp.concatenate(taps, axis=-1).reshape(N * H * W, 9 * Cin)


def _conv3x3(x_nhwc, w9, b, *, tp, mode, residual=None):
    """3x3 conv (pad=1) as a P-tiled wide-K GEMM.

    mode == "relu":     relu(conv + b)                    -> (P, Cout) bf16
    mode == "stats":    (conv + b, per-tile sums, sumsqs) -> f32
    mode == "residual": conv + b + residual               -> (P, Cout) f32
    """
    N, H, W, Cin = x_nhwc.shape
    Cout = w9.shape[-1]
    P = N * H * W
    nt = P // tp

    xs = _im2col(x_nhwc.astype(jnp.bfloat16))               # (P, 9*Cin) bf16
    wm = w9.reshape(9 * Cin, Cout).astype(jnp.bfloat16)     # (9*Cin, Cout) bf16
    K = 9 * Cin
    Kp = -(-K // 16) * 16                                   # layout-friendly K
    if Kp != K:
        xs = jnp.pad(xs, ((0, 0), (0, Kp - K)))
        wm = jnp.pad(wm, ((0, Kp - K), (0, 0)))

    in_specs = [
        pl.BlockSpec((tp, Kp), lambda i: (i, 0)),           # patch tile
        pl.BlockSpec((Kp, Cout), lambda i: (0, 0)),         # weights (resident)
        pl.BlockSpec((1, Cout), lambda i: (0, 0)),          # bias
    ]
    args = [xs, wm, b]
    cparams = pltpu.CompilerParams(dimension_semantics=("parallel",),
                                   vmem_limit_bytes=_VMEM_LIMIT)

    if mode == "relu":
        return pl.pallas_call(
            _conv_relu_kernel,
            out_shape=jax.ShapeDtypeStruct((P, Cout), jnp.bfloat16),
            grid_spec=pltpu.PrefetchScalarGridSpec(
                num_scalar_prefetch=0, grid=(nt,), in_specs=in_specs,
                out_specs=pl.BlockSpec((tp, Cout), lambda i: (i, 0))),
            compiler_params=cparams,
        )(*args)

    if mode == "stats":
        out_shape = (
            jax.ShapeDtypeStruct((P, Cout), jnp.float32),       # z = conv + b
            jax.ShapeDtypeStruct((nt, 8, Cout), jnp.float32),   # per-tile sum
            jax.ShapeDtypeStruct((nt, 8, Cout), jnp.float32),   # per-tile sum z^2
        )
        out_specs = [
            pl.BlockSpec((tp, Cout), lambda i: (i, 0)),
            pl.BlockSpec((1, 8, Cout), lambda i: (i, 0, 0)),
            pl.BlockSpec((1, 8, Cout), lambda i: (i, 0, 0)),
        ]
        return pl.pallas_call(
            _conv_stats_kernel,
            out_shape=out_shape,
            grid_spec=pltpu.PrefetchScalarGridSpec(
                num_scalar_prefetch=0, grid=(nt,), in_specs=in_specs,
                out_specs=out_specs),
            compiler_params=cparams,
        )(*args)

    # mode == "residual"
    in_specs = in_specs + [pl.BlockSpec((tp, Cout), lambda i: (i, 0))]
    args = args + [residual]
    return pl.pallas_call(
        _conv_residual_kernel,
        out_shape=jax.ShapeDtypeStruct((P, Cout), jnp.float32),
        grid_spec=pltpu.PrefetchScalarGridSpec(
            num_scalar_prefetch=0, grid=(nt,), in_specs=in_specs,
            out_specs=pl.BlockSpec((tp, Cout), lambda i: (i, 0))),
        compiler_params=cparams,
    )(*args)


def _bn_relu(z, scale, shift, *, tp):
    """Elementwise relu(z * scale + shift), P-tiled, bf16 output."""
    P, C = z.shape
    nt = P // tp
    return pl.pallas_call(
        _bn_relu_kernel,
        out_shape=jax.ShapeDtypeStruct((P, C), jnp.bfloat16),
        grid_spec=pltpu.PrefetchScalarGridSpec(
            num_scalar_prefetch=0, grid=(nt,),
            in_specs=[pl.BlockSpec((tp, C), lambda i: (i, 0)),
                      pl.BlockSpec((1, C), lambda i: (0, 0)),
                      pl.BlockSpec((1, C), lambda i: (0, 0))],
            out_specs=pl.BlockSpec((tp, C), lambda i: (i, 0))),
        compiler_params=pltpu.CompilerParams(
            dimension_semantics=("parallel",), vmem_limit_bytes=_VMEM_LIMIT),
    )(z, scale, shift)


def dncnn_forward(x_nchw, params, *, max_tile=1024):
    """DnCNN forward. NCHW f32 in/out (PyTorch convention)."""
    x = jnp.transpose(x_nchw, (0, 2, 3, 1)).astype(jnp.float32)   # NHWC f32
    N, H, W, _ = x.shape
    P = N * H * W
    tp = _choose_tile(P, max_tile)
    D = len(params["bn_gamma"])
    eps = params["bn_eps"]

    # layer 0: conv + relu
    h = _conv3x3(x, params["w"][0], params["b"][0], tp=tp, mode="relu")
    h = h.reshape(N, H, W, -1)

    # middle layers: conv -> batchnorm (batch stats) -> relu
    for i in range(D):
        z, psum, pssq = _conv3x3(h, params["w"][i + 1], params["b"][i + 1],
                                 tp=tp, mode="stats")
        tot = jnp.sum(psum[:, 0, :], axis=0)                     # (C,)
        tot2 = jnp.sum(pssq[:, 0, :], axis=0)                    # (C,)
        mean = tot / P
        var = tot2 / P - mean * mean                             # biased variance
        gamma = params["bn_gamma"][i].reshape(-1)
        beta = params["bn_beta"][i].reshape(-1)
        scale = gamma * jax.lax.rsqrt(var + eps)
        shift = beta - mean * scale
        h = _bn_relu(z, scale.reshape(1, -1), shift.reshape(1, -1), tp=tp)
        h = h.reshape(N, H, W, -1)

    # last layer: conv + residual skip (fused, written once)
    y = _conv3x3(h, params["w"][D + 1], params["b"][D + 1], tp=tp,
                 mode="residual", residual=x.reshape(P, -1))
    return jnp.transpose(y.reshape(N, H, W, -1), (0, 3, 1, 2))


# -------------------------- parameter construction --------------------------

def init_params(key, D, C):
    """Deterministic synthetic params. Weights stored as (9, Cin, Cout)."""
    layer_specs = [(3, C)] + [(C, C)] * D + [(C, 3)]
    ws, bs = [], []
    for li, (cin, cout) in enumerate(layer_specs):
        key, kw, kb = jax.random.split(key, 3)
        fan_in = cin * 9
        if li < len(layer_specs) - 1:
            # kaiming_normal_, nonlinearity='relu'
            std = np.sqrt(2.0 / fan_in)
            w = std * jax.random.normal(kw, (9, cin, cout), jnp.float32)
        else:
            # PyTorch default conv init (kaiming_uniform, a=sqrt(5))
            bound = 1.0 / np.sqrt(fan_in)
            w = jax.random.uniform(kw, (9, cin, cout), jnp.float32,
                                   minval=-bound, maxval=bound)
        b_bound = 1.0 / np.sqrt(fan_in)
        b = jax.random.uniform(kb, (1, cout), jnp.float32,
                               minval=-b_bound, maxval=b_bound)
        ws.append(w)
        bs.append(b)
    gammas = [jnp.full((1, C), 1.25 * np.sqrt(C), jnp.float32) for _ in range(D)]
    betas = [jnp.zeros((1, C), jnp.float32) for _ in range(D)]
    return {"w": ws, "b": bs, "bn_gamma": gammas, "bn_beta": betas,
            "bn_eps": float(C)}   # nn.BatchNorm2d(C, C) -> eps = C (per spec)


# ------------------------------ pure-JAX reference ---------------------------

def _conv_ref(x_nhwc, w9, b):
    N, H, W, Cin = x_nhwc.shape
    Cout = w9.shape[-1]
    xs = _im2col(x_nhwc)                                      # (P, 9*Cin) f32
    z = jnp.dot(xs, w9.reshape(9 * Cin, Cout),
                precision=jax.lax.Precision.HIGHEST) + b
    return z.reshape(N, H, W, Cout)


def dncnn_ref(x_nchw, params):
    x = jnp.transpose(x_nchw, (0, 2, 3, 1)).astype(jnp.float32)
    D = len(params["bn_gamma"])
    h = jax.nn.relu(_conv_ref(x, params["w"][0], params["b"][0]))
    for i in range(D):
        z = _conv_ref(h, params["w"][i + 1], params["b"][i + 1])
        mean = z.mean(axis=(0, 1, 2), keepdims=True)
        var = jnp.square(z - mean).mean(axis=(0, 1, 2), keepdims=True)
        zn = (z - mean) / jnp.sqrt(var + params["bn_eps"])
        h = jax.nn.relu(zn * params["bn_gamma"][i].reshape(1, 1, 1, -1)
                        + params["bn_beta"][i].reshape(1, 1, 1, -1))
    y = _conv_ref(h, params["w"][D + 1], params["b"][D + 1]) + x
    return jnp.transpose(y, (0, 3, 1, 2))


# ----------------------------------- main ------------------------------------

if __name__ == "__main__":
    key = jax.random.PRNGKey(0)
    D, C = 2, 64
    kx, kp = jax.random.split(key)
    x = jax.random.normal(kx, (2, 3, 16, 16), jnp.float32)   # NCHW, RGB input
    params = init_params(kp, D, C)

    fwd = jax.jit(dncnn_forward)
    y = jax.block_until_ready(fwd(x, params))

    y_ref = jax.block_until_ready(dncnn_ref(x, params))
    np.testing.assert_allclose(np.asarray(y), np.asarray(y_ref),
                               rtol=5e-2, atol=5e-2)
    assert y.shape == x.shape and y.dtype == jnp.float32

    print("KERNEL_OK")
</pallas_src>

<mosaic_0001>
module attributes {stable_mosaic.version = 11 : i64} {
  func.func @_conv_relu_kernel(%arg0: i32, %arg1: memref<256x32xbf16, #tpu.memory_space<vmem>>, %arg2: memref<32x64xbf16, #tpu.memory_space<vmem>>, %arg3: memref<1x64xf32, #tpu.memory_space<vmem>>, %arg4: memref<256x64xbf16, #tpu.memory_space<vmem>>) attributes {dimension_semantics = [#tpu.dimension_semantics<parallel>], iteration_bounds = array<i64: 2>, scalar_prefetch = 0 : i64, scratch_operands = 0 : i64, tpu.core_type = #tpu.core_type<tc>, window_params = [{transform_indices = @transform_0, window_bounds = array<i64: 256, 32>}, {pipeline_mode = #tpu.pipeline_mode<synchronous>, transform_indices = @transform_1, window_bounds = array<i64: 32, 64>}, {pipeline_mode = #tpu.pipeline_mode<synchronous>, transform_indices = @transform_2, window_bounds = array<i64: 1, 64>}, {transform_indices = @transform_3, window_bounds = array<i64: 256, 64>}]} {
    %c0 = arith.constant 0 : index
    %c0_0 = arith.constant 0 : index
    %0 = vector.load %arg1[%c0, %c0_0] : memref<256x32xbf16, #tpu.memory_space<vmem>>, vector<256x32xbf16>
    %c0_1 = arith.constant 0 : index
    %c0_2 = arith.constant 0 : index
    %1 = vector.load %arg2[%c0_1, %c0_2] : memref<32x64xbf16, #tpu.memory_space<vmem>>, vector<32x64xbf16>
    %cst = arith.constant dense<0.000000e+00> : vector<256x64xf32>
    %2 = tpu.matmul %0, %1, %cst {dimension_numbers = #tpu.dot_dimension_numbers<[1], [0], [0], [1], [0, 0, 1, 1], [], []>} : vector<256x32xbf16>, vector<32x64xbf16>, vector<256x64xf32> -> vector<256x64xf32>
    %c0_3 = arith.constant 0 : index
    %c0_4 = arith.constant 0 : index
    %3 = vector.load %arg3[%c0_3, %c0_4] : memref<1x64xf32, #tpu.memory_space<vmem>>, vector<1x64xf32>
    %4 = vector.broadcast %3 : vector<1x64xf32> to vector<256x64xf32>
    %5 = arith.addf %2, %4 : vector<256x64xf32>
    %cst_5 = arith.constant 0.000000e+00 : f32
    %6 = vector.broadcast %cst_5 : f32 to vector<256x64xf32>
    %7 = arith.maximumf %5, %6 : vector<256x64xf32>
    %8 = arith.truncf %7 : vector<256x64xf32> to vector<256x64xbf16>
    %c0_6 = arith.constant 0 : index
    %c0_7 = arith.constant 0 : index
    %9 = vector.load %arg4[%c0_6, %c0_7] : memref<256x64xbf16, #tpu.memory_space<vmem>>, vector<256x64xbf16>
    tpu.vector_store %arg4[%c0_6, %c0_7], %8 {strides = array<i32>} : memref<256x64xbf16, #tpu.memory_space<vmem>>, vector<256x64xbf16>,
    return
  }
  func.func @transform_0(%arg0: i32) -> (i32, i32) {
    %c0_i32 = arith.constant 0 : i32
    %c0_i32_0 = arith.constant 0 : i32
    return %arg0, %c0_i32 : i32, i32
  }
  func.func @transform_1(%arg0: i32) -> (i32, i32) {
    %c0_i32 = arith.constant 0 : i32
    %c0_i32_0 = arith.constant 0 : i32
    %c0_i32_1 = arith.constant 0 : i32
    return %c0_i32, %c0_i32_0 : i32, i32
  }
  func.func @transform_2(%arg0: i32) -> (i32, i32) {
    %c0_i32 = arith.constant 0 : i32
    %c0_i32_0 = arith.constant 0 : i32
    %c0_i32_1 = arith.constant 0 : i32
    return %c0_i32, %c0_i32_0 : i32, i32
  }
  func.func @transform_3(%arg0: i32) -> (i32, i32) {
    %c0_i32 = arith.constant 0 : i32
    %c0_i32_0 = arith.constant 0 : i32
    return %arg0, %c0_i32 : i32, i32
  }
}

module attributes {stable_mosaic.version = 11 : i64} {
  func.func @_conv_stats_kernel(%arg0: i32, %arg1: memref<256x576xbf16, #tpu.memory_space<vmem>>, %arg2: memref<576x64xbf16, #tpu.memory_space<vmem>>, %arg3: memref<1x64xf32, #tpu.memory_space<vmem>>, %arg4: memref<256x64xf32, #tpu.memory_space<vmem>>, %arg5: memref<1x8x64xf32, #tpu.memory_space<vmem>>, %arg6: memref<1x8x64xf32, #tpu.memory_space<vmem>>) attributes {dimension_semantics = [#tpu.dimension_semantics<parallel>], iteration_bounds = array<i64: 2>, scalar_prefetch = 0 : i64, scratch_operands = 0 : i64, tpu.core_type = #tpu.core_type<tc>, window_params = [{transform_indices = @transform_0, window_bounds = array<i64: 256, 576>}, {pipeline_mode = #tpu.pipeline_mode<synchronous>, transform_indices = @transform_1, window_bounds = array<i64: 576, 64>}, {pipeline_mode = #tpu.pipeline_mode<synchronous>, transform_indices = @transform_2, window_bounds = array<i64: 1, 64>}, {transform_indices = @transform_3, window_bounds = array<i64: 256, 64>}, {transform_indices = @transform_4, window_bounds = array<i64: 1, 8, 64>}, {transform_indices = @transform_5, window_bounds = array<i64: 1, 8, 64>}]} {
    %c0 = arith.constant 0 : index
    %c0_0 = arith.constant 0 : index
    %0 = vector.load %arg1[%c0, %c0_0] : memref<256x576xbf16, #tpu.memory_space<vmem>>, vector<256x576xbf16>
    %c0_1 = arith.constant 0 : index
    %c0_2 = arith.constant 0 : index
    %1 = vector.load %arg2[%c0_1, %c0_2] : memref<576x64xbf16, #tpu.memory_space<vmem>>, vector<576x64xbf16>
    %cst = arith.constant dense<0.000000e+00> : vector<256x64xf32>
    %2 = tpu.matmul %0, %1, %cst {dimension_numbers = #tpu.dot_dimension_numbers<[1], [0], [0], [1], [0, 0, 1, 1], [], []>} : vector<256x576xbf16>, vector<576x64xbf16>, vector<256x64xf32> -> vector<256x64xf32>
    %c0_3 = arith.constant 0 : index
    %c0_4 = arith.constant 0 : index
    %3 = vector.load %arg3[%c0_3, %c0_4] : memref<1x64xf32, #tpu.memory_space<vmem>>, vector<1x64xf32>
    %4 = vector.broadcast %3 : vector<1x64xf32> to vector<256x64xf32>
    %5 = arith.addf %2, %4 : vector<256x64xf32>
    %c0_5 = arith.constant 0 : index
    %c0_6 = arith.constant 0 : index
    %6 = vector.load %arg4[%c0_5, %c0_6] : memref<256x64xf32, #tpu.memory_space<vmem>>, vector<256x64xf32>
    tpu.vector_store %arg4[%c0_5, %c0_6], %5 {strides = array<i32>} : memref<256x64xf32, #tpu.memory_space<vmem>>, vector<256x64xf32>,
    %cst_7 = arith.constant dense<0.000000e+00> : vector<64xf32>
    %7 = vector.multi_reduction <add>, %5, %cst_7 [0] : vector<256x64xf32> to vector<64xf32>
    %8 = vector.shape_cast %7 : vector<64xf32> to vector<1x64xf32>
    %9 = arith.mulf %5, %5 : vector<256x64xf32>
    %cst_8 = arith.constant dense<0.000000e+00> : vector<64xf32>
    %10 = vector.multi_reduction <add>, %9, %cst_8 [0] : vector<256x64xf32> to vector<64xf32>
    %11 = vector.shape_cast %10 : vector<64xf32> to vector<1x64xf32>
    %12 = vector.shape_cast %8 : vector<1x64xf32> to vector<1x1x64xf32>
    %13 = vector.broadcast %12 : vector<1x1x64xf32> to vector<1x8x64xf32>
    %c0_9 = arith.constant 0 : index
    %c0_10 = arith.constant 0 : index
    %c0_11 = arith.constant 0 : index
    %14 = vector.load %arg5[%c0_9, %c0_10, %c0_11] : memref<1x8x64xf32, #tpu.memory_space<vmem>>, vector<1x8x64xf32>
    tpu.vector_store %arg5[%c0_9, %c0_10, %c0_11], %13 {strides = array<i32>} : memref<1x8x64xf32, #tpu.memory_space<vmem>>, vector<1x8x64xf32>,
    %15 = vector.shape_cast %11 : vector<1x64xf32> to vector<1x1x64xf32>
    %16 = vector.broadcast %15 : vector<1x1x64xf32> to vector<1x8x64xf32>
    %c0_12 = arith.constant 0 : index
    %c0_13 = arith.constant 0 : index
    %c0_14 = arith.constant 0 : index
    %17 = vector.load %arg6[%c0_12, %c0_13, %c0_14] : memref<1x8x64xf32, #tpu.memory_space<vmem>>, vector<1x8x64xf32>
    tpu.vector_store %arg6[%c0_12, %c0_13, %c0_14], %16 {strides = array<i32>} : memref<1x8x64xf32, #tpu.memory_space<vmem>>, vector<1x8x64xf32>,
    return
  }
  func.func @transform_0(%arg0: i32) -> (i32, i32) {
    %c0_i32 = arith.constant 0 : i32
    %c0_i32_0 = arith.constant 0 : i32
    return %arg0, %c0_i32 : i32, i32
  }
  func.func @transform_1(%arg0: i32) -> (i32, i32) {
    %c0_i32 = arith.constant 0 : i32
    %c0_i32_0 = arith.constant 0 : i32
    %c0_i32_1 = arith.constant 0 : i32
    return %c0_i32, %c0_i32_0 : i32, i32
  }
  func.func @transform_2(%arg0: i32) -> (i32, i32) {
    %c0_i32 = arith.constant 0 : i32
    %c0_i32_0 = arith.constant 0 : i32
    %c0_i32_1 = arith.constant 0 : i32
    return %c0_i32, %c0_i32_0 : i32, i32
  }
  func.func @transform_3(%arg0: i32) -> (i32, i32) {
    %c0_i32 = arith.constant 0 : i32
    %c0_i32_0 = arith.constant 0 : i32
    return %arg0, %c0_i32 : i32, i32
  }
  func.func @transform_4(%arg0: i32) -> (i32, i32, i32) {
    %c0_i32 = arith.constant 0 : i32
    %c0_i32_0 = arith.constant 0 : i32
    %c0_i32_1 = arith.constant 0 : i32
    return %arg0, %c0_i32, %c0_i32_0 : i32, i32, i32
  }
  func.func @transform_5(%arg0: i32) -> (i32, i32, i32) {
    %c0_i32 = arith.constant 0 : i32
    %c0_i32_0 = arith.constant 0 : i32
    %c0_i32_1 = arith.constant 0 : i32
    return %arg0, %c0_i32, %c0_i32_0 : i32, i32, i32
  }
}

module attributes {stable_mosaic.version = 11 : i64} {
  func.func @_bn_relu_kernel(%arg0: i32, %arg1: memref<256x64xf32, #tpu.memory_space<vmem>>, %arg2: memref<1x64xf32, #tpu.memory_space<vmem>>, %arg3: memref<1x64xf32, #tpu.memory_space<vmem>>, %arg4: memref<256x64xbf16, #tpu.memory_space<vmem>>) attributes {dimension_semantics = [#tpu.dimension_semantics<parallel>], iteration_bounds = array<i64: 2>, scalar_prefetch = 0 : i64, scratch_operands = 0 : i64, tpu.core_type = #tpu.core_type<tc>, window_params = [{transform_indices = @transform_0, window_bounds = array<i64: 256, 64>}, {pipeline_mode = #tpu.pipeline_mode<synchronous>, transform_indices = @transform_1, window_bounds = array<i64: 1, 64>}, {pipeline_mode = #tpu.pipeline_mode<synchronous>, transform_indices = @transform_2, window_bounds = array<i64: 1, 64>}, {transform_indices = @transform_3, window_bounds = array<i64: 256, 64>}]} {
    %c0 = arith.constant 0 : index
    %c0_0 = arith.constant 0 : index
    %0 = vector.load %arg1[%c0, %c0_0] : memref<256x64xf32, #tpu.memory_space<vmem>>, vector<256x64xf32>
    %c0_1 = arith.constant 0 : index
    %c0_2 = arith.constant 0 : index
    %1 = vector.load %arg2[%c0_1, %c0_2] : memref<1x64xf32, #tpu.memory_space<vmem>>, vector<1x64xf32>
    %2 = vector.broadcast %1 : vector<1x64xf32> to vector<256x64xf32>
    %3 = arith.mulf %0, %2 : vector<256x64xf32>
    %c0_3 = arith.constant 0 : index
    %c0_4 = arith.constant 0 : index
    %4 = vector.load %arg3[%c0_3, %c0_4] : memref<1x64xf32, #tpu.memory_space<vmem>>, vector<1x64xf32>
    %5 = vector.broadcast %4 : vector<1x64xf32> to vector<256x64xf32>
    %6 = arith.addf %3, %5 : vector<256x64xf32>
    %cst = arith.constant 0.000000e+00 : f32
    %7 = vector.broadcast %cst : f32 to vector<256x64xf32>
    %8 = arith.maximumf %6, %7 : vector<256x64xf32>
    %9 = arith.truncf %8 : vector<256x64xf32> to vector<256x64xbf16>
    %c0_5 = arith.constant 0 : index
    %c0_6 = arith.constant 0 : index
    %10 = vector.load %arg4[%c0_5, %c0_6] : memref<256x64xbf16, #tpu.memory_space<vmem>>, vector<256x64xbf16>
    tpu.vector_store %arg4[%c0_5, %c0_6], %9 {strides = array<i32>} : memref<256x64xbf16, #tpu.memory_space<vmem>>, vector<256x64xbf16>,
    return
  }
  func.func @transform_0(%arg0: i32) -> (i32, i32) {
    %c0_i32 = arith.constant 0 : i32
    %c0_i32_0 = arith.constant 0 : i32
    return %arg0, %c0_i32 : i32, i32
  }
  func.func @transform_1(%arg0: i32) -> (i32, i32) {
    %c0_i32 = arith.constant 0 : i32
    %c0_i32_0 = arith.constant 0 : i32
    %c0_i32_1 = arith.constant 0 : i32
    return %c0_i32, %c0_i32_0 : i32, i32
  }
  func.func @transform_2(%arg0: i32) -> (i32, i32) {
    %c0_i32 = arith.constant 0 : i32
    %c0_i32_0 = arith.constant 0 : i32
    %c0_i32_1 = arith.constant 0 : i32
    return %c0_i32, %c0_i32_0 : i32, i32
  }
  func.func @transform_3(%arg0: i32) -> (i32, i32) {
    %c0_i32 = arith.constant 0 : i32
    %c0_i32_0 = arith.constant 0 : i32
    return %arg0, %c0_i32 : i32, i32
  }
}

module attributes {stable_mosaic.version = 11 : i64} {
  func.func @_conv_residual_kernel(%arg0: i32, %arg1: memref<256x576xbf16, #tpu.memory_space<vmem>>, %arg2: memref<576x3xbf16, #tpu.memory_space<vmem>>, %arg3: memref<1x3xf32, #tpu.memory_space<vmem>>, %arg4: memref<256x3xf32, #tpu.memory_space<vmem>>, %arg5: memref<256x3xf32, #tpu.memory_space<vmem>>) attributes {dimension_semantics = [#tpu.dimension_semantics<parallel>], iteration_bounds = array<i64: 2>, scalar_prefetch = 0 : i64, scratch_operands = 0 : i64, tpu.core_type = #tpu.core_type<tc>, window_params = [{transform_indices = @transform_0, window_bounds = array<i64: 256, 576>}, {pipeline_mode = #tpu.pipeline_mode<synchronous>, transform_indices = @transform_1, window_bounds = array<i64: 576, 3>}, {pipeline_mode = #tpu.pipeline_mode<synchronous>, transform_indices = @transform_2, window_bounds = array<i64: 1, 3>}, {transform_indices = @transform_3, window_bounds = array<i64: 256, 3>}, {transform_indices = @transform_4, window_bounds = array<i64: 256, 3>}]} {
    %c0 = arith.constant 0 : index
    %c0_0 = arith.constant 0 : index
    %0 = vector.load %arg1[%c0, %c0_0] : memref<256x576xbf16, #tpu.memory_space<vmem>>, vector<256x576xbf16>
    %c0_1 = arith.constant 0 : index
    %c0_2 = arith.constant 0 : index
    %1 = vector.load %arg2[%c0_1, %c0_2] : memref<576x3xbf16, #tpu.memory_space<vmem>>, vector<576x3xbf16>
    %cst = arith.constant dense<0.000000e+00> : vector<256x3xf32>
    %2 = tpu.matmul %0, %1, %cst {dimension_numbers = #tpu.dot_dimension_numbers<[1], [0], [0], [1], [0, 0, 1, 1], [], []>} : vector<256x576xbf16>, vector<576x3xbf16>, vector<256x3xf32> -> vector<256x3xf32>
    %c0_3 = arith.constant 0 : index
    %c0_4 = arith.constant 0 : index
    %3 = vector.load %arg3[%c0_3, %c0_4] : memref<1x3xf32, #tpu.memory_space<vmem>>, vector<1x3xf32>
    %4 = vector.broadcast %3 : vector<1x3xf32> to vector<256x3xf32>
    %5 = arith.addf %2, %4 : vector<256x3xf32>
    %c0_5 = arith.constant 0 : index
    %c0_6 = arith.constant 0 : index
    %6 = vector.load %arg4[%c0_5, %c0_6] : memref<256x3xf32, #tpu.memory_space<vmem>>, vector<256x3xf32>
    %7 = arith.addf %5, %6 : vector<256x3xf32>
    %c0_7 = arith.constant 0 : index
    %c0_8 = arith.constant 0 : index
    %8 = vector.load %arg5[%c0_7, %c0_8] : memref<256x3xf32, #tpu.memory_space<vmem>>, vector<256x3xf32>
    tpu.vector_store %arg5[%c0_7, %c0_8], %7 {strides = array<i32>} : memref<256x3xf32, #tpu.memory_space<vmem>>, vector<256x3xf32>,
    return
  }
  func.func @transform_0(%arg0: i32) -> (i32, i32) {
    %c0_i32 = arith.constant 0 : i32
    %c0_i32_0 = arith.constant 0 : i32
    return %arg0, %c0_i32 : i32, i32
  }
  func.func @transform_1(%arg0: i32) -> (i32, i32) {
    %c0_i32 = arith.constant 0 : i32
    %c0_i32_0 = arith.constant 0 : i32
    %c0_i32_1 = arith.constant 0 : i32
    return %c0_i32, %c0_i32_0 : i32, i32
  }
  func.func @transform_2(%arg0: i32) -> (i32, i32) {
    %c0_i32 = arith.constant 0 : i32
    %c0_i32_0 = arith.constant 0 : i32
    %c0_i32_1 = arith.constant 0 : i32
    return %c0_i32, %c0_i32_0 : i32, i32
  }
  func.func @transform_3(%arg0: i32) -> (i32, i32) {
    %c0_i32 = arith.constant 0 : i32
    %c0_i32_0 = arith.constant 0 : i32
    return %arg0, %c0_i32 : i32, i32
  }
  func.func @transform_4(%arg0: i32) -> (i32, i32) {
    %c0_i32 = arith.constant 0 : i32
    %c0_i32_0 = arith.constant 0 : i32
    return %arg0, %c0_i32 : i32, i32
  }
}

</mosaic_0001>

<llo_original>
// kernel: dncnn_forward.6
$region0: #{dncnn_forward.6}
  #allocation0 [shape = 'u32[]', space=smem, size = 0x4, offset = 0x4, fixed_abs, tag = 'smem constant byte address 0x4 - core index']
  #allocation1 [shape = 'u32[144,128]{1,0:T(1,128)}', space=vmem, size = 0x12000, scoped, tag = 'internal scratch']
  %s0 = inlined_call_operand.vmem [shape: bf16[512,32], index: 0, kind: input, shape index: {}]
  %s1 = inlined_call_operand.vmem [shape: bf16[32,64], index: 1, kind: input, shape index: {}]
  %s2 = inlined_call_operand.vmem [shape: f32[1,64], index: 2, kind: input, shape index: {}]
  %s3 = inlined_call_operand.vmem [shape: bf16[512,64], index: 3, kind: output, shape index: {}]
  %s4 = sld [smem:[#allocation0]]
  $region45: #{dncnn_forward.6} parent=0
    _
  %s6 = ssub.s32 1, %s4
  %s7 = scalar_select 0, %s6, %s4
  loop: start=0, step=1, limit=4
  $region2: #{dncnn_forward.6} parent=0 // loop_pre_header
    _
  $region3: #{dncnn_forward.6} parent=0 // loop_header
    %s9 = sphi 0, %s13
    %p10 = scmp.ge.s32.totalorder %s9, 4
    %s19 = sphi 0, %s21
    %s22 = sphi 0, %s19
    %s23 = sphi 0, %s22
    %s39 = sphi 0, %s23
    %s43 = sphi 0, %s43
    %s45 = sphi 0, %s43
    %s46 = sphi 0, %s45
    %s60 = sphi 0, %s46
    %s64 = sphi 0, %s64
    %s66 = sphi 0, %s64
    %s67 = sphi 0, %s66
    %s81 = sphi 0, %s67
    %s87 = sphi 0, %s89
    %s90 = sphi 0, %s87
    %s91 = sphi 0, %s90
    %s107 = sphi 0, %s91
  $region4: #{dncnn_forward.6} parent=0 // loop_header_branch
    %12 = sbr.rel (%p10) target = $region8
  $region5: #{dncnn_forward.6} parent=0 // loop_body
    %s14 = ssub.s32 %s9, 1
    %s15 = ssub.s32 %s9, 2
    %s16 = sadd.s32 %s9, 1
    %s17 = ssub.s32 %s9, %s16
    %p18 = scmp.eq.s32.totalorder %s17, 0
    %s20 = sadd.s32 %s19, 1
    %s21 = scalar_select %p18, %s19, %s20
    %p24 = pneg %p18
    %p25 = scmp.eq.s32.totalorder %s9, 1
    %p26 = por %p24, %p25
    %p27 = scmp.ne.s32.totalorder %s19, %s22
    %p28 = scmp.eq.s32.totalorder %s9, 0
    %p29 = por %p27, %p28
    %p30 = scmp.ne.s32.totalorder %s19, %s22
    %p31 = scmp.eq.s32.totalorder %s14, 1
    %p32 = por %p30, %p31
    %p33 = scmp.ne.s32.totalorder %s22, %s23
    %p34 = scmp.eq.s32.totalorder %s14, 0
    %p35 = por %p33, %p34
    %p36 = scmp.ne.s32.totalorder %s22, %s23
    %p37 = scmp.eq.s32.totalorder %s15, 1
    %p38 = por %p36, %p37
    %p40 = scmp.ne.s32.totalorder %s23, %s39
    %p41 = scmp.eq.s32.totalorder %s15, 0
    %p42 = por %p40, %p41
    %s44 = sadd.s32 %s43, 1
    %p47 = scmp.eq.s32.totalorder %s9, 1
    %p48 = scmp.ne.s32.totalorder %s43, %s45
    %p49 = scmp.eq.s32.totalorder %s9, 0
    %p50 = por %p48, %p49
    %p51 = scmp.ne.s32.totalorder %s43, %s45
    %p52 = scmp.eq.s32.totalorder %s14, 1
    %p53 = por %p51, %p52
    %p54 = scmp.ne.s32.totalorder %s45, %s46
    %p55 = scmp.eq.s32.totalorder %s14, 0
    %p56 = por %p54, %p55
    %p57 = scmp.ne.s32.totalorder %s45, %s46
    %p58 = scmp.eq.s32.totalorder %s15, 1
    %p59 = por %p57, %p58
    %p61 = scmp.ne.s32.totalorder %s46, %s60
    %p62 = scmp.eq.s32.totalorder %s15, 0
    %p63 = por %p61, %p62
    %s65 = sadd.s32 %s64, 1
    %p68 = scmp.eq.s32.totalorder %s9, 1
    %p69 = scmp.ne.s32.totalorder %s64, %s66
    %p70 = scmp.eq.s32.totalorder %s9, 0
    %p71 = por %p69, %p70
    %p72 = scmp.ne.s32.totalorder %s64, %s66
    %p73 = scmp.eq.s32.totalorder %s14, 1
    %p74 = por %p72, %p73
    %p75 = scmp.ne.s32.totalorder %s66, %s67
    %p76 = scmp.eq.s32.totalorder %s14, 0
    %p77 = por %p75, %p76
    %p78 = scmp.ne.s32.totalorder %s66, %s67
    %p79 = scmp.eq.s32.totalorder %s15, 1
    %p80 = por %p78, %p79
    %p82 = scmp.ne.s32.totalorder %s67, %s81
    %p83 = scmp.eq.s32.totalorder %s15, 0
    %p84 = por %p82, %p83
    %s85 = ssub.s32 %s9, %s16
    %p86 = scmp.eq.s32.totalorder %s85, 0
    %s88 = sadd.s32 %s87, 1
    %s89 = scalar_select %p86, %s87, %s88
    %p92 = pneg %p86
    %p93 = scmp.eq.s32.totalorder %s9, 1
    %p94 = por %p92, %p93
    %p95 = scmp.ne.s32.totalorder %s87, %s90
    %p96 = scmp.eq.s32.totalorder %s9, 0
    %p97 = por %p95, %p96
    %p98 = scmp.ne.s32.totalorder %s87, %s90
    %p99 = scmp.eq.s32.totalorder %s14, 1
    %p100 = por %p98, %p99
    %p101 = scmp.ne.s32.totalorder %s90, %s91
    %p102 = scmp.eq.s32.totalorder %s14, 0
    %p103 = por %p101, %p102
    %p104 = scmp.ne.s32.totalorder %s90, %s91
    %p105 = scmp.eq.s32.totalorder %s15, 1
    %p106 = por %p104, %p105
    %p108 = scmp.ne.s32.totalorder %s91, %s107
    %p109 = scmp.eq.s32.totalorder %s15, 0
    %p110 = por %p108, %p109
    %p111 = scmp.le.s32.totalorder 1, %s9
    %p112 = scmp.lt.s32.totalorder %s9, 3
    %p113 = pnand %p111, %p112
    %p114 = pneg %p113
    // Predicated region
    $region9: #{dncnn_forward.6} parent=5 // pred_check
      _
    $region10: #{dncnn_forward.6} parent=5 // pred_check_branch
      %116 = sbr.rel (%p113) target = $region12
    $region11: #{dncnn_forward.6} parent=5 // pred_region
      %s117 = ssub.s32 %s9, 1
      // Predicated region
      $region13: #{dncnn_forward.6} parent=11 // pred_check
        %p118 = pneg %p56
      $region14: #{dncnn_forward.6} parent=11 // pred_check_branch
        %120 = sbr.rel (%p118) target = $region16
      $region15: #{dncnn_forward.6} parent=11 // pred_region
        _
      $region16: #{dncnn_forward.6} parent=11 // pred_fallthru
        _
      // Predicated region
      $region17: #{dncnn_forward.6} parent=11 // pred_check
        %p121 = pneg %p77
      $region18: #{dncnn_forward.6} parent=11 // pred_check_branch
        %123 = sbr.rel (%p121) target = $region20
      $region19: #{dncnn_forward.6} parent=11 // pred_region
        _
      $region20: #{dncnn_forward.6} parent=11 // pred_fallthru
        _
    $region12: #{dncnn_forward.6} parent=5 // pred_fallthru
      _
    %p124 = scmp.lt.s32.totalorder %s9, 2
    // Predicated region
    $region21: #{dncnn_forward.6} parent=5 // pred_check
      %p125 = pneg %p124
    $region22: #{dncnn_forward.6} parent=5 // pred_check_branch
      %127 = sbr.rel (%p125) target = $region24
    $region23: #{dncnn_forward.6} parent=5 // pred_region
      // Predicated region
      $region25: #{dncnn_forward.6} parent=23 // pred_check
        %p128 = pneg %p29
      $region26: #{dncnn_forward.6} parent=23 // pred_check_branch
        %130 = sbr.rel (%p128) target = $region28
      $region27: #{dncnn_forward.6} parent=23 // pred_region
        %s131 = smul.u32 32, %s9
        %p132 = scmp.lt.s32.totalorder %s131, 63
        %s133 = scalar_select %p132, %s131, 63
        %s134 = smul.addr %s133, 4
        %s135 = scalar_lea.vmem %s0, %s134
        %s136 = smul.u32 32, %s9
      $region28: #{dncnn_forward.6} parent=23 // pred_fallthru
        _
    $region24: #{dncnn_forward.6} parent=5 // pred_fallthru
      _
    %p137 = scmp.le.s32.totalorder 1, %s9
    %p138 = scmp.lt.s32.totalorder %s9, 3
    %p139 = pnand %p137, %p138
    %p140 = pneg %p139
    // Predicated region
    $region29: #{dncnn_forward.6} parent=5 // pred_check
      _
    $region30: #{dncnn_forward.6} parent=5 // pred_check_branch
      %142 = sbr.rel (%p139) target = $region32
    $region31: #{dncnn_forward.6} parent=5 // pred_region
      %s143 = ssub.s32 %s9, 1
      %s144 = smul.u32 32, %s14
      %p145 = scmp.lt.s32.totalorder %s144, 63
      %s146 = scalar_select %p145, %s144, 63
      %s147 = smul.addr %s146, 4
      %s148 = scalar_lea.vmem %s0, %s147
      %p149 = pneg %p35
      %p150 = pneg %p32
      %p151 = pneg %p56
      %p152 = pneg %p53
      %p153 = pneg %p77
      %p154 = pneg %p74
      %p155 = pneg %p103
      %p156 = pneg %p100
      %s157 = smul.u32 32, %s14
      %p158 = scmp.lt.s32.totalorder %s157, 63
      %s159 = scalar_select %p158, %s157, 63
      %s160 = smul.addr %s159, 4
      %s161 = scalar_lea.vmem %s3, %s160
      %s162 = smul.u32 32, %s14
      %p163 = scmp.lt.s32.totalorder %s162, 63
      %s164 = scalar_select %p163, %s162, 63
      %s165 = smul.addr %s164, 4
      %s166 = scalar_lea.vmem %s0, %s165
      %s167 = smul.u32 32, %s14
      %s168 = smul.u32 32, %s14
      %p169 = scmp.lt.s32.totalorder %s168, 63
      %s170 = scalar_select %p169, %s168, 63
      %s171 = smul.addr %s170, 4
      %s172 = scalar_lea.vmem %s3, %s171
      %s173 = smul.u32 32, %s14
      %v175 = vld [vmem:[%s166] sm:$0xf]
      %v176 = vld [vmem:[%s166 + $0x4] sm:$0xf]
      %v177 = vld [vmem:[%s166 + $0x8] sm:$0xf]
      %v178 = vld [vmem:[%s166 + $0xc] sm:$0xf]
      %v179 = vld [vmem:[%s166 + $0x10] sm:$0xf]
      %v180 = vld [vmem:[%s166 + $0x14] sm:$0xf]
      %v181 = vld [vmem:[%s166 + $0x18] sm:$0xf]
      %v182 = vld [vmem:[%s166 + $0x1c] sm:$0xf]
      %v183 = vld [vmem:[%s166 + $0x20] sm:$0xf]
      %v184 = vld [vmem:[%s166 + $0x24] sm:$0xf]
      %v185 = vld [vmem:[%s166 + $0x28] sm:$0xf]
      %v186 = vld [vmem:[%s166 + $0x2c] sm:$0xf]
      %v187 = vld [vmem:[%s166 + $0x30] sm:$0xf]
      %v188 = vld [vmem:[%s166 + $0x34] sm:$0xf]
      %v189 = vld [vmem:[%s166 + $0x38] sm:$0xf]
      %v190 = vld [vmem:[%s166 + $0x3c] sm:$0xf]
      %v191 = vld [vmem:[%s166 + $0x40] sm:$0xf]
      %v192 = vld [vmem:[%s166 + $0x44] sm:$0xf]
      %v193 = vld [vmem:[%s166 + $0x48] sm:$0xf]
      %v194 = vld [vmem:[%s166 + $0x4c] sm:$0xf]
      %v195 = vld [vmem:[%s166 + $0x50] sm:$0xf]
      %v196 = vld [vmem:[%s166 + $0x54] sm:$0xf]
      %v197 = vld [vmem:[%s166 + $0x58] sm:$0xf]
      %v198 = vld [vmem:[%s166 + $0x5c] sm:$0xf]
      %v199 = vld [vmem:[%s166 + $0x60] sm:$0xf]
      %v200 = vld [vmem:[%s166 + $0x64] sm:$0xf]
      %v201 = vld [vmem:[%s166 + $0x68] sm:$0xf]
      %v202 = vld [vmem:[%s166 + $0x6c] sm:$0xf]
      %v203 = vld [vmem:[%s166 + $0x70] sm:$0xf]
      %v204 = vld [vmem:[%s166 + $0x74] sm:$0xf]
      %v205 = vld [vmem:[%s166 + $0x78] sm:$0xf]
      %v206 = vld [vmem:[%s166 + $0x7c] sm:$0xf]
      %v207 = vld [vmem:[%s1] sm:$0xf]
      %v208 = vld [vmem:[%s1 + $0x4] sm:$0xf]
      %v209 = vld [vmem:[%s1 + $0x8] sm:$0xf]
      %v210 = vld [vmem:[%s1 + $0xc] sm:$0xf]
      %v211 = vld [vmem:[%s2] sm:$0x1]
      %v213 = vlaneseq
      %v214 = vshrl.u32 %v213, 7
      %v215 = vsub.s32 0, %v214
      %v216 = vrot.slane %v211, %v215
      %v250 = vunpack.c.l.b16 %v175
      %v251 = vunpack.c.l.b16 %v176
      %v252 = vunpack.c.l.b16 %v177
      %v253 = vunpack.c.l.b16 %v178
      %v254 = vunpack.c.l.b16 %v179
      %v255 = vunpack.c.l.b16 %v180
      %v256 = vunpack.c.l.b16 %v181
      %v257 = vunpack.c.l.b16 %v182
      %v258 = vunpack.c.l.b16 %v183
      %v259 = vunpack.c.l.b16 %v184
      %v260 = vunpack.c.l.b16 %v185
      %v261 = vunpack.c.l.b16 %v186
      %v262 = vunpack.c.l.b16 %v187
      %v263 = vunpack.c.l.b16 %v188
      %v264 = vunpack.c.l.b16 %v189
      %v265 = vunpack.c.l.b16 %v190
      %v266 = vunpack.c.l.b16 %v191
      %v267 = vunpack.c.l.b16 %v192
      %v268 = vunpack.c.l.b16 %v193
      %v269 = vunpack.c.l.b16 %v194
      %v270 = vunpack.c.l.b16 %v195
      %v271 = vunpack.c.l.b16 %v196
      %v272 = vunpack.c.l.b16 %v197
      %v273 = vunpack.c.l.b16 %v198
      %v274 = vunpack.c.l.b16 %v199
      %v275 = vunpack.c.l.b16 %v200
      %v276 = vunpack.c.l.b16 %v201
      %v277 = vunpack.c.l.b16 %v202
      %v278 = vunpack.c.l.b16 %v203
      %v279 = vunpack.c.l.b16 %v204
      %v280 = vunpack.c.l.b16 %v205
      %v281 = vunpack.c.l.b16 %v206
      %v282 = vpack.c.b16 %v251, %v250
      %v283 = vpack.c.b16 %v253, %v252
      %v284 = vpack.c.b16 %v255, %v254
      %v285 = vpack.c.b16 %v257, %v256
      %v286 = vpack.c.b16 %v259, %v258
      %v287 = vpack.c.b16 %v261, %v260
      %v288 = vpack.c.b16 %v263, %v262
      %v289 = vpack.c.b16 %v265, %v264
      %v290 = vpack.c.b16 %v267, %v266
      %v291 = vpack.c.b16 %v269, %v268
      %v292 = vpack.c.b16 %v271, %v270
      %v293 = vpack.c.b16 %v273, %v272
      %v294 = vpack.c.b16 %v275, %v274
      %v295 = vpack.c.b16 %v277, %v276
      %v296 = vpack.c.b16 %v279, %v278
      %v297 = vpack.c.b16 %v281, %v280
      %v302 = vunpack.c.l.b16 %v207
      %v303 = vunpack.c.l.b16 %v208
      %v304 = vunpack.c.l.b16 %v209
      %v305 = vunpack.c.l.b16 %v210
      %v306 = vpack.c.b16 %v303, %v302
      %v307 = vpack.c.b16 %v305, %v304
      %vm310 = vcmask 261120
      %v312 = vsel %vm310, %v282, 0
      %v315 = vsel %vm310, %v283, 0
      %v318 = vsel %vm310, %v284, 0
      %v321 = vsel %vm310, %v285, 0
      %v324 = vsel %vm310, %v286, 0
      %v327 = vsel %vm310, %v287, 0
      %v330 = vsel %vm310, %v288, 0
      %v333 = vsel %vm310, %v289, 0
      %v336 = vsel %vm310, %v290, 0
      %v339 = vsel %vm310, %v291, 0
      %v342 = vsel %vm310, %v292, 0
      %v345 = vsel %vm310, %v293, 0
      %v348 = vsel %vm310, %v294, 0
      %v351 = vsel %vm310, %v295, 0
      %v354 = vsel %vm310, %v296, 0
      %v357 = vsel %vm310, %v297, 0
      %359 = vmatprep.subr.bf16.mxu0 0
      %360 = vmatpush1.bf16.msra.mxu0 %v306
      %361 = vmatprep.subr.bf16.mxu0 0
      %362 = vmatpush1.bf16.msra.mxu0 %v307
      %363 = vmatprep.subr.bf16.mxu0 0
      %364 = vmatpush1.bf16.msra.mxu0 0
      %365 = vmatprep.subr.bf16.mxu0 0
      %366 = vmatpush1.bf16.msra.mxu0 0
      %367 = vmatprep.subr.bf16.mxu0 0
      %368 = vmatpush1.bf16.msra.mxu0 0
      %369 = vmatprep.subr.bf16.mxu0 0
      %370 = vmatpush1.bf16.msra.mxu0 0
      %371 = vmatprep.subr.bf16.mxu0 0
      %372 = vmatpush1.bf16.msra.mxu0 0
      %373 = vmatprep.subr.bf16.mxu0 0
      %374 = vmatpush1.bf16.msra.mxu0 0
      %375 = vmatprep.subr.bf16.mxu0 0
      %376 = vmatpush1.bf16.msra.mxu0 0
      %377 = vmatprep.subr.bf16.mxu0 0
      %378 = vmatpush1.bf16.msra.mxu0 0
      %379 = vmatprep.subr.bf16.mxu0 0
      %380 = vmatpush1.bf16.msra.mxu0 0
      %381 = vmatprep.subr.bf16.mxu0 0
      %382 = vmatpush1.bf16.msra.mxu0 0
      %383 = vmatprep.subr.bf16.mxu0 0
      %384 = vmatpush1.bf16.msra.mxu0 0
      %385 = vmatprep.subr.bf16.mxu0 0
      %386 = vmatpush1.bf16.msra.mxu0 0
      %387 = vmatprep.subr.bf16.mxu0 0
      %388 = vmatpush1.bf16.msra.mxu0 0
      %389 = vmatprep.subr.bf16.mxu0 0
      %390 = vmatpush1.bf16.msra.mxu0 0
      %391 = vmatprep.mubr.bf16.mxu0 0
      %392 = vmatmul.mubr.bf16.gmra.mrb[0].mxu0 %v312
      %v393 = vpop.f32.mrb[0].mxu0
      %v394 = vadd.f32 %v216, %v393
      %v395 = vpop.f32.mrb[0].mxu0
      %v396 = vpop.f32.mrb[0].mxu0
      %v397 = vadd.f32 %v216, %v396
      %v398 = vpop.f32.mrb[0].mxu0
      %399 = vmatprep.mubr.bf16.mxu0 0
      %400 = vmatmul.mubr.bf16.gmra.mrb[0].mxu0 %v315
      %v401 = vpop.f32.mrb[0].mxu0
      %v402 = vadd.f32 %v216, %v401
      %v403 = vpop.f32.mrb[0].mxu0
      %v404 = vpop.f32.mrb[0].mxu0
      %v405 = vadd.f32 %v216, %v404
      %v406 = vpop.f32.mrb[0].mxu0
      %407 = vmatprep.mubr.bf16.mxu0 0
      %408 = vmatmul.mubr.bf16.gmra.mrb[0].mxu0 %v318
      %v409 = vpop.f32.mrb[0].mxu0
      %v410 = vadd.f32 %v216, %v409
      %v411 = vpop.f32.mrb[0].mxu0
      %v412 = vpop.f32.mrb[0].mxu0
      %v413 = vadd.f32 %v216, %v412
      %v414 = vpop.f32.mrb[0].mxu0
      %415 = vmatprep.mubr.bf16.mxu0 0
      %416 = vmatmul.mubr.bf16.gmra.mrb[0].mxu0 %v321
      %v417 = vpop.f32.mrb[0].mxu0
      %v418 = vadd.f32 %v216, %v417
      %v419 = vpop.f32.mrb[0].mxu0
      %v420 = vpop.f32.mrb[0].mxu0
      %v421 = vadd.f32 %v216, %v420
      %v422 = vpop.f32.mrb[0].mxu0
      %423 = vmatprep.mubr.bf16.mxu0 0
      %424 = vmatmul.mubr.bf16.gmra.mrb[0].mxu0 %v324
      %v425 = vpop.f32.mrb[0].mxu0
      %v426 = vadd.f32 %v216, %v425
      %v427 = vpop.f32.mrb[0].mxu0
      %v428 = vpop.f32.mrb[0].mxu0
      %v429 = vadd.f32 %v216, %v428
      %v430 = vpop.f32.mrb[0].mxu0
      %431 = vmatprep.mubr.bf16.mxu0 0
      %432 = vmatmul.mubr.bf16.gmra.mrb[0].mxu0 %v327
      %v433 = vpop.f32.mrb[0].mxu0
      %v434 = vadd.f32 %v216, %v433
      %v435 = vpop.f32.mrb[0].mxu0
      %v436 = vpop.f32.mrb[0].mxu0
      %v437 = vadd.f32 %v216, %v436
      %v438 = vpop.f32.mrb[0].mxu0
      %439 = vmatprep.mubr.bf16.mxu0 0
      %440 = vmatmul.mubr.bf16.gmra.mrb[0].mxu0 %v330
      %v441 = vpop.f32.mrb[0].mxu0
      %v442 = vadd.f32 %v216, %v441
      %v443 = vpop.f32.mrb[0].mxu0
      %v444 = vpop.f32.mrb[0].mxu0
      %v445 = vadd.f32 %v216, %v444
      %v446 = vpop.f32.mrb[0].mxu0
      %447 = vmatprep.mubr.bf16.mxu0 0
      %448 = vmatmul.mubr.bf16.gmra.mrb[0].mxu0 %v333
      %v449 = vpop.f32.mrb[0].mxu0
      %v450 = vadd.f32 %v216, %v449
      %v451 = vpop.f32.mrb[0].mxu0
      %v452 = vpop.f32.mrb[0].mxu0
      %v453 = vadd.f32 %v216, %v452
      %v454 = vpop.f32.mrb[0].mxu0
      %455 = vmatprep.mubr.bf16.mxu0 0
      %456 = vmatmul.mubr.bf16.gmra.mrb[0].mxu0 %v336
      %v457 = vpop.f32.mrb[0].mxu0
      %v458 = vadd.f32 %v216, %v457
      %v459 = vpop.f32.mrb[0].mxu0
      %v460 = vpop.f32.mrb[0].mxu0
      %v461 = vadd.f32 %v216, %v460
      %v462 = vpop.f32.mrb[0].mxu0
      %463 = vmatprep.mubr.bf16.mxu0 0
      %464 = vmatmul.mubr.bf16.gmra.mrb[0].mxu0 %v339
      %v465 = vpop.f32.mrb[0].mxu0
      %v466 = vadd.f32 %v216, %v465
      %v467 = vpop.f32.mrb[0].mxu0
      %v468 = vpop.f32.mrb[0].mxu0
      %v469 = vadd.f32 %v216, %v468
      %v470 = vpop.f32.mrb[0].mxu0
      %471 = vmatprep.mubr.bf16.mxu0 0
      %472 = vmatmul.mubr.bf16.gmra.mrb[0].mxu0 %v342
      %v473 = vpop.f32.mrb[0].mxu0
      %v474 = vadd.f32 %v216, %v473
      %v475 = vpop.f32.mrb[0].mxu0
      %v476 = vpop.f32.mrb[0].mxu0
      %v477 = vadd.f32 %v216, %v476
      %v478 = vpop.f32.mrb[0].mxu0
      %479 = vmatprep.mubr.bf16.mxu0 0
      %480 = vmatmul.mubr.bf16.gmra.mrb[0].mxu0 %v345
      %v481 = vpop.f32.mrb[0].mxu0
      %v482 = vadd.f32 %v216, %v481
      %v483 = vpop.f32.mrb[0].mxu0
      %v484 = vpop.f32.mrb[0].mxu0
      %v485 = vadd.f32 %v216, %v484
      %v486 = vpop.f32.mrb[0].mxu0
      %487 = vmatprep.mubr.bf16.mxu0 0
      %488 = vmatmul.mubr.bf16.gmra.mrb[0].mxu0 %v348
      %v489 = vpop.f32.mrb[0].mxu0
      %v490 = vadd.f32 %v216, %v489
      %v491 = vpop.f32.mrb[0].mxu0
      %v492 = vpop.f32.mrb[0].mxu0
      %v493 = vadd.f32 %v216, %v492
      %v494 = vpop.f32.mrb[0].mxu0
      %495 = vmatprep.mubr.bf16.mxu0 0
      %496 = vmatmul.mubr.bf16.gmra.mrb[0].mxu0 %v351
      %v497 = vpop.f32.mrb[0].mxu0
      %v498 = vadd.f32 %v216, %v497
      %v499 = vpop.f32.mrb[0].mxu0
      %v500 = vpop.f32.mrb[0].mxu0
      %v501 = vadd.f32 %v216, %v500
      %v502 = vpop.f32.mrb[0].mxu0
      %503 = vmatprep.mubr.bf16.mxu0 0
      %504 = vmatmul.mubr.bf16.gmra.mrb[0].mxu0 %v354
      %v505 = vpop.f32.mrb[0].mxu0
      %v506 = vadd.f32 %v216, %v505
      %v507 = vpop.f32.mrb[0].mxu0
      %v508 = vpop.f32.mrb[0].mxu0
      %v509 = vadd.f32 %v216, %v508
      %v510 = vpop.f32.mrb[0].mxu0
      %511 = vmatprep.mubr.bf16.mxu0 0
      %512 = vmatmul.mubr.bf16.gmra.mrb[0].mxu0 %v357
      %v513 = vpop.f32.mrb[0].mxu0
      %v514 = vadd.f32 %v216, %v513
      %v515 = vpop.f32.mrb[0].mxu0
      %v516 = vpop.f32.mrb[0].mxu0
      %v517 = vadd.f32 %v216, %v516
      %v518 = vpop.f32.mrb[0].mxu0
      %519 = vdwg.mxu0
      %v520 = vmax.f32 %v394, 0.0
      %v521 = vmax.f32 %v397, 0.0
      %v522 = vmax.f32 %v402, 0.0
      %v523 = vmax.f32 %v405, 0.0
      %v524 = vmax.f32 %v410, 0.0
      %v525 = vmax.f32 %v413, 0.0
      %v526 = vmax.f32 %v418, 0.0
      %v527 = vmax.f32 %v421, 0.0
      %v528 = vmax.f32 %v426, 0.0
      %v529 = vmax.f32 %v429, 0.0
      %v530 = vmax.f32 %v434, 0.0
      %v531 = vmax.f32 %v437, 0.0
      %v532 = vmax.f32 %v442, 0.0
      %v533 = vmax.f32 %v445, 0.0
      %v534 = vmax.f32 %v450, 0.0
      %v535 = vmax.f32 %v453, 0.0
      %v536 = vmax.f32 %v458, 0.0
      %v537 = vmax.f32 %v461, 0.0
      %v538 = vmax.f32 %v466, 0.0
      %v539 = vmax.f32 %v469, 0.0
      %v540 = vmax.f32 %v474, 0.0
      %v541 = vmax.f32 %v477, 0.0
      %v542 = vmax.f32 %v482, 0.0
      %v543 = vmax.f32 %v485, 0.0
      %v544 = vmax.f32 %v490, 0.0
      %v545 = vmax.f32 %v493, 0.0
      %v546 = vmax.f32 %v498, 0.0
      %v547 = vmax.f32 %v501, 0.0
      %v548 = vmax.f32 %v506, 0.0
      %v549 = vmax.f32 %v509, 0.0
      %v550 = vmax.f32 %v514, 0.0
      %v551 = vmax.f32 %v517, 0.0
      %v552 = vpack.c.bf16 %v521, %v520
      %v553 = vpack.c.bf16 %v523, %v522
      %v554 = vpack.c.bf16 %v525, %v524
      %v555 = vpack.c.bf16 %v527, %v526
      %v556 = vpack.c.bf16 %v529, %v528
      %v557 = vpack.c.bf16 %v531, %v530
      %v558 = vpack.c.bf16 %v533, %v532
      %v559 = vpack.c.bf16 %v535, %v534
      %v560 = vpack.c.bf16 %v537, %v536
      %v561 = vpack.c.bf16 %v539, %v538
      %v562 = vpack.c.bf16 %v541, %v540
      %v563 = vpack.c.bf16 %v543, %v542
      %v564 = vpack.c.bf16 %v545, %v544
      %v565 = vpack.c.bf16 %v547, %v546
      %v566 = vpack.c.bf16 %v549, %v548
      %v567 = vpack.c.bf16 %v551, %v550
      %v584 = vunpack.c.l.b16 %v552
      %v585 = vunpack.c.h.b16 %v552
      %v586 = vunpack.c.l.b16 %v553
      %v587 = vunpack.c.h.b16 %v553
      %v588 = vunpack.c.l.b16 %v554
      %v589 = vunpack.c.h.b16 %v554
      %v590 = vunpack.c.l.b16 %v555
      %v591 = vunpack.c.h.b16 %v555
      %v592 = vunpack.c.l.b16 %v556
      %v593 = vunpack.c.h.b16 %v556
      %v594 = vunpack.c.l.b16 %v557
      %v595 = vunpack.c.h.b16 %v557
      %v596 = vunpack.c.l.b16 %v558
      %v597 = vunpack.c.h.b16 %v558
      %v598 = vunpack.c.l.b16 %v559
      %v599 = vunpack.c.h.b16 %v559
      %v600 = vunpack.c.l.b16 %v560
      %v601 = vunpack.c.h.b16 %v560
      %v602 = vunpack.c.l.b16 %v561
      %v603 = vunpack.c.h.b16 %v561
      %v604 = vunpack.c.l.b16 %v562
      %v605 = vunpack.c.h.b16 %v562
      %v606 = vunpack.c.l.b16 %v563
      %v607 = vunpack.c.h.b16 %v563
      %v608 = vunpack.c.l.b16 %v564
      %v609 = vunpack.c.h.b16 %v564
      %v610 = vunpack.c.l.b16 %v565
      %v611 = vunpack.c.h.b16 %v565
      %v612 = vunpack.c.l.b16 %v566
      %v613 = vunpack.c.h.b16 %v566
      %v614 = vunpack.c.l.b16 %v567
      %v615 = vunpack.c.h.b16 %v567
      %v616 = vpack.c.b16 %v584, %v584
      %v617 = vpack.c.b16 %v585, %v585
      %v618 = vpack.c.b16 %v586, %v586
      %v619 = vpack.c.b16 %v587, %v587
      %v620 = vpack.c.b16 %v588, %v588
      %v621 = vpack.c.b16 %v589, %v589
      %v622 = vpack.c.b16 %v590, %v590
      %v623 = vpack.c.b16 %v591, %v591
      %v624 = vpack.c.b16 %v592, %v592
      %v625 = vpack.c.b16 %v593, %v593
      %v626 = vpack.c.b16 %v594, %v594
      %v627 = vpack.c.b16 %v595, %v595
      %v628 = vpack.c.b16 %v596, %v596
      %v629 = vpack.c.b16 %v597, %v597
      %v630 = vpack.c.b16 %v598, %v598
      %v631 = vpack.c.b16 %v599, %v599
      %v632 = vpack.c.b16 %v600, %v600
      %v633 = vpack.c.b16 %v601, %v601
      %v634 = vpack.c.b16 %v602, %v602
      %v635 = vpack.c.b16 %v603, %v603
      %v636 = vpack.c.b16 %v604, %v604
      %v637 = vpack.c.b16 %v605, %v605
      %v638 = vpack.c.b16 %v606, %v606
      %v639 = vpack.c.b16 %v607, %v607
      %v640 = vpack.c.b16 %v608, %v608
      %v641 = vpack.c.b16 %v609, %v609
      %v642 = vpack.c.b16 %v610, %v610
      %v643 = vpack.c.b16 %v611, %v611
      %v644 = vpack.c.b16 %v612, %v612
      %v645 = vpack.c.b16 %v613, %v613
      %v646 = vpack.c.b16 %v614, %v614
      %v647 = vpack.c.b16 %v615, %v615
      %vm680 = vcmask 519168
      %681 = vst.msk [vmem:[%s172] sm:$0xf] %vm680, %v616
      %682 = vst.msk [vmem:[%s172 + $0x4] sm:$0xf] %vm680, %v617
      %683 = vst.msk [vmem:[%s172 + $0x8] sm:$0xf] %vm680, %v618
      %684 = vst.msk [vmem:[%s172 + $0xc] sm:$0xf] %vm680, %v619
      %685 = vst.msk [vmem:[%s172 + $0x10] sm:$0xf] %vm680, %v620
      %686 = vst.msk [vmem:[%s172 + $0x14] sm:$0xf] %vm680, %v621
      %687 = vst.msk [vmem:[%s172 + $0x18] sm:$0xf] %vm680, %v622
      %688 = vst.msk [vmem:[%s172 + $0x1c] sm:$0xf] %vm680, %v623
      %689 = vst.msk [vmem:[%s172 + $0x20] sm:$0xf] %vm680, %v624
      %690 = vst.msk [vmem:[%s172 + $0x24] sm:$0xf] %vm680, %v625
      %691 = vst.msk [vmem:[%s172 + $0x28] sm:$0xf] %vm680, %v626
      %692 = vst.msk [vmem:[%s172 + $0x2c] sm:$0xf] %vm680, %v627
      %693 = vst.msk [vmem:[%s172 + $0x30] sm:$0xf] %vm680, %v628
      %694 = vst.msk [vmem:[%s172 + $0x34] sm:$0xf] %vm680, %v629
      %695 = vst.msk [vmem:[%s172 + $0x38] sm:$0xf] %vm680, %v630
      %696 = vst.msk [vmem:[%s172 + $0x3c] sm:$0xf] %vm680, %v631
      %697 = vst.msk [vmem:[%s172 + $0x40] sm:$0xf] %vm680, %v632
      %698 = vst.msk [vmem:[%s172 + $0x44] sm:$0xf] %vm680, %v633
      %699 = vst.msk [vmem:[%s172 + $0x48] sm:$0xf] %vm680, %v634
      %700 = vst.msk [vmem:[%s172 + $0x4c] sm:$0xf] %vm680, %v635
      %701 = vst.msk [vmem:[%s172 + $0x50] sm:$0xf] %vm680, %v636
      %702 = vst.msk [vmem:[%s172 + $0x54] sm:$0xf] %vm680, %v637
      %703 = vst.msk [vmem:[%s172 + $0x58] sm:$0xf] %vm680, %v638
      %704 = vst.msk [vmem:[%s172 + $0x5c] sm:$0xf] %vm680, %v639
      %705 = vst.msk [vmem:[%s172 + $0x60] sm:$0xf] %vm680, %v640
      %706 = vst.msk [vmem:[%s172 + $0x64] sm:$0xf] %vm680, %v641
      %707 = vst.msk [vmem:[%s172 + $0x68] sm:$0xf] %vm680, %v642
      %708 = vst.msk [vmem:[%s172 + $0x6c] sm:$0xf] %vm680, %v643
      %709 = vst.msk [vmem:[%s172 + $0x70] sm:$0xf] %vm680, %v644
      %710 = vst.msk [vmem:[%s172 + $0x74] sm:$0xf] %vm680, %v645
      %711 = vst.msk [vmem:[%s172 + $0x78] sm:$0xf] %vm680, %v646
      %712 = vst.msk [vmem:[%s172 + $0x7c] sm:$0xf] %vm680, %v647
      %s713 = smul.u32 32, %s14
      %p714 = scmp.lt.s32.totalorder %s713, 63
      %s715 = scalar_select %p714, %s713, 63
      %s716 = smul.addr %s715, 4
      %s717 = scalar_lea.vmem %s3, %s716
      // Predicated region
      $region33: #{dncnn_forward.6} parent=31 // pred_check
        %p718 = pneg %p100
      $region34: #{dncnn_forward.6} parent=31 // pred_check_branch
        %720 = sbr.rel (%p718) target = $region36
      $region35: #{dncnn_forward.6} parent=31 // pred_region
        %s721 = smul.u32 32, %s14
      $region36: #{dncnn_forward.6} parent=31 // pred_fallthru
        _
    $region32: #{dncnn_forward.6} parent=5 // pred_fallthru
      _
    %p722 = scmp.le.s32.totalorder 2, %s9
    // Predicated region
    $region37: #{dncnn_forward.6} parent=5 // pred_check
      %p723 = pneg %p722
    $region38: #{dncnn_forward.6} parent=5 // pred_check_branch
      %725 = sbr.rel (%p723) target = $region40
    $region39: #{dncnn_forward.6} parent=5 // pred_region
      %s726 = ssub.s32 %s9, 2
      // Predicated region
      $region41: #{dncnn_forward.6} parent=39 // pred_check
        %p727 = pneg %p106
      $region42: #{dncnn_forward.6} parent=39 // pred_check_branch
        %729 = sbr.rel (%p727) target = $region44
      $region43: #{dncnn_forward.6} parent=39 // pred_region
        %s730 = smul.u32 32, %s15
        %p731 = scmp.lt.s32.totalorder %s730, 63
        %s732 = scalar_select %p731, %s730, 63
        %s733 = smul.addr %s732, 4
        %s734 = scalar_lea.vmem %s3, %s733
      $region44: #{dncnn_forward.6} parent=39 // pred_fallthru
        _
    $region40: #{dncnn_forward.6} parent=5 // pred_fallthru
      _
  $region6: #{dncnn_forward.6} parent=0 // loop_footer
    %s13 = sadd.s32 1, %s9
  $region7: #{dncnn_forward.6} parent=0 // loop_footer_branch
    %8 = sbr.rel target = $region3
  $region8: #{dncnn_forward.6} parent=0 // loop_exit
    _

// kernel: dncnn_forward.8
$region0: #{dncnn_forward.8}
  #allocation0 [shape = 'u32[]', space=smem, size = 0x4, offset = 0x4, fixed_abs, tag = 'smem constant byte address 0x4 - core index']
  #allocation1 [shape = 'u32[144,128]{1,0:T(1,128)}', space=vmem, size = 0x12000, scoped, tag = 'internal scratch']
  %s0 = inlined_call_operand.vmem [shape: f32[512,64], index: 0, kind: input, shape index: {}]
  %s1 = inlined_call_operand.vmem [shape: f32[1,64], index: 1, kind: input, shape index: {}]
  %s2 = inlined_call_operand.vmem [shape: f32[1,64], index: 2, kind: input, shape index: {}]
  %s3 = inlined_call_operand.vmem [shape: bf16[512,64], index: 3, kind: output, shape index: {}]
  %s4 = sld [smem:[#allocation0]]
  $region45: #{dncnn_forward.8} parent=0
    _
  %s6 = ssub.s32 1, %s4
  %s7 = scalar_select 0, %s6, %s4
  loop: start=0, step=1, limit=4
  $region2: #{dncnn_forward.8} parent=0 // loop_pre_header
    _
  $region3: #{dncnn_forward.8} parent=0 // loop_header
    %s9 = sphi 0, %s13
    %p10 = scmp.ge.s32.totalorder %s9, 4
    %s19 = sphi 0, %s21
    %s22 = sphi 0, %s19
    %s23 = sphi 0, %s22
    %s39 = sphi 0, %s23
    %s43 = sphi 0, %s43
    %s45 = sphi 0, %s43
    %s46 = sphi 0, %s45
    %s60 = sphi 0, %s46
    %s64 = sphi 0, %s64
    %s66 = sphi 0, %s64
    %s67 = sphi 0, %s66
    %s81 = sphi 0, %s67
    %s87 = sphi 0, %s89
    %s90 = sphi 0, %s87
    %s91 = sphi 0, %s90
    %s107 = sphi 0, %s91
  $region4: #{dncnn_forward.8} parent=0 // loop_header_branch
    %12 = sbr.rel (%p10) target = $region8
  $region5: #{dncnn_forward.8} parent=0 // loop_body
    %s14 = ssub.s32 %s9, 1
    %s15 = ssub.s32 %s9, 2
    %s16 = sadd.s32 %s9, 1
    %s17 = ssub.s32 %s9, %s16
    %p18 = scmp.eq.s32.totalorder %s17, 0
    %s20 = sadd.s32 %s19, 1
    %s21 = scalar_select %p18, %s19, %s20
    %p24 = pneg %p18
    %p25 = scmp.eq.s32.totalorder %s9, 1
    %p26 = por %p24, %p25
    %p27 = scmp.ne.s32.totalorder %s19, %s22
    %p28 = scmp.eq.s32.totalorder %s9, 0
    %p29 = por %p27, %p28
    %p30 = scmp.ne.s32.totalorder %s19, %s22
    %p31 = scmp.eq.s32.totalorder %s14, 1
    %p32 = por %p30, %p31
    %p33 = scmp.ne.s32.totalorder %s22, %s23
    %p34 = scmp.eq.s32.totalorder %s14, 0
    %p35 = por %p33, %p34
    %p36 = scmp.ne.s32.totalorder %s22, %s23
    %p37 = scmp.eq.s32.totalorder %s15, 1
    %p38 = por %p36, %p37
    %p40 = scmp.ne.s32.totalorder %s23, %s39
    %p41 = scmp.eq.s32.totalorder %s15, 0
    %p42 = por %p40, %p41
    %s44 = sadd.s32 %s43, 1
    %p47 = scmp.eq.s32.totalorder %s9, 1
    %p48 = scmp.ne.s32.totalorder %s43, %s45
    %p49 = scmp.eq.s32.totalorder %s9, 0
    %p50 = por %p48, %p49
    %p51 = scmp.ne.s32.totalorder %s43, %s45
    %p52 = scmp.eq.s32.totalorder %s14, 1
    %p53 = por %p51, %p52
    %p54 = scmp.ne.s32.totalorder %s45, %s46
    %p55 = scmp.eq.s32.totalorder %s14, 0
    %p56 = por %p54, %p55
    %p57 = scmp.ne.s32.totalorder %s45, %s46
    %p58 = scmp.eq.s32.totalorder %s15, 1
    %p59 = por %p57, %p58
    %p61 = scmp.ne.s32.totalorder %s46, %s60
    %p62 = scmp.eq.s32.totalorder %s15, 0
    %p63 = por %p61, %p62
    %s65 = sadd.s32 %s64, 1
    %p68 = scmp.eq.s32.totalorder %s9, 1
    %p69 = scmp.ne.s32.totalorder %s64, %s66
    %p70 = scmp.eq.s32.totalorder %s9, 0
    %p71 = por %p69, %p70
    %p72 = scmp.ne.s32.totalorder %s64, %s66
    %p73 = scmp.eq.s32.totalorder %s14, 1
    %p74 = por %p72, %p73
    %p75 = scmp.ne.s32.totalorder %s66, %s67
    %p76 = scmp.eq.s32.totalorder %s14, 0
    %p77 = por %p75, %p76
    %p78 = scmp.ne.s32.totalorder %s66, %s67
    %p79 = scmp.eq.s32.totalorder %s15, 1
    %p80 = por %p78, %p79
    %p82 = scmp.ne.s32.totalorder %s67, %s81
    %p83 = scmp.eq.s32.totalorder %s15, 0
    %p84 = por %p82, %p83
    %s85 = ssub.s32 %s9, %s16
    %p86 = scmp.eq.s32.totalorder %s85, 0
    %s88 = sadd.s32 %s87, 1
    %s89 = scalar_select %p86, %s87, %s88
    %p92 = pneg %p86
    %p93 = scmp.eq.s32.totalorder %s9, 1
    %p94 = por %p92, %p93
    %p95 = scmp.ne.s32.totalorder %s87, %s90
    %p96 = scmp.eq.s32.totalorder %s9, 0
    %p97 = por %p95, %p96
    %p98 = scmp.ne.s32.totalorder %s87, %s90
    %p99 = scmp.eq.s32.totalorder %s14, 1
    %p100 = por %p98, %p99
    %p101 = scmp.ne.s32.totalorder %s90, %s91
    %p102 = scmp.eq.s32.totalorder %s14, 0
    %p103 = por %p101, %p102
    %p104 = scmp.ne.s32.totalorder %s90, %s91
    %p105 = scmp.eq.s32.totalorder %s15, 1
    %p106 = por %p104, %p105
    %p108 = scmp.ne.s32.totalorder %s91, %s107
    %p109 = scmp.eq.s32.totalorder %s15, 0
    %p110 = por %p108, %p109
    %p111 = scmp.le.s32.totalorder 1, %s9
    %p112 = scmp.lt.s32.totalorder %s9, 3
    %p113 = pnand %p111, %p112
    %p114 = pneg %p113
    // Predicated region
    $region9: #{dncnn_forward.8} parent=5 // pred_check
      _
    $region10: #{dncnn_forward.8} parent=5 // pred_check_branch
      %116 = sbr.rel (%p113) target = $region12
    $region11: #{dncnn_forward.8} parent=5 // pred_region
      %s117 = ssub.s32 %s9, 1
      // Predicated region
      $region13: #{dncnn_forward.8} parent=11 // pred_check
        %p118 = pneg %p56
      $region14: #{dncnn_forward.8} parent=11 // pred_check_branch
        %120 = sbr.rel (%p118) target = $region16
      $region15: #{dncnn_forward.8} parent=11 // pred_region
        _
      $region16: #{dncnn_forward.8} parent=11 // pred_fallthru
        _
      // Predicated region
      $region17: #{dncnn_forward.8} parent=11 // pred_check
        %p121 = pneg %p77
      $region18: #{dncnn_forward.8} parent=11 // pred_check_branch
        %123 = sbr.rel (%p121) target = $region20
      $region19: #{dncnn_forward.8} parent=11 // pred_region
        _
      $region20: #{dncnn_forward.8} parent=11 // pred_fallthru
        _
    $region12: #{dncnn_forward.8} parent=5 // pred_fallthru
      _
    %p124 = scmp.lt.s32.totalorder %s9, 2
    // Predicated region
    $region21: #{dncnn_forward.8} parent=5 // pred_check
      %p125 = pneg %p124
    $region22: #{dncnn_forward.8} parent=5 // pred_check_branch
      %127 = sbr.rel (%p125) target = $region24
    $region23: #{dncnn_forward.8} parent=5 // pred_region
      // Predicated region
      $region25: #{dncnn_forward.8} parent=23 // pred_check
        %p128 = pneg %p29
      $region26: #{dncnn_forward.8} parent=23 // pred_check_branch
        %130 = sbr.rel (%p128) target = $region28
      $region27: #{dncnn_forward.8} parent=23 // pred_region
        %s131 = smul.u32 32, %s9
        %p132 = scmp.lt.s32.totalorder %s131, 63
        %s133 = scalar_select %p132, %s131, 63
        %s134 = smul.addr %s133, 8
        %s135 = scalar_lea.vmem %s0, %s134
        %s136 = smul.u32 32, %s9
      $region28: #{dncnn_forward.8} parent=23 // pred_fallthru
        _
    $region24: #{dncnn_forward.8} parent=5 // pred_fallthru
      _
    %p137 = scmp.le.s32.totalorder 1, %s9
    %p138 = scmp.lt.s32.totalorder %s9, 3
    %p139 = pnand %p137, %p138
    %p140 = pneg %p139
    // Predicated region
    $region29: #{dncnn_forward.8} parent=5 // pred_check
      _
    $region30: #{dncnn_forward.8} parent=5 // pred_check_branch
      %142 = sbr.rel (%p139) target = $region32
    $region31: #{dncnn_forward.8} parent=5 // pred_region
      %s143 = ssub.s32 %s9, 1
      %s144 = smul.u32 32, %s14
      %p145 = scmp.lt.s32.totalorder %s144, 63
      %s146 = scalar_select %p145, %s144, 63
      %s147 = smul.addr %s146, 8
      %s148 = scalar_lea.vmem %s0, %s147
      %p149 = pneg %p35
      %p150 = pneg %p32
      %p151 = pneg %p56
      %p152 = pneg %p53
      %p153 = pneg %p77
      %p154 = pneg %p74
      %p155 = pneg %p103
      %p156 = pneg %p100
      %s157 = smul.u32 32, %s14
      %p158 = scmp.lt.s32.totalorder %s157, 63
      %s159 = scalar_select %p158, %s157, 63
      %s160 = smul.addr %s159, 4
      %s161 = scalar_lea.vmem %s3, %s160
      %s162 = smul.u32 32, %s14
      %p163 = scmp.lt.s32.totalorder %s162, 63
      %s164 = scalar_select %p163, %s162, 63
      %s165 = smul.addr %s164, 8
      %s166 = scalar_lea.vmem %s0, %s165
      %s167 = smul.u32 32, %s14
      %s168 = smul.u32 32, %s14
      %p169 = scmp.lt.s32.totalorder %s168, 63
      %s170 = scalar_select %p169, %s168, 63
      %s171 = smul.addr %s170, 4
      %s172 = scalar_lea.vmem %s3, %s171
      %s173 = smul.u32 32, %s14
      %v174 = vld [vmem:[%s166] sm:$0xff]
      %v175 = vld [vmem:[%s166 + $0x8] sm:$0xff]
      %v176 = vld [vmem:[%s166 + $0x10] sm:$0xff]
      %v177 = vld [vmem:[%s166 + $0x18] sm:$0xff]
      %v178 = vld [vmem:[%s166 + $0x20] sm:$0xff]
      %v179 = vld [vmem:[%s166 + $0x28] sm:$0xff]
      %v180 = vld [vmem:[%s166 + $0x30] sm:$0xff]
      %v181 = vld [vmem:[%s166 + $0x38] sm:$0xff]
      %v182 = vld [vmem:[%s166 + $0x40] sm:$0xff]
      %v183 = vld [vmem:[%s166 + $0x48] sm:$0xff]
      %v184 = vld [vmem:[%s166 + $0x50] sm:$0xff]
      %v185 = vld [vmem:[%s166 + $0x58] sm:$0xff]
      %v186 = vld [vmem:[%s166 + $0x60] sm:$0xff]
      %v187 = vld [vmem:[%s166 + $0x68] sm:$0xff]
      %v188 = vld [vmem:[%s166 + $0x70] sm:$0xff]
      %v189 = vld [vmem:[%s166 + $0x78] sm:$0xff]
      %v190 = vld [vmem:[%s166 + $0x80] sm:$0xff]
      %v191 = vld [vmem:[%s166 + $0x88] sm:$0xff]
      %v192 = vld [vmem:[%s166 + $0x90] sm:$0xff]
      %v193 = vld [vmem:[%s166 + $0x98] sm:$0xff]
      %v194 = vld [vmem:[%s166 + $0xa0] sm:$0xff]
      %v195 = vld [vmem:[%s166 + $0xa8] sm:$0xff]
      %v196 = vld [vmem:[%s166 + $0xb0] sm:$0xff]
      %v197 = vld [vmem:[%s166 + $0xb8] sm:$0xff]
      %v198 = vld [vmem:[%s166 + $0xc0] sm:$0xff]
      %v199 = vld [vmem:[%s166 + $0xc8] sm:$0xff]
      %v200 = vld [vmem:[%s166 + $0xd0] sm:$0xff]
      %v201 = vld [vmem:[%s166 + $0xd8] sm:$0xff]
      %v202 = vld [vmem:[%s166 + $0xe0] sm:$0xff]
      %v203 = vld [vmem:[%s166 + $0xe8] sm:$0xff]
      %v204 = vld [vmem:[%s166 + $0xf0] sm:$0xff]
      %v205 = vld [vmem:[%s166 + $0xf8] sm:$0xff]
      %v206 = vld [vmem:[%s1] sm:$0x1]
      %v208 = vlaneseq
      %v209 = vshrl.u32 %v208, 7
      %v210 = vsub.s32 0, %v209
      %v211 = vrot.slane %v206, %v210
      %v213 = vmul.f32 %v174, %v211
      %v214 = vmul.f32 %v175, %v211
      %v215 = vmul.f32 %v176, %v211
      %v216 = vmul.f32 %v177, %v211
      %v217 = vmul.f32 %v178, %v211
      %v218 = vmul.f32 %v179, %v211
      %v219 = vmul.f32 %v180, %v211
      %v220 = vmul.f32 %v181, %v211
      %v221 = vmul.f32 %v182, %v211
      %v222 = vmul.f32 %v183, %v211
      %v223 = vmul.f32 %v184, %v211
      %v224 = vmul.f32 %v185, %v211
      %v225 = vmul.f32 %v186, %v211
      %v226 = vmul.f32 %v187, %v211
      %v227 = vmul.f32 %v188, %v211
      %v228 = vmul.f32 %v189, %v211
      %v229 = vmul.f32 %v190, %v211
      %v230 = vmul.f32 %v191, %v211
      %v231 = vmul.f32 %v192, %v211
      %v232 = vmul.f32 %v193, %v211
      %v233 = vmul.f32 %v194, %v211
      %v234 = vmul.f32 %v195, %v211
      %v235 = vmul.f32 %v196, %v211
      %v236 = vmul.f32 %v197, %v211
      %v237 = vmul.f32 %v198, %v211
      %v238 = vmul.f32 %v199, %v211
      %v239 = vmul.f32 %v200, %v211
      %v240 = vmul.f32 %v201, %v211
      %v241 = vmul.f32 %v202, %v211
      %v242 = vmul.f32 %v203, %v211
      %v243 = vmul.f32 %v204, %v211
      %v244 = vmul.f32 %v205, %v211
      %v245 = vld [vmem:[%s2] sm:$0x1]
      %v247 = vlaneseq
      %v248 = vshrl.u32 %v247, 7
      %v249 = vsub.s32 0, %v248
      %v250 = vrot.slane %v245, %v249
      %v252 = vadd.f32 %v213, %v250
      %v253 = vadd.f32 %v214, %v250
      %v254 = vadd.f32 %v215, %v250
      %v255 = vadd.f32 %v216, %v250
      %v256 = vadd.f32 %v217, %v250
      %v257 = vadd.f32 %v218, %v250
      %v258 = vadd.f32 %v219, %v250
      %v259 = vadd.f32 %v220, %v250
      %v260 = vadd.f32 %v221, %v250
      %v261 = vadd.f32 %v222, %v250
      %v262 = vadd.f32 %v223, %v250
      %v263 = vadd.f32 %v224, %v250
      %v264 = vadd.f32 %v225, %v250
      %v265 = vadd.f32 %v226, %v250
      %v266 = vadd.f32 %v227, %v250
      %v267 = vadd.f32 %v228, %v250
      %v268 = vadd.f32 %v229, %v250
      %v269 = vadd.f32 %v230, %v250
      %v270 = vadd.f32 %v231, %v250
      %v271 = vadd.f32 %v232, %v250
      %v272 = vadd.f32 %v233, %v250
      %v273 = vadd.f32 %v234, %v250
      %v274 = vadd.f32 %v235, %v250
      %v275 = vadd.f32 %v236, %v250
      %v276 = vadd.f32 %v237, %v250
      %v277 = vadd.f32 %v238, %v250
      %v278 = vadd.f32 %v239, %v250
      %v279 = vadd.f32 %v240, %v250
      %v280 = vadd.f32 %v241, %v250
      %v281 = vadd.f32 %v242, %v250
      %v282 = vadd.f32 %v243, %v250
      %v283 = vadd.f32 %v244, %v250
      %v284 = vmax.f32 %v252, 0.0
      %v285 = vmax.f32 %v253, 0.0
      %v286 = vmax.f32 %v254, 0.0
      %v287 = vmax.f32 %v255, 0.0
      %v288 = vmax.f32 %v256, 0.0
      %v289 = vmax.f32 %v257, 0.0
      %v290 = vmax.f32 %v258, 0.0
      %v291 = vmax.f32 %v259, 0.0
      %v292 = vmax.f32 %v260, 0.0
      %v293 = vmax.f32 %v261, 0.0
      %v294 = vmax.f32 %v262, 0.0
      %v295 = vmax.f32 %v263, 0.0
      %v296 = vmax.f32 %v264, 0.0
      %v297 = vmax.f32 %v265, 0.0
      %v298 = vmax.f32 %v266, 0.0
      %v299 = vmax.f32 %v267, 0.0
      %v300 = vmax.f32 %v268, 0.0
      %v301 = vmax.f32 %v269, 0.0
      %v302 = vmax.f32 %v270, 0.0
      %v303 = vmax.f32 %v271, 0.0
      %v304 = vmax.f32 %v272, 0.0
      %v305 = vmax.f32 %v273, 0.0
      %v306 = vmax.f32 %v274, 0.0
      %v307 = vmax.f32 %v275, 0.0
      %v308 = vmax.f32 %v276, 0.0
      %v309 = vmax.f32 %v277, 0.0
      %v310 = vmax.f32 %v278, 0.0
      %v311 = vmax.f32 %v279, 0.0
      %v312 = vmax.f32 %v280, 0.0
      %v313 = vmax.f32 %v281, 0.0
      %v314 = vmax.f32 %v282, 0.0
      %v315 = vmax.f32 %v283, 0.0
      %v316 = vpack.c.bf16 %v285, %v284
      %v317 = vpack.c.bf16 %v287, %v286
      %v318 = vpack.c.bf16 %v289, %v288
      %v319 = vpack.c.bf16 %v291, %v290
      %v320 = vpack.c.bf16 %v293, %v292
      %v321 = vpack.c.bf16 %v295, %v294
      %v322 = vpack.c.bf16 %v297, %v296
      %v323 = vpack.c.bf16 %v299, %v298
      %v324 = vpack.c.bf16 %v301, %v300
      %v325 = vpack.c.bf16 %v303, %v302
      %v326 = vpack.c.bf16 %v305, %v304
      %v327 = vpack.c.bf16 %v307, %v306
      %v328 = vpack.c.bf16 %v309, %v308
      %v329 = vpack.c.bf16 %v311, %v310
      %v330 = vpack.c.bf16 %v313, %v312
      %v331 = vpack.c.bf16 %v315, %v314
      %v348 = vunpack.c.l.b16 %v316
      %v349 = vunpack.c.h.b16 %v316
      %v350 = vunpack.c.l.b16 %v317
      %v351 = vunpack.c.h.b16 %v317
      %v352 = vunpack.c.l.b16 %v318
      %v353 = vunpack.c.h.b16 %v318
      %v354 = vunpack.c.l.b16 %v319
      %v355 = vunpack.c.h.b16 %v319
      %v356 = vunpack.c.l.b16 %v320
      %v357 = vunpack.c.h.b16 %v320
      %v358 = vunpack.c.l.b16 %v321
      %v359 = vunpack.c.h.b16 %v321
      %v360 = vunpack.c.l.b16 %v322
      %v361 = vunpack.c.h.b16 %v322
      %v362 = vunpack.c.l.b16 %v323
      %v363 = vunpack.c.h.b16 %v323
      %v364 = vunpack.c.l.b16 %v324
      %v365 = vunpack.c.h.b16 %v324
      %v366 = vunpack.c.l.b16 %v325
      %v367 = vunpack.c.h.b16 %v325
      %v368 = vunpack.c.l.b16 %v326
      %v369 = vunpack.c.h.b16 %v326
      %v370 = vunpack.c.l.b16 %v327
      %v371 = vunpack.c.h.b16 %v327
      %v372 = vunpack.c.l.b16 %v328
      %v373 = vunpack.c.h.b16 %v328
      %v374 = vunpack.c.l.b16 %v329
      %v375 = vunpack.c.h.b16 %v329
      %v376 = vunpack.c.l.b16 %v330
      %v377 = vunpack.c.h.b16 %v330
      %v378 = vunpack.c.l.b16 %v331
      %v379 = vunpack.c.h.b16 %v331
      %v380 = vpack.c.b16 %v348, %v348
      %v381 = vpack.c.b16 %v349, %v349
      %v382 = vpack.c.b16 %v350, %v350
      %v383 = vpack.c.b16 %v351, %v351
      %v384 = vpack.c.b16 %v352, %v352
      %v385 = vpack.c.b16 %v353, %v353
      %v386 = vpack.c.b16 %v354, %v354
      %v387 = vpack.c.b16 %v355, %v355
      %v388 = vpack.c.b16 %v356, %v356
      %v389 = vpack.c.b16 %v357, %v357
      %v390 = vpack.c.b16 %v358, %v358
      %v391 = vpack.c.b16 %v359, %v359
      %v392 = vpack.c.b16 %v360, %v360
      %v393 = vpack.c.b16 %v361, %v361
      %v394 = vpack.c.b16 %v362, %v362
      %v395 = vpack.c.b16 %v363, %v363
      %v396 = vpack.c.b16 %v364, %v364
      %v397 = vpack.c.b16 %v365, %v365
      %v398 = vpack.c.b16 %v366, %v366
      %v399 = vpack.c.b16 %v367, %v367
      %v400 = vpack.c.b16 %v368, %v368
      %v401 = vpack.c.b16 %v369, %v369
      %v402 = vpack.c.b16 %v370, %v370
      %v403 = vpack.c.b16 %v371, %v371
      %v404 = vpack.c.b16 %v372, %v372
      %v405 = vpack.c.b16 %v373, %v373
      %v406 = vpack.c.b16 %v374, %v374
      %v407 = vpack.c.b16 %v375, %v375
      %v408 = vpack.c.b16 %v376, %v376
      %v409 = vpack.c.b16 %v377, %v377
      %v410 = vpack.c.b16 %v378, %v378
      %v411 = vpack.c.b16 %v379, %v379
      %vm444 = vcmask 519168
      %445 = vst.msk [vmem:[%s172] sm:$0xf] %vm444, %v380
      %446 = vst.msk [vmem:[%s172 + $0x4] sm:$0xf] %vm444, %v381
      %447 = vst.msk [vmem:[%s172 + $0x8] sm:$0xf] %vm444, %v382
      %448 = vst.msk [vmem:[%s172 + $0xc] sm:$0xf] %vm444, %v383
      %449 = vst.msk [vmem:[%s172 + $0x10] sm:$0xf] %vm444, %v384
      %450 = vst.msk [vmem:[%s172 + $0x14] sm:$0xf] %vm444, %v385
      %451 = vst.msk [vmem:[%s172 + $0x18] sm:$0xf] %vm444, %v386
      %452 = vst.msk [vmem:[%s172 + $0x1c] sm:$0xf] %vm444, %v387
      %453 = vst.msk [vmem:[%s172 + $0x20] sm:$0xf] %vm444, %v388
      %454 = vst.msk [vmem:[%s172 + $0x24] sm:$0xf] %vm444, %v389
      %455 = vst.msk [vmem:[%s172 + $0x28] sm:$0xf] %vm444, %v390
      %456 = vst.msk [vmem:[%s172 + $0x2c] sm:$0xf] %vm444, %v391
      %457 = vst.msk [vmem:[%s172 + $0x30] sm:$0xf] %vm444, %v392
      %458 = vst.msk [vmem:[%s172 + $0x34] sm:$0xf] %vm444, %v393
      %459 = vst.msk [vmem:[%s172 + $0x38] sm:$0xf] %vm444, %v394
      %460 = vst.msk [vmem:[%s172 + $0x3c] sm:$0xf] %vm444, %v395
      %461 = vst.msk [vmem:[%s172 + $0x40] sm:$0xf] %vm444, %v396
      %462 = vst.msk [vmem:[%s172 + $0x44] sm:$0xf] %vm444, %v397
      %463 = vst.msk [vmem:[%s172 + $0x48] sm:$0xf] %vm444, %v398
      %464 = vst.msk [vmem:[%s172 + $0x4c] sm:$0xf] %vm444, %v399
      %465 = vst.msk [vmem:[%s172 + $0x50] sm:$0xf] %vm444, %v400
      %466 = vst.msk [vmem:[%s172 + $0x54] sm:$0xf] %vm444, %v401
      %467 = vst.msk [vmem:[%s172 + $0x58] sm:$0xf] %vm444, %v402
      %468 = vst.msk [vmem:[%s172 + $0x5c] sm:$0xf] %vm444, %v403
      %469 = vst.msk [vmem:[%s172 + $0x60] sm:$0xf] %vm444, %v404
      %470 = vst.msk [vmem:[%s172 + $0x64] sm:$0xf] %vm444, %v405
      %471 = vst.msk [vmem:[%s172 + $0x68] sm:$0xf] %vm444, %v406
      %472 = vst.msk [vmem:[%s172 + $0x6c] sm:$0xf] %vm444, %v407
      %473 = vst.msk [vmem:[%s172 + $0x70] sm:$0xf] %vm444, %v408
      %474 = vst.msk [vmem:[%s172 + $0x74] sm:$0xf] %vm444, %v409
      %475 = vst.msk [vmem:[%s172 + $0x78] sm:$0xf] %vm444, %v410
      %476 = vst.msk [vmem:[%s172 + $0x7c] sm:$0xf] %vm444, %v411
      %s477 = smul.u32 32, %s14
      %p478 = scmp.lt.s32.totalorder %s477, 63
      %s479 = scalar_select %p478, %s477, 63
      %s480 = smul.addr %s479, 4
      %s481 = scalar_lea.vmem %s3, %s480
      // Predicated region
      $region33: #{dncnn_forward.8} parent=31 // pred_check
        %p482 = pneg %p100
      $region34: #{dncnn_forward.8} parent=31 // pred_check_branch
        %484 = sbr.rel (%p482) target = $region36
      $region35: #{dncnn_forward.8} parent=31 // pred_region
        %s485 = smul.u32 32, %s14
      $region36: #{dncnn_forward.8} parent=31 // pred_fallthru
        _
    $region32: #{dncnn_forward.8} parent=5 // pred_fallthru
      _
    %p486 = scmp.le.s32.totalorder 2, %s9
    // Predicated region
    $region37: #{dncnn_forward.8} parent=5 // pred_check
      %p487 = pneg %p486
    $region38: #{dncnn_forward.8} parent=5 // pred_check_branch
      %489 = sbr.rel (%p487) target = $region40
    $region39: #{dncnn_forward.8} parent=5 // pred_region
      %s490 = ssub.s32 %s9, 2
      // Predicated region
      $region41: #{dncnn_forward.8} parent=39 // pred_check
        %p491 = pneg %p106
      $region42: #{dncnn_forward.8} parent=39 // pred_check_branch
        %493 = sbr.rel (%p491) target = $region44
      $region43: #{dncnn_forward.8} parent=39 // pred_region
        %s494 = smul.u32 32, %s15
        %p495 = scmp.lt.s32.totalorder %s494, 63
        %s496 = scalar_select %p495, %s494, 63
        %s497 = smul.addr %s496, 4
        %s498 = scalar_lea.vmem %s3, %s497
      $region44: #{dncnn_forward.8} parent=39 // pred_fallthru
        _
    $region40: #{dncnn_forward.8} parent=5 // pred_fallthru
      _
  $region6: #{dncnn_forward.8} parent=0 // loop_footer
    %s13 = sadd.s32 1, %s9
  $region7: #{dncnn_forward.8} parent=0 // loop_footer_branch
    %8 = sbr.rel target = $region3
  $region8: #{dncnn_forward.8} parent=0 // loop_exit
    _

// kernel: dncnn_forward.7
$region0: #{dncnn_forward.7}
  #allocation0 [shape = 'u32[]', space=smem, size = 0x4, offset = 0x4, fixed_abs, tag = 'smem constant byte address 0x4 - core index']
  #allocation1 [shape = 'u32[144,128]{1,0:T(1,128)}', space=vmem, size = 0x12000, scoped, tag = 'internal scratch']
  %s0 = inlined_call_operand.vmem [shape: bf16[512,576], index: 0, kind: input, shape index: {}]
  %s1 = inlined_call_operand.vmem [shape: bf16[576,64], index: 1, kind: input, shape index: {}]
  %s2 = inlined_call_operand.vmem [shape: f32[1,64], index: 2, kind: input, shape index: {}]
  %s3 = inlined_call_operand.vmem [shape: f32[512,64], index: 3, kind: output, shape index: {0}]
  %s4 = inlined_call_operand.vmem [shape: f32[2,8,64], index: 4, kind: output, shape index: {1}]
  %s5 = inlined_call_operand.vmem [shape: f32[2,8,64], index: 5, kind: output, shape index: {2}]
  %6 = xla_tuple %s3, %s4, %s5
  %s7 = sld [smem:[#allocation0]]
  $region61: #{dncnn_forward.7} parent=0
    _
  %s9 = ssub.s32 1, %s7
  %s10 = scalar_select 0, %s9, %s7
  loop: start=0, step=1, limit=4
  $region2: #{dncnn_forward.7} parent=0 // loop_pre_header
    _
  $region3: #{dncnn_forward.7} parent=0 // loop_header
    %s12 = sphi 0, %s16
    %p13 = scmp.ge.s32.totalorder %s12, 4
    %s22 = sphi 0, %s24
    %s25 = sphi 0, %s22
    %s26 = sphi 0, %s25
    %s42 = sphi 0, %s26
    %s46 = sphi 0, %s46
    %s48 = sphi 0, %s46
    %s49 = sphi 0, %s48
    %s63 = sphi 0, %s49
    %s67 = sphi 0, %s67
    %s69 = sphi 0, %s67
    %s70 = sphi 0, %s69
    %s84 = sphi 0, %s70
    %s90 = sphi 0, %s92
    %s93 = sphi 0, %s90
    %s94 = sphi 0, %s93
    %s110 = sphi 0, %s94
    %s116 = sphi 0, %s118
    %s119 = sphi 0, %s116
    %s120 = sphi 0, %s119
    %s136 = sphi 0, %s120
    %s142 = sphi 0, %s144
    %s145 = sphi 0, %s142
    %s146 = sphi 0, %s145
    %s162 = sphi 0, %s146
  $region4: #{dncnn_forward.7} parent=0 // loop_header_branch
    %15 = sbr.rel (%p13) target = $region8
  $region5: #{dncnn_forward.7} parent=0 // loop_body
    %s17 = ssub.s32 %s12, 1
    %s18 = ssub.s32 %s12, 2
    %s19 = sadd.s32 %s12, 1
    %s20 = ssub.s32 %s12, %s19
    %p21 = scmp.eq.s32.totalorder %s20, 0
    %s23 = sadd.s32 %s22, 1
    %s24 = scalar_select %p21, %s22, %s23
    %p27 = pneg %p21
    %p28 = scmp.eq.s32.totalorder %s12, 1
    %p29 = por %p27, %p28
    %p30 = scmp.ne.s32.totalorder %s22, %s25
    %p31 = scmp.eq.s32.totalorder %s12, 0
    %p32 = por %p30, %p31
    %p33 = scmp.ne.s32.totalorder %s22, %s25
    %p34 = scmp.eq.s32.totalorder %s17, 1
    %p35 = por %p33, %p34
    %p36 = scmp.ne.s32.totalorder %s25, %s26
    %p37 = scmp.eq.s32.totalorder %s17, 0
    %p38 = por %p36, %p37
    %p39 = scmp.ne.s32.totalorder %s25, %s26
    %p40 = scmp.eq.s32.totalorder %s18, 1
    %p41 = por %p39, %p40
    %p43 = scmp.ne.s32.totalorder %s26, %s42
    %p44 = scmp.eq.s32.totalorder %s18, 0
    %p45 = por %p43, %p44
    %s47 = sadd.s32 %s46, 1
    %p50 = scmp.eq.s32.totalorder %s12, 1
    %p51 = scmp.ne.s32.totalorder %s46, %s48
    %p52 = scmp.eq.s32.totalorder %s12, 0
    %p53 = por %p51, %p52
    %p54 = scmp.ne.s32.totalorder %s46, %s48
    %p55 = scmp.eq.s32.totalorder %s17, 1
    %p56 = por %p54, %p55
    %p57 = scmp.ne.s32.totalorder %s48, %s49
    %p58 = scmp.eq.s32.totalorder %s17, 0
    %p59 = por %p57, %p58
    %p60 = scmp.ne.s32.totalorder %s48, %s49
    %p61 = scmp.eq.s32.totalorder %s18, 1
    %p62 = por %p60, %p61
    %p64 = scmp.ne.s32.totalorder %s49, %s63
    %p65 = scmp.eq.s32.totalorder %s18, 0
    %p66 = por %p64, %p65
    %s68 = sadd.s32 %s67, 1
    %p71 = scmp.eq.s32.totalorder %s12, 1
    %p72 = scmp.ne.s32.totalorder %s67, %s69
    %p73 = scmp.eq.s32.totalorder %s12, 0
    %p74 = por %p72, %p73
    %p75 = scmp.ne.s32.totalorder %s67, %s69
    %p76 = scmp.eq.s32.totalorder %s17, 1
    %p77 = por %p75, %p76
    %p78 = scmp.ne.s32.totalorder %s69, %s70
    %p79 = scmp.eq.s32.totalorder %s17, 0
    %p80 = por %p78, %p79
    %p81 = scmp.ne.s32.totalorder %s69, %s70
    %p82 = scmp.eq.s32.totalorder %s18, 1
    %p83 = por %p81, %p82
    %p85 = scmp.ne.s32.totalorder %s70, %s84
    %p86 = scmp.eq.s32.totalorder %s18, 0
    %p87 = por %p85, %p86
    %s88 = ssub.s32 %s12, %s19
    %p89 = scmp.eq.s32.totalorder %s88, 0
    %s91 = sadd.s32 %s90, 1
    %s92 = scalar_select %p89, %s90, %s91
    %p95 = pneg %p89
    %p96 = scmp.eq.s32.totalorder %s12, 1
    %p97 = por %p95, %p96
    %p98 = scmp.ne.s32.totalorder %s90, %s93
    %p99 = scmp.eq.s32.totalorder %s12, 0
    %p100 = por %p98, %p99
    %p101 = scmp.ne.s32.totalorder %s90, %s93
    %p102 = scmp.eq.s32.totalorder %s17, 1
    %p103 = por %p101, %p102
    %p104 = scmp.ne.s32.totalorder %s93, %s94
    %p105 = scmp.eq.s32.totalorder %s17, 0
    %p106 = por %p104, %p105
    %p107 = scmp.ne.s32.totalorder %s93, %s94
    %p108 = scmp.eq.s32.totalorder %s18, 1
    %p109 = por %p107, %p108
    %p111 = scmp.ne.s32.totalorder %s94, %s110
    %p112 = scmp.eq.s32.totalorder %s18, 0
    %p113 = por %p111, %p112
    %s114 = ssub.s32 %s12, %s19
    %p115 = scmp.eq.s32.totalorder %s114, 0
    %s117 = sadd.s32 %s116, 1
    %s118 = scalar_select %p115, %s116, %s117
    %p121 = pneg %p115
    %p122 = scmp.eq.s32.totalorder %s12, 1
    %p123 = por %p121, %p122
    %p124 = scmp.ne.s32.totalorder %s116, %s119
    %p125 = scmp.eq.s32.totalorder %s12, 0
    %p126 = por %p124, %p125
    %p127 = scmp.ne.s32.totalorder %s116, %s119
    %p128 = scmp.eq.s32.totalorder %s17, 1
    %p129 = por %p127, %p128
    %p130 = scmp.ne.s32.totalorder %s119, %s120
    %p131 = scmp.eq.s32.totalorder %s17, 0
    %p132 = por %p130, %p131
    %p133 = scmp.ne.s32.totalorder %s119, %s120
    %p134 = scmp.eq.s32.totalorder %s18, 1
    %p135 = por %p133, %p134
    %p137 = scmp.ne.s32.totalorder %s120, %s136
    %p138 = scmp.eq.s32.totalorder %s18, 0
    %p139 = por %p137, %p138
    %s140 = ssub.s32 %s12, %s19
    %p141 = scmp.eq.s32.totalorder %s140, 0
    %s143 = sadd.s32 %s142, 1
    %s144 = scalar_select %p141, %s142, %s143
    %p147 = pneg %p141
    %p148 = scmp.eq.s32.totalorder %s12, 1
    %p149 = por %p147, %p148
    %p150 = scmp.ne.s32.totalorder %s142, %s145
    %p151 = scmp.eq.s32.totalorder %s12, 0
    %p152 = por %p150, %p151
    %p153 = scmp.ne.s32.totalorder %s142, %s145
    %p154 = scmp.eq.s32.totalorder %s17, 1
    %p155 = por %p153, %p154
    %p156 = scmp.ne.s32.totalorder %s145, %s146
    %p157 = scmp.eq.s32.totalorder %s17, 0
    %p158 = por %p156, %p157
    %p159 = scmp.ne.s32.totalorder %s145, %s146
    %p160 = scmp.eq.s32.totalorder %s18, 1
    %p161 = por %p159, %p160
    %p163 = scmp.ne.s32.totalorder %s146, %s162
    %p164 = scmp.eq.s32.totalorder %s18, 0
    %p165 = por %p163, %p164
    %p166 = scmp.le.s32.totalorder 1, %s12
    %p167 = scmp.lt.s32.totalorder %s12, 3
    %p168 = pnand %p166, %p167
    %p169 = pneg %p168
    // Predicated region
    $region9: #{dncnn_forward.7} parent=5 // pred_check
      _
    $region10: #{dncnn_forward.7} parent=5 // pred_check_branch
      %171 = sbr.rel (%p168) target = $region12
    $region11: #{dncnn_forward.7} parent=5 // pred_region
      %s172 = ssub.s32 %s12, 1
      // Predicated region
      $region13: #{dncnn_forward.7} parent=11 // pred_check
        %p173 = pneg %p59
      $region14: #{dncnn_forward.7} parent=11 // pred_check_branch
        %175 = sbr.rel (%p173) target = $region16
      $region15: #{dncnn_forward.7} parent=11 // pred_region
        _
      $region16: #{dncnn_forward.7} parent=11 // pred_fallthru
        _
      // Predicated region
      $region17: #{dncnn_forward.7} parent=11 // pred_check
        %p176 = pneg %p80
      $region18: #{dncnn_forward.7} parent=11 // pred_check_branch
        %178 = sbr.rel (%p176) target = $region20
      $region19: #{dncnn_forward.7} parent=11 // pred_region
        _
      $region20: #{dncnn_forward.7} parent=11 // pred_fallthru
        _
    $region12: #{dncnn_forward.7} parent=5 // pred_fallthru
      _
    %p179 = scmp.lt.s32.totalorder %s12, 2
    // Predicated region
    $region21: #{dncnn_forward.7} parent=5 // pred_check
      %p180 = pneg %p179
    $region22: #{dncnn_forward.7} parent=5 // pred_check_branch
      %182 = sbr.rel (%p180) target = $region24
    $region23: #{dncnn_forward.7} parent=5 // pred_region
      // Predicated region
      $region25: #{dncnn_forward.7} parent=23 // pred_check
        %p183 = pneg %p32
      $region26: #{dncnn_forward.7} parent=23 // pred_check_branch
        %185 = sbr.rel (%p183) target = $region28
      $region27: #{dncnn_forward.7} parent=23 // pred_region
        %s186 = smul.u32 32, %s12
        %p187 = scmp.lt.s32.totalorder %s186, 63
        %s188 = scalar_select %p187, %s186, 63
        %s189 = smul.addr %s188, 5
        %s190 = smul.addr %s189, 4
        %s191 = scalar_lea.vmem %s0, %s190
        %s192 = smul.u32 32, %s12
      $region28: #{dncnn_forward.7} parent=23 // pred_fallthru
        _
    $region24: #{dncnn_forward.7} parent=5 // pred_fallthru
      _
    %p193 = scmp.le.s32.totalorder 1, %s12
    %p194 = scmp.lt.s32.totalorder %s12, 3
    %p195 = pnand %p193, %p194
    %p196 = pneg %p195
    // Predicated region
    $region29: #{dncnn_forward.7} parent=5 // pred_check
      _
    $region30: #{dncnn_forward.7} parent=5 // pred_check_branch
      %198 = sbr.rel (%p195) target = $region32
    $region31: #{dncnn_forward.7} parent=5 // pred_region
      %s199 = ssub.s32 %s12, 1
      %s200 = smul.u32 32, %s17
      %p201 = scmp.lt.s32.totalorder %s200, 63
      %s202 = scalar_select %p201, %s200, 63
      %s203 = smul.addr %s202, 5
      %s204 = smul.addr %s203, 4
      %s205 = scalar_lea.vmem %s0, %s204
      %p206 = pneg %p38
      %p207 = pneg %p35
      %p208 = pneg %p59
      %p209 = pneg %p56
      %p210 = pneg %p80
      %p211 = pneg %p77
      %p212 = pneg %p106
      %p213 = pneg %p103
      %s214 = smul.u32 32, %s17
      %p215 = scmp.lt.s32.totalorder %s214, 63
      %s216 = scalar_select %p215, %s214, 63
      %s217 = smul.addr %s216, 8
      %s218 = scalar_lea.vmem %s3, %s217
      %p219 = pneg %p132
      %p220 = pneg %p129
      %p221 = scmp.lt.s32.totalorder %s17, 1
      %s222 = scalar_select %p221, %s17, 1
      %s223 = smul.addr %s222, 8
      %s224 = scalar_lea.vmem %s4, %s223
      %p225 = pneg %p158
      %p226 = pneg %p155
      %p227 = scmp.lt.s32.totalorder %s17, 1
      %s228 = scalar_select %p227, %s17, 1
      %s229 = smul.addr %s228, 8
      %s230 = scalar_lea.vmem %s5, %s229
      %s231 = smul.u32 32, %s17
      %p232 = scmp.lt.s32.totalorder %s231, 63
      %s233 = scalar_select %p232, %s231, 63
      %s234 = smul.addr %s233, 5
      %s235 = smul.addr %s234, 4
      %s236 = scalar_lea.vmem %s0, %s235
      %s237 = smul.u32 32, %s17
      %s238 = smul.u32 32, %s17
      %p239 = scmp.lt.s32.totalorder %s238, 63
      %s240 = scalar_select %p239, %s238, 63
      %s241 = smul.addr %s240, 8
      %s242 = scalar_lea.vmem %s3, %s241
      %s243 = smul.u32 32, %s17
      %p244 = scmp.lt.s32.totalorder %s17, 1
      %s245 = scalar_select %p244, %s17, 1
      %s246 = smul.addr %s245, 8
      %s247 = scalar_lea.vmem %s4, %s246
      %p248 = scmp.lt.s32.totalorder %s17, 1
      %s249 = scalar_select %p248, %s17, 1
      %s250 = smul.addr %s249, 8
      %s251 = scalar_lea.vmem %s5, %s250
      %v253 = vld [vmem:[%s236] sm:$0xff]
      %v254 = vld [vmem:[%s236 + $0x8] sm:$0xff]
      %v255 = vld [vmem:[%s236 + $0x10] sm:$0xf]
      %v256 = vld [vmem:[%s236 + $0x14] sm:$0xff]
      %v257 = vld [vmem:[%s236 + $0x1c] sm:$0xff]
      %v258 = vld [vmem:[%s236 + $0x24] sm:$0xf]
      %v259 = vld [vmem:[%s236 + $0x28] sm:$0xff]
      %v260 = vld [vmem:[%s236 + $0x30] sm:$0xff]
      %v261 = vld [vmem:[%s236 + $0x38] sm:$0xf]
      %v262 = vld [vmem:[%s236 + $0x3c] sm:$0xff]
      %v263 = vld [vmem:[%s236 + $0x44] sm:$0xff]
      %v264 = vld [vmem:[%s236 + $0x4c] sm:$0xf]
      %v265 = vld [vmem:[%s236 + $0x50] sm:$0xff]
      %v266 = vld [vmem:[%s236 + $0x58] sm:$0xff]
      %v267 = vld [vmem:[%s236 + $0x60] sm:$0xf]
      %v268 = vld [vmem:[%s236 + $0x64] sm:$0xff]
      %v269 = vld [vmem:[%s236 + $0x6c] sm:$0xff]
      %v270 = vld [vmem:[%s236 + $0x74] sm:$0xf]
      %v271 = vld [vmem:[%s236 + $0x78] sm:$0xff]
      %v272 = vld [vmem:[%s236 + $0x80] sm:$0xff]
      %v273 = vld [vmem:[%s236 + $0x88] sm:$0xf]
      %v274 = vld [vmem:[%s236 + $0x8c] sm:$0xff]
      %v275 = vld [vmem:[%s236 + $0x94] sm:$0xff]
      %v276 = vld [vmem:[%s236 + $0x9c] sm:$0xf]
      %v277 = vld [vmem:[%s236 + $0xa0] sm:$0xff]
      %v278 = vld [vmem:[%s236 + $0xa8] sm:$0xff]
      %v279 = vld [vmem:[%s236 + $0xb0] sm:$0xf]
      %v280 = vld [vmem:[%s236 + $0xb4] sm:$0xff]
      %v281 = vld [vmem:[%s236 + $0xbc] sm:$0xff]
      %v282 = vld [vmem:[%s236 + $0xc4] sm:$0xf]
      %v283 = vld [vmem:[%s236 + $0xc8] sm:$0xff]
      %v284 = vld [vmem:[%s236 + $0xd0] sm:$0xff]
      %v285 = vld [vmem:[%s236 + $0xd8] sm:$0xf]
      %v286 = vld [vmem:[%s236 + $0xdc] sm:$0xff]
      %v287 = vld [vmem:[%s236 + $0xe4] sm:$0xff]
      %v288 = vld [vmem:[%s236 + $0xec] sm:$0xf]
      %v289 = vld [vmem:[%s236 + $0xf0] sm:$0xff]
      %v290 = vld [vmem:[%s236 + $0xf8] sm:$0xff]
      %v291 = vld [vmem:[%s236 + $0x100] sm:$0xf]
      %v292 = vld [vmem:[%s236 + $0x104] sm:$0xff]
      %v293 = vld [vmem:[%s236 + $0x10c] sm:$0xff]
      %v294 = vld [vmem:[%s236 + $0x114] sm:$0xf]
      %v295 = vld [vmem:[%s236 + $0x118] sm:$0xff]
      %v296 = vld [vmem:[%s236 + $0x120] sm:$0xff]
      %v297 = vld [vmem:[%s236 + $0x128] sm:$0xf]
      %v298 = vld [vmem:[%s236 + $0x12c] sm:$0xff]
      %v299 = vld [vmem:[%s236 + $0x134] sm:$0xff]
      %v300 = vld [vmem:[%s236 + $0x13c] sm:$0xf]
      %v301 = vld [vmem:[%s236 + $0x140] sm:$0xff]
      %v302 = vld [vmem:[%s236 + $0x148] sm:$0xff]
      %v303 = vld [vmem:[%s236 + $0x150] sm:$0xf]
      %v304 = vld [vmem:[%s236 + $0x154] sm:$0xff]
      %v305 = vld [vmem:[%s236 + $0x15c] sm:$0xff]
      %v306 = vld [vmem:[%s236 + $0x164] sm:$0xf]
      %v307 = vld [vmem:[%s236 + $0x168] sm:$0xff]
      %v308 = vld [vmem:[%s236 + $0x170] sm:$0xff]
      %v309 = vld [vmem:[%s236 + $0x178] sm:$0xf]
      %v310 = vld [vmem:[%s236 + $0x17c] sm:$0xff]
      %v311 = vld [vmem:[%s236 + $0x184] sm:$0xff]
      %v312 = vld [vmem:[%s236 + $0x18c] sm:$0xf]
      %v313 = vld [vmem:[%s236 + $0x190] sm:$0xff]
      %v314 = vld [vmem:[%s236 + $0x198] sm:$0xff]
      %v315 = vld [vmem:[%s236 + $0x1a0] sm:$0xf]
      %v316 = vld [vmem:[%s236 + $0x1a4] sm:$0xff]
      %v317 = vld [vmem:[%s236 + $0x1ac] sm:$0xff]
      %v318 = vld [vmem:[%s236 + $0x1b4] sm:$0xf]
      %v319 = vld [vmem:[%s236 + $0x1b8] sm:$0xff]
      %v320 = vld [vmem:[%s236 + $0x1c0] sm:$0xff]
      %v321 = vld [vmem:[%s236 + $0x1c8] sm:$0xf]
      %v322 = vld [vmem:[%s236 + $0x1cc] sm:$0xff]
      %v323 = vld [vmem:[%s236 + $0x1d4] sm:$0xff]
      %v324 = vld [vmem:[%s236 + $0x1dc] sm:$0xf]
      %v325 = vld [vmem:[%s236 + $0x1e0] sm:$0xff]
      %v326 = vld [vmem:[%s236 + $0x1e8] sm:$0xff]
      %v327 = vld [vmem:[%s236 + $0x1f0] sm:$0xf]
      %v328 = vld [vmem:[%s236 + $0x1f4] sm:$0xff]
      %v329 = vld [vmem:[%s236 + $0x1fc] sm:$0xff]
      %v330 = vld [vmem:[%s236 + $0x204] sm:$0xf]
      %v331 = vld [vmem:[%s236 + $0x208] sm:$0xff]
      %v332 = vld [vmem:[%s236 + $0x210] sm:$0xff]
      %v333 = vld [vmem:[%s236 + $0x218] sm:$0xf]
      %v334 = vld [vmem:[%s236 + $0x21c] sm:$0xff]
      %v335 = vld [vmem:[%s236 + $0x224] sm:$0xff]
      %v336 = vld [vmem:[%s236 + $0x22c] sm:$0xf]
      %v337 = vld [vmem:[%s236 + $0x230] sm:$0xff]
      %v338 = vld [vmem:[%s236 + $0x238] sm:$0xff]
      %v339 = vld [vmem:[%s236 + $0x240] sm:$0xf]
      %v340 = vld [vmem:[%s236 + $0x244] sm:$0xff]
      %v341 = vld [vmem:[%s236 + $0x24c] sm:$0xff]
      %v342 = vld [vmem:[%s236 + $0x254] sm:$0xf]
      %v343 = vld [vmem:[%s236 + $0x258] sm:$0xff]
      %v344 = vld [vmem:[%s236 + $0x260] sm:$0xff]
      %v345 = vld [vmem:[%s236 + $0x268] sm:$0xf]
      %v346 = vld [vmem:[%s236 + $0x26c] sm:$0xff]
      %v347 = vld [vmem:[%s236 + $0x274] sm:$0xff]
      %v348 = vld [vmem:[%s236 + $0x27c] sm:$0xf]
      %v349 = vld [vmem:[%s1] sm:$0xf]
      %v350 = vld [vmem:[%s1 + $0x4] sm:$0xf]
      %v351 = vld [vmem:[%s1 + $0x8] sm:$0xf]
      %v352 = vld [vmem:[%s1 + $0xc] sm:$0xf]
      %v353 = vld [vmem:[%s1 + $0x10] sm:$0xf]
      %v354 = vld [vmem:[%s1 + $0x14] sm:$0xf]
      %v355 = vld [vmem:[%s1 + $0x18] sm:$0xf]
      %v356 = vld [vmem:[%s1 + $0x1c] sm:$0xf]
      %v357 = vld [vmem:[%s1 + $0x20] sm:$0xf]
      %v358 = vld [vmem:[%s1 + $0x24] sm:$0xf]
      %v359 = vld [vmem:[%s1 + $0x28] sm:$0xf]
      %v360 = vld [vmem:[%s1 + $0x2c] sm:$0xf]
      %v361 = vld [vmem:[%s1 + $0x30] sm:$0xf]
      %v362 = vld [vmem:[%s1 + $0x34] sm:$0xf]
      %v363 = vld [vmem:[%s1 + $0x38] sm:$0xf]
      %v364 = vld [vmem:[%s1 + $0x3c] sm:$0xf]
      %v365 = vld [vmem:[%s1 + $0x40] sm:$0xf]
      %v366 = vld [vmem:[%s1 + $0x44] sm:$0xf]
      %v367 = vld [vmem:[%s1 + $0x48] sm:$0xf]
      %v368 = vld [vmem:[%s1 + $0x4c] sm:$0xf]
      %v369 = vld [vmem:[%s1 + $0x50] sm:$0xf]
      %v370 = vld [vmem:[%s1 + $0x54] sm:$0xf]
      %v371 = vld [vmem:[%s1 + $0x58] sm:$0xf]
      %v372 = vld [vmem:[%s1 + $0x5c] sm:$0xf]
      %v373 = vld [vmem:[%s1 + $0x60] sm:$0xf]
      %v374 = vld [vmem:[%s1 + $0x64] sm:$0xf]
      %v375 = vld [vmem:[%s1 + $0x68] sm:$0xf]
      %v376 = vld [vmem:[%s1 + $0x6c] sm:$0xf]
      %v377 = vld [vmem:[%s1 + $0x70] sm:$0xf]
      %v378 = vld [vmem:[%s1 + $0x74] sm:$0xf]
      %v379 = vld [vmem:[%s1 + $0x78] sm:$0xf]
      %v380 = vld [vmem:[%s1 + $0x7c] sm:$0xf]
      %v381 = vld [vmem:[%s1 + $0x80] sm:$0xf]
      %v382 = vld [vmem:[%s1 + $0x84] sm:$0xf]
      %v383 = vld [vmem:[%s1 + $0x88] sm:$0xf]
      %v384 = vld [vmem:[%s1 + $0x8c] sm:$0xf]
      %v385 = vld [vmem:[%s1 + $0x90] sm:$0xf]
      %v386 = vld [vmem:[%s1 + $0x94] sm:$0xf]
      %v387 = vld [vmem:[%s1 + $0x98] sm:$0xf]
      %v388 = vld [vmem:[%s1 + $0x9c] sm:$0xf]
      %v389 = vld [vmem:[%s1 + $0xa0] sm:$0xf]
      %v390 = vld [vmem:[%s1 + $0xa4] sm:$0xf]
      %v391 = vld [vmem:[%s1 + $0xa8] sm:$0xf]
      %v392 = vld [vmem:[%s1 + $0xac] sm:$0xf]
      %v393 = vld [vmem:[%s1 + $0xb0] sm:$0xf]
      %v394 = vld [vmem:[%s1 + $0xb4] sm:$0xf]
      %v395 = vld [vmem:[%s1 + $0xb8] sm:$0xf]
      %v396 = vld [vmem:[%s1 + $0xbc] sm:$0xf]
      %v397 = vld [vmem:[%s1 + $0xc0] sm:$0xf]
      %v398 = vld [vmem:[%s1 + $0xc4] sm:$0xf]
      %v399 = vld [vmem:[%s1 + $0xc8] sm:$0xf]
      %v400 = vld [vmem:[%s1 + $0xcc] sm:$0xf]
      %v401 = vld [vmem:[%s1 + $0xd0] sm:$0xf]
      %v402 = vld [vmem:[%s1 + $0xd4] sm:$0xf]
      %v403 = vld [vmem:[%s1 + $0xd8] sm:$0xf]
      %v404 = vld [vmem:[%s1 + $0xdc] sm:$0xf]
      %v405 = vld [vmem:[%s1 + $0xe0] sm:$0xf]
      %v406 = vld [vmem:[%s1 + $0xe4] sm:$0xf]
      %v407 = vld [vmem:[%s1 + $0xe8] sm:$0xf]
      %v408 = vld [vmem:[%s1 + $0xec] sm:$0xf]
      %v409 = vld [vmem:[%s1 + $0xf0] sm:$0xf]
      %v410 = vld [vmem:[%s1 + $0xf4] sm:$0xf]
      %v411 = vld [vmem:[%s1 + $0xf8] sm:$0xf]
      %v412 = vld [vmem:[%s1 + $0xfc] sm:$0xf]
      %v413 = vld [vmem:[%s1 + $0x100] sm:$0xf]
      %v414 = vld [vmem:[%s1 + $0x104] sm:$0xf]
      %v415 = vld [vmem:[%s1 + $0x108] sm:$0xf]
      %v416 = vld [vmem:[%s1 + $0x10c] sm:$0xf]
      %v417 = vld [vmem:[%s1 + $0x110] sm:$0xf]
      %v418 = vld [vmem:[%s1 + $0x114] sm:$0xf]
      %v419 = vld [vmem:[%s1 + $0x118] sm:$0xf]
      %v420 = vld [vmem:[%s1 + $0x11c] sm:$0xf]
      %v421 = vld [vmem:[%s2] sm:$0x1]
      %v423 = vlaneseq
      %v424 = vshrl.u32 %v423, 7
      %v425 = vsub.s32 0, %v424
      %v426 = vrot.slane %v421, %v425
      %v524 = vunpack.c.l.b16 %v253
      %v525 = vunpack.c.h.b16 %v253
      %v526 = vunpack.c.l.b16 %v254
      %v527 = vunpack.c.h.b16 %v254
      %v528 = vunpack.c.l.b16 %v255
      %v529 = vunpack.c.l.b16 %v256
      %v530 = vunpack.c.h.b16 %v256
      %v531 = vunpack.c.l.b16 %v257
      %v532 = vunpack.c.h.b16 %v257
      %v533 = vunpack.c.l.b16 %v258
      %v534 = vunpack.c.l.b16 %v259
      %v535 = vunpack.c.h.b16 %v259
      %v536 = vunpack.c.l.b16 %v260
      %v537 = vunpack.c.h.b16 %v260
      %v538 = vunpack.c.l.b16 %v261
      %v539 = vunpack.c.l.b16 %v262
      %v540 = vunpack.c.h.b16 %v262
      %v541 = vunpack.c.l.b16 %v263
      %v542 = vunpack.c.h.b16 %v263
      %v543 = vunpack.c.l.b16 %v264
      %v544 = vunpack.c.l.b16 %v265
      %v545 = vunpack.c.h.b16 %v265
      %v546 = vunpack.c.l.b16 %v266
      %v547 = vunpack.c.h.b16 %v266
      %v548 = vunpack.c.l.b16 %v267
      %v549 = vunpack.c.l.b16 %v268
      %v550 = vunpack.c.h.b16 %v268
      %v551 = vunpack.c.l.b16 %v269
      %v552 = vunpack.c.h.b16 %v269
      %v553 = vunpack.c.l.b16 %v270
      %v554 = vunpack.c.l.b16 %v271
      %v555 = vunpack.c.h.b16 %v271
      %v556 = vunpack.c.l.b16 %v272
      %v557 = vunpack.c.h.b16 %v272
      %v558 = vunpack.c.l.b16 %v273
      %v559 = vunpack.c.l.b16 %v274
      %v560 = vunpack.c.h.b16 %v274
      %v561 = vunpack.c.l.b16 %v275
      %v562 = vunpack.c.h.b16 %v275
      %v563 = vunpack.c.l.b16 %v276
      %v564 = vunpack.c.l.b16 %v277
      %v565 = vunpack.c.h.b16 %v277
      %v566 = vunpack.c.l.b16 %v278
      %v567 = vunpack.c.h.b16 %v278
      %v568 = vunpack.c.l.b16 %v279
      %v569 = vunpack.c.l.b16 %v280
      %v570 = vunpack.c.h.b16 %v280
      %v571 = vunpack.c.l.b16 %v281
      %v572 = vunpack.c.h.b16 %v281
      %v573 = vunpack.c.l.b16 %v282
      %v574 = vunpack.c.l.b16 %v283
      %v575 = vunpack.c.h.b16 %v283
      %v576 = vunpack.c.l.b16 %v284
      %v577 = vunpack.c.h.b16 %v284
      %v578 = vunpack.c.l.b16 %v285
      %v579 = vunpack.c.l.b16 %v286
      %v580 = vunpack.c.h.b16 %v286
      %v581 = vunpack.c.l.b16 %v287
      %v582 = vunpack.c.h.b16 %v287
      %v583 = vunpack.c.l.b16 %v288
      %v584 = vunpack.c.l.b16 %v289
      %v585 = vunpack.c.h.b16 %v289
      %v586 = vunpack.c.l.b16 %v290
      %v587 = vunpack.c.h.b16 %v290
      %v588 = vunpack.c.l.b16 %v291
      %v589 = vunpack.c.l.b16 %v292
      %v590 = vunpack.c.h.b16 %v292
      %v591 = vunpack.c.l.b16 %v293
      %v592 = vunpack.c.h.b16 %v293
      %v593 = vunpack.c.l.b16 %v294
      %v594 = vunpack.c.l.b16 %v295
      %v595 = vunpack.c.h.b16 %v295
      %v596 = vunpack.c.l.b16 %v296
      %v597 = vunpack.c.h.b16 %v296
      %v598 = vunpack.c.l.b16 %v297
      %v599 = vunpack.c.l.b16 %v298
      %v600 = vunpack.c.h.b16 %v298
      %v601 = vunpack.c.l.b16 %v299
      %v602 = vunpack.c.h.b16 %v299
      %v603 = vunpack.c.l.b16 %v300
      %v604 = vunpack.c.l.b16 %v301
      %v605 = vunpack.c.h.b16 %v301
      %v606 = vunpack.c.l.b16 %v302
      %v607 = vunpack.c.h.b16 %v302
      %v608 = vunpack.c.l.b16 %v303
      %v609 = vunpack.c.l.b16 %v304
      %v610 = vunpack.c.h.b16 %v304
      %v611 = vunpack.c.l.b16 %v305
      %v612 = vunpack.c.h.b16 %v305
      %v613 = vunpack.c.l.b16 %v306
      %v614 = vunpack.c.l.b16 %v307
      %v615 = vunpack.c.h.b16 %v307
      %v616 = vunpack.c.l.b16 %v308
      %v617 = vunpack.c.h.b16 %v308
      %v618 = vunpack.c.l.b16 %v309
      %v619 = vunpack.c.l.b16 %v310
      %v620 = vunpack.c.h.b16 %v310
      %v621 = vunpack.c.l.b16 %v311
      %v622 = vunpack.c.h.b16 %v311
      %v623 = vunpack.c.l.b16 %v312
      %v624 = vunpack.c.l.b16 %v313
      %v625 = vunpack.c.h.b16 %v313
      %v626 = vunpack.c.l.b16 %v314
      %v627 = vunpack.c.h.b16 %v314
      %v628 = vunpack.c.l.b16 %v315
      %v629 = vunpack.c.l.b16 %v316
      %v630 = vunpack.c.h.b16 %v316
      %v631 = vunpack.c.l.b16 %v317
      %v632 = vunpack.c.h.b16 %v317
      %v633 = vunpack.c.l.b16 %v318
      %v634 = vunpack.c.l.b16 %v319
      %v635 = vunpack.c.h.b16 %v319
      %v636 = vunpack.c.l.b16 %v320
      %v637 = vunpack.c.h.b16 %v320
      %v638 = vunpack.c.l.b16 %v321
      %v639 = vunpack.c.l.b16 %v322
      %v640 = vunpack.c.h.b16 %v322
      %v641 = vunpack.c.l.b16 %v323
      %v642 = vunpack.c.h.b16 %v323
      %v643 = vunpack.c.l.b16 %v324
      %v644 = vunpack.c.l.b16 %v325
      %v645 = vunpack.c.h.b16 %v325
      %v646 = vunpack.c.l.b16 %v326
      %v647 = vunpack.c.h.b16 %v326
      %v648 = vunpack.c.l.b16 %v327
      %v649 = vunpack.c.l.b16 %v328
      %v650 = vunpack.c.h.b16 %v328
      %v651 = vunpack.c.l.b16 %v329
      %v652 = vunpack.c.h.b16 %v329
      %v653 = vunpack.c.l.b16 %v330
      %v654 = vunpack.c.l.b16 %v331
      %v655 = vunpack.c.h.b16 %v331
      %v656 = vunpack.c.l.b16 %v332
      %v657 = vunpack.c.h.b16 %v332
      %v658 = vunpack.c.l.b16 %v333
      %v659 = vunpack.c.l.b16 %v334
      %v660 = vunpack.c.h.b16 %v334
      %v661 = vunpack.c.l.b16 %v335
      %v662 = vunpack.c.h.b16 %v335
      %v663 = vunpack.c.l.b16 %v336
      %v664 = vunpack.c.l.b16 %v337
      %v665 = vunpack.c.h.b16 %v337
      %v666 = vunpack.c.l.b16 %v338
      %v667 = vunpack.c.h.b16 %v338
      %v668 = vunpack.c.l.b16 %v339
      %v669 = vunpack.c.l.b16 %v340
      %v670 = vunpack.c.h.b16 %v340
      %v671 = vunpack.c.l.b16 %v341
      %v672 = vunpack.c.h.b16 %v341
      %v673 = vunpack.c.l.b16 %v342
      %v674 = vunpack.c.l.b16 %v343
      %v675 = vunpack.c.h.b16 %v343
      %v676 = vunpack.c.l.b16 %v344
      %v677 = vunpack.c.h.b16 %v344
      %v678 = vunpack.c.l.b16 %v345
      %v679 = vunpack.c.l.b16 %v346
      %v680 = vunpack.c.h.b16 %v346
      %v681 = vunpack.c.l.b16 %v347
      %v682 = vunpack.c.h.b16 %v347
      %v683 = vunpack.c.l.b16 %v348
      %v684 = vpack.c.b16 %v529, %v524
      %v685 = vpack.c.b16 %v530, %v525
      %v686 = vpack.c.b16 %v531, %v526
      %v687 = vpack.c.b16 %v532, %v527
      %v688 = vpack.c.b16 %v533, %v528
      %v689 = vpack.c.b16 %v539, %v534
      %v690 = vpack.c.b16 %v540, %v535
      %v691 = vpack.c.b16 %v541, %v536
      %v692 = vpack.c.b16 %v542, %v537
      %v693 = vpack.c.b16 %v543, %v538
      %v694 = vpack.c.b16 %v549, %v544
      %v695 = vpack.c.b16 %v550, %v545
      %v696 = vpack.c.b16 %v551, %v546
      %v697 = vpack.c.b16 %v552, %v547
      %v698 = vpack.c.b16 %v553, %v548
      %v699 = vpack.c.b16 %v559, %v554
      %v700 = vpack.c.b16 %v560, %v555
      %v701 = vpack.c.b16 %v561, %v556
      %v702 = vpack.c.b16 %v562, %v557
      %v703 = vpack.c.b16 %v563, %v558
      %v704 = vpack.c.b16 %v569, %v564
      %v705 = vpack.c.b16 %v570, %v565
      %v706 = vpack.c.b16 %v571, %v566
      %v707 = vpack.c.b16 %v572, %v567
      %v708 = vpack.c.b16 %v573, %v568
      %v709 = vpack.c.b16 %v579, %v574
      %v710 = vpack.c.b16 %v580, %v575
      %v711 = vpack.c.b16 %v581, %v576
      %v712 = vpack.c.b16 %v582, %v577
      %v713 = vpack.c.b16 %v583, %v578
      %v714 = vpack.c.b16 %v589, %v584
      %v715 = vpack.c.b16 %v590, %v585
      %v716 = vpack.c.b16 %v591, %v586
      %v717 = vpack.c.b16 %v592, %v587
      %v718 = vpack.c.b16 %v593, %v588
      %v719 = vpack.c.b16 %v599, %v594
      %v720 = vpack.c.b16 %v600, %v595
      %v721 = vpack.c.b16 %v601, %v596
      %v722 = vpack.c.b16 %v602, %v597
      %v723 = vpack.c.b16 %v603, %v598
      %v724 = vpack.c.b16 %v609, %v604
      %v725 = vpack.c.b16 %v610, %v605
      %v726 = vpack.c.b16 %v611, %v606
      %v727 = vpack.c.b16 %v612, %v607
      %v728 = vpack.c.b16 %v613, %v608
      %v729 = vpack.c.b16 %v619, %v614
      %v730 = vpack.c.b16 %v620, %v615
      %v731 = vpack.c.b16 %v621, %v616
      %v732 = vpack.c.b16 %v622, %v617
      %v733 = vpack.c.b16 %v623, %v618
      %v734 = vpack.c.b16 %v629, %v624
      %v735 = vpack.c.b16 %v630, %v625
      %v736 = vpack.c.b16 %v631, %v626
      %v737 = vpack.c.b16 %v632, %v627
      %v738 = vpack.c.b16 %v633, %v628
      %v739 = vpack.c.b16 %v639, %v634
      %v740 = vpack.c.b16 %v640, %v635
      %v741 = vpack.c.b16 %v641, %v636
      %v742 = vpack.c.b16 %v642, %v637
      %v743 = vpack.c.b16 %v643, %v638
      %v744 = vpack.c.b16 %v649, %v644
      %v745 = vpack.c.b16 %v650, %v645
      %v746 = vpack.c.b16 %v651, %v646
      %v747 = vpack.c.b16 %v652, %v647
      %v748 = vpack.c.b16 %v653, %v648
      %v749 = vpack.c.b16 %v659, %v654
      %v750 = vpack.c.b16 %v660, %v655
      %v751 = vpack.c.b16 %v661, %v656
      %v752 = vpack.c.b16 %v662, %v657
      %v753 = vpack.c.b16 %v663, %v658
      %v754 = vpack.c.b16 %v669, %v664
      %v755 = vpack.c.b16 %v670, %v665
      %v756 = vpack.c.b16 %v671, %v666
      %v757 = vpack.c.b16 %v672, %v667
      %v758 = vpack.c.b16 %v673, %v668
      %v759 = vpack.c.b16 %v679, %v674
      %v760 = vpack.c.b16 %v680, %v675
      %v761 = vpack.c.b16 %v681, %v676
      %v762 = vpack.c.b16 %v682, %v677
      %v763 = vpack.c.b16 %v683, %v678
      %v900 = vunpack.c.l.b16 %v349
      %v901 = vunpack.c.l.b16 %v350
      %v902 = vunpack.c.l.b16 %v351
      %v903 = vunpack.c.l.b16 %v352
      %v904 = vunpack.c.l.b16 %v353
      %v905 = vunpack.c.l.b16 %v354
      %v906 = vunpack.c.l.b16 %v355
      %v907 = vunpack.c.l.b16 %v356
      %v908 = vunpack.c.l.b16 %v357
      %v909 = vunpack.c.l.b16 %v358
      %v910 = vunpack.c.l.b16 %v359
      %v911 = vunpack.c.l.b16 %v360
      %v912 = vunpack.c.l.b16 %v361
      %v913 = vunpack.c.l.b16 %v362
      %v914 = vunpack.c.l.b16 %v363
      %v915 = vunpack.c.l.b16 %v364
      %v916 = vunpack.c.l.b16 %v365
      %v917 = vunpack.c.l.b16 %v366
      %v918 = vunpack.c.l.b16 %v367
      %v919 = vunpack.c.l.b16 %v368
      %v920 = vunpack.c.l.b16 %v369
      %v921 = vunpack.c.l.b16 %v370
      %v922 = vunpack.c.l.b16 %v371
      %v923 = vunpack.c.l.b16 %v372
      %v924 = vunpack.c.l.b16 %v373
      %v925 = vunpack.c.l.b16 %v374
      %v926 = vunpack.c.l.b16 %v375
      %v927 = vunpack.c.l.b16 %v376
      %v928 = vunpack.c.l.b16 %v377
      %v929 = vunpack.c.l.b16 %v378
      %v930 = vunpack.c.l.b16 %v379
      %v931 = vunpack.c.l.b16 %v380
      %v932 = vunpack.c.l.b16 %v381
      %v933 = vunpack.c.l.b16 %v382
      %v934 = vunpack.c.l.b16 %v383
      %v935 = vunpack.c.l.b16 %v384
      %v936 = vunpack.c.l.b16 %v385
      %v937 = vunpack.c.l.b16 %v386
      %v938 = vunpack.c.l.b16 %v387
      %v939 = vunpack.c.l.b16 %v388
      %v940 = vunpack.c.l.b16 %v389
      %v941 = vunpack.c.l.b16 %v390
      %v942 = vunpack.c.l.b16 %v391
      %v943 = vunpack.c.l.b16 %v392
      %v944 = vunpack.c.l.b16 %v393
      %v945 = vunpack.c.l.b16 %v394
      %v946 = vunpack.c.l.b16 %v395
      %v947 = vunpack.c.l.b16 %v396
      %v948 = vunpack.c.l.b16 %v397
      %v949 = vunpack.c.l.b16 %v398
      %v950 = vunpack.c.l.b16 %v399
      %v951 = vunpack.c.l.b16 %v400
      %v952 = vunpack.c.l.b16 %v401
      %v953 = vunpack.c.l.b16 %v402
      %v954 = vunpack.c.l.b16 %v403
      %v955 = vunpack.c.l.b16 %v404
      %v956 = vunpack.c.l.b16 %v405
      %v957 = vunpack.c.l.b16 %v406
      %v958 = vunpack.c.l.b16 %v407
      %v959 = vunpack.c.l.b16 %v408
      %v960 = vunpack.c.l.b16 %v409
      %v961 = vunpack.c.l.b16 %v410
      %v962 = vunpack.c.l.b16 %v411
      %v963 = vunpack.c.l.b16 %v412
      %v964 = vunpack.c.l.b16 %v413
      %v965 = vunpack.c.l.b16 %v414
      %v966 = vunpack.c.l.b16 %v415
      %v967 = vunpack.c.l.b16 %v416
      %v968 = vunpack.c.l.b16 %v417
      %v969 = vunpack.c.l.b16 %v418
      %v970 = vunpack.c.l.b16 %v419
      %v971 = vunpack.c.l.b16 %v420
      %v972 = vpack.c.b16 %v901, %v900
      %v973 = vpack.c.b16 %v903, %v902
      %v974 = vpack.c.b16 %v905, %v904
      %v975 = vpack.c.b16 %v907, %v906
      %v976 = vpack.c.b16 %v909, %v908
      %v977 = vpack.c.b16 %v911, %v910
      %v978 = vpack.c.b16 %v913, %v912
      %v979 = vpack.c.b16 %v915, %v914
      %v980 = vpack.c.b16 %v917, %v916
      %v981 = vpack.c.b16 %v919, %v918
      %v982 = vpack.c.b16 %v921, %v920
      %v983 = vpack.c.b16 %v923, %v922
      %v984 = vpack.c.b16 %v925, %v924
      %v985 = vpack.c.b16 %v927, %v926
      %v986 = vpack.c.b16 %v929, %v928
      %v987 = vpack.c.b16 %v931, %v930
      %v988 = vpack.c.b16 %v933, %v932
      %v989 = vpack.c.b16 %v935, %v934
      %v990 = vpack.c.b16 %v937, %v936
      %v991 = vpack.c.b16 %v939, %v938
      %v992 = vpack.c.b16 %v941, %v940
      %v993 = vpack.c.b16 %v943, %v942
      %v994 = vpack.c.b16 %v945, %v944
      %v995 = vpack.c.b16 %v947, %v946
      %v996 = vpack.c.b16 %v949, %v948
      %v997 = vpack.c.b16 %v951, %v950
      %v998 = vpack.c.b16 %v953, %v952
      %v999 = vpack.c.b16 %v955, %v954
      %v1000 = vpack.c.b16 %v957, %v956
      %v1001 = vpack.c.b16 %v959, %v958
      %v1002 = vpack.c.b16 %v961, %v960
      %v1003 = vpack.c.b16 %v963, %v962
      %v1004 = vpack.c.b16 %v965, %v964
      %v1005 = vpack.c.b16 %v967, %v966
      %v1006 = vpack.c.b16 %v969, %v968
      %v1007 = vpack.c.b16 %v971, %v970
      %vm1044 = vcmask 523264
      %v1046 = vsel %vm1044, %v688, 0
      %v1049 = vsel %vm1044, %v693, 0
      %v1052 = vsel %vm1044, %v698, 0
      %v1055 = vsel %vm1044, %v703, 0
      %v1058 = vsel %vm1044, %v708, 0
      %v1061 = vsel %vm1044, %v713, 0
      %v1064 = vsel %vm1044, %v718, 0
      %v1067 = vsel %vm1044, %v723, 0
      %v1070 = vsel %vm1044, %v728, 0
      %v1073 = vsel %vm1044, %v733, 0
      %v1076 = vsel %vm1044, %v738, 0
      %v1079 = vsel %vm1044, %v743, 0
      %v1082 = vsel %vm1044, %v748, 0
      %v1085 = vsel %vm1044, %v753, 0
      %v1088 = vsel %vm1044, %v758, 0
      %v1091 = vsel %vm1044, %v763, 0
      %1093 = vmatprep.subr.bf16.mxu0 0
      %1094 = vmatpush1.bf16.msra.mxu0 %v972
      %1095 = vmatprep.subr.bf16.mxu0 0
      %1096 = vmatpush1.bf16.msra.mxu0 %v973
      %1097 = vmatprep.subr.bf16.mxu0 0
      %1098 = vmatpush1.bf16.msra.mxu0 %v974
      %1099 = vmatprep.subr.bf16.mxu0 0
      %1100 = vmatpush1.bf16.msra.mxu0 %v975
      %1101 = vmatprep.subr.bf16.mxu0 0
      %1102 = vmatpush1.bf16.msra.mxu0 %v976
      %1103 = vmatprep.subr.bf16.mxu0 0
      %1104 = vmatpush1.bf16.msra.mxu0 %v977
      %1105 = vmatprep.subr.bf16.mxu0 0
      %1106 = vmatpush1.bf16.msra.mxu0 %v978
      %1107 = vmatprep.subr.bf16.mxu0 0
      %1108 = vmatpush1.bf16.msra.mxu0 %v979
      %1109 = vmatprep.subr.bf16.mxu0 0
      %1110 = vmatpush1.bf16.msra.mxu0 %v980
      %1111 = vmatprep.subr.bf16.mxu0 0
      %1112 = vmatpush1.bf16.msra.mxu0 %v981
      %1113 = vmatprep.subr.bf16.mxu0 0
      %1114 = vmatpush1.bf16.msra.mxu0 %v982
      %1115 = vmatprep.subr.bf16.mxu0 0
      %1116 = vmatpush1.bf16.msra.mxu0 %v983
      %1117 = vmatprep.subr.bf16.mxu0 0
      %1118 = vmatpush1.bf16.msra.mxu0 %v984
      %1119 = vmatprep.subr.bf16.mxu0 0
      %1120 = vmatpush1.bf16.msra.mxu0 %v985
      %1121 = vmatprep.subr.bf16.mxu0 0
      %1122 = vmatpush1.bf16.msra.mxu0 %v986
      %1123 = vmatprep.subr.bf16.mxu0 0
      %1124 = vmatpush1.bf16.msra.mxu0 %v987
      %1125 = vmatprep.mubr.bf16.mxu0 %v685
      %1126 = vmatmul.mubr.bf16.gmra.mrb[0].mxu0 %v684
      %v1127 = vpop.f32.mrb[0].mxu0
      %v1128 = vadd.f32 %v426, %v1127
      %v1129 = vpop.f32.mrb[0].mxu0
      %v1130 = vpop.f32.mrb[0].mxu0
      %v1131 = vadd.f32 %v426, %v1130
      %v1132 = vpop.f32.mrb[0].mxu0
      %1133 = vmatprep.mubr.bf16.mxu0 %v690
      %1134 = vmatmul.mubr.bf16.gmra.mrb[0].mxu0 %v689
      %v1135 = vpop.f32.mrb[0].mxu0
      %v1136 = vadd.f32 %v426, %v1135
      %v1137 = vpop.f32.mrb[0].mxu0
      %v1138 = vpop.f32.mrb[0].mxu0
      %v1139 = vadd.f32 %v426, %v1138
      %v1140 = vpop.f32.mrb[0].mxu0
      %1141 = vmatprep.mubr.bf16.mxu0 %v695
      %1142 = vmatmul.mubr.bf16.gmra.mrb[0].mxu0 %v694
      %v1143 = vpop.f32.mrb[0].mxu0
      %v1144 = vadd.f32 %v426, %v1143
      %v1145 = vpop.f32.mrb[0].mxu0
      %v1146 = vpop.f32.mrb[0].mxu0
      %v1147 = vadd.f32 %v426, %v1146
      %v1148 = vpop.f32.mrb[0].mxu0
      %1149 = vmatprep.mubr.bf16.mxu0 %v700
      %1150 = vmatmul.mubr.bf16.gmra.mrb[0].mxu0 %v699
      %v1151 = vpop.f32.mrb[0].mxu0
      %v1152 = vadd.f32 %v426, %v1151
      %v1153 = vpop.f32.mrb[0].mxu0
      %v1154 = vpop.f32.mrb[0].mxu0
      %v1155 = vadd.f32 %v426, %v1154
      %v1156 = vpop.f32.mrb[0].mxu0
      %1157 = vmatprep.mubr.bf16.mxu0 %v705
      %1158 = vmatmul.mubr.bf16.gmra.mrb[0].mxu0 %v704
      %v1159 = vpop.f32.mrb[0].mxu0
      %v1160 = vadd.f32 %v426, %v1159
      %v1161 = vpop.f32.mrb[0].mxu0
      %v1162 = vpop.f32.mrb[0].mxu0
      %v1163 = vadd.f32 %v426, %v1162
      %v1164 = vpop.f32.mrb[0].mxu0
      %1165 = vmatprep.mubr.bf16.mxu0 %v710
      %1166 = vmatmul.mubr.bf16.gmra.mrb[0].mxu0 %v709
      %v1167 = vpop.f32.mrb[0].mxu0
      %v1168 = vadd.f32 %v426, %v1167
      %v1169 = vpop.f32.mrb[0].mxu0
      %v1170 = vpop.f32.mrb[0].mxu0
      %v1171 = vadd.f32 %v426, %v1170
      %v1172 = vpop.f32.mrb[0].mxu0
      %1173 = vmatprep.mubr.bf16.mxu0 %v715
      %1174 = vmatmul.mubr.bf16.gmra.mrb[0].mxu0 %v714
      %v1175 = vpop.f32.mrb[0].mxu0
      %v1176 = vadd.f32 %v426, %v1175
      %v1177 = vpop.f32.mrb[0].mxu0
      %v1178 = vpop.f32.mrb[0].mxu0
      %v1179 = vadd.f32 %v426, %v1178
      %v1180 = vpop.f32.mrb[0].mxu0
      %1181 = vmatprep.mubr.bf16.mxu0 %v720
      %1182 = vmatmul.mubr.bf16.gmra.mrb[0].mxu0 %v719
      %v1183 = vpop.f32.mrb[0].mxu0
      %v1184 = vadd.f32 %v426, %v1183
      %v1185 = vpop.f32.mrb[0].mxu0
      %v1186 = vpop.f32.mrb[0].mxu0
      %v1187 = vadd.f32 %v426, %v1186
      %v1188 = vpop.f32.mrb[0].mxu0
      %1189 = vmatprep.mubr.bf16.mxu0 %v725
      %1190 = vmatmul.mubr.bf16.gmra.mrb[0].mxu0 %v724
      %v1191 = vpop.f32.mrb[0].mxu0
      %v1192 = vadd.f32 %v426, %v1191
      %v1193 = vpop.f32.mrb[0].mxu0
      %v1194 = vpop.f32.mrb[0].mxu0
      %v1195 = vadd.f32 %v426, %v1194
      %v1196 = vpop.f32.mrb[0].mxu0
      %1197 = vmatprep.mubr.bf16.mxu0 %v730
      %1198 = vmatmul.mubr.bf16.gmra.mrb[0].mxu0 %v729
      %v1199 = vpop.f32.mrb[0].mxu0
      %v1200 = vadd.f32 %v426, %v1199
      %v1201 = vpop.f32.mrb[0].mxu0
      %v1202 = vpop.f32.mrb[0].mxu0
      %v1203 = vadd.f32 %v426, %v1202
      %v1204 = vpop.f32.mrb[0].mxu0
      %1205 = vmatprep.mubr.bf16.mxu0 %v735
      %1206 = vmatmul.mubr.bf16.gmra.mrb[0].mxu0 %v734
      %v1207 = vpop.f32.mrb[0].mxu0
      %v1208 = vadd.f32 %v426, %v1207
      %v1209 = vpop.f32.mrb[0].mxu0
      %v1210 = vpop.f32.mrb[0].mxu0
      %v1211 = vadd.f32 %v426, %v1210
      %v1212 = vpop.f32.mrb[0].mxu0
      %1213 = vmatprep.mubr.bf16.mxu0 %v740
      %1214 = vmatmul.mubr.bf16.gmra.mrb[0].mxu0 %v739
      %v1215 = vpop.f32.mrb[0].mxu0
      %v1216 = vadd.f32 %v426, %v1215
      %v1217 = vpop.f32.mrb[0].mxu0
      %v1218 = vpop.f32.mrb[0].mxu0
      %v1219 = vadd.f32 %v426, %v1218
      %v1220 = vpop.f32.mrb[0].mxu0
      %1221 = vmatprep.mubr.bf16.mxu0 %v745
      %1222 = vmatmul.mubr.bf16.gmra.mrb[0].mxu0 %v744
      %v1223 = vpop.f32.mrb[0].mxu0
      %v1224 = vadd.f32 %v426, %v1223
      %v1225 = vpop.f32.mrb[0].mxu0
      %v1226 = vpop.f32.mrb[0].mxu0
      %v1227 = vadd.f32 %v426, %v1226
      %v1228 = vpop.f32.mrb[0].mxu0
      %1229 = vmatprep.mubr.bf16.mxu0 %v750
      %1230 = vmatmul.mubr.bf16.gmra.mrb[0].mxu0 %v749
      %v1231 = vpop.f32.mrb[0].mxu0
      %v1232 = vadd.f32 %v426, %v1231
      %v1233 = vpop.f32.mrb[0].mxu0
      %v1234 = vpop.f32.mrb[0].mxu0
      %v1235 = vadd.f32 %v426, %v1234
      %v1236 = vpop.f32.mrb[0].mxu0
      %1237 = vmatprep.mubr.bf16.mxu0 %v755
      %1238 = vmatmul.mubr.bf16.gmra.mrb[0].mxu0 %v754
      %v1239 = vpop.f32.mrb[0].mxu0
      %v1240 = vadd.f32 %v426, %v1239
      %v1241 = vpop.f32.mrb[0].mxu0
      %v1242 = vpop.f32.mrb[0].mxu0
      %v1243 = vadd.f32 %v426, %v1242
      %v1244 = vpop.f32.mrb[0].mxu0
      %1245 = vmatprep.mubr.bf16.mxu0 %v760
      %1246 = vmatmul.mubr.bf16.gmra.mrb[0].mxu0 %v759
      %v1247 = vpop.f32.mrb[0].mxu0
      %v1248 = vadd.f32 %v426, %v1247
      %v1249 = vpop.f32.mrb[0].mxu0
      %v1250 = vpop.f32.mrb[0].mxu0
      %v1251 = vadd.f32 %v426, %v1250
      %v1252 = vpop.f32.mrb[0].mxu0
      %1253 = vdwg.mxu0
      %1254 = vmatprep.subr.bf16.mxu0 0
      %1255 = vmatpush1.bf16.msra.mxu0 %v988
      %1256 = vmatprep.subr.bf16.mxu0 0
      %1257 = vmatpush1.bf16.msra.mxu0 %v989
      %1258 = vmatprep.subr.bf16.mxu0 0
      %1259 = vmatpush1.bf16.msra.mxu0 %v990
      %1260 = vmatprep.subr.bf16.mxu0 0
      %1261 = vmatpush1.bf16.msra.mxu0 %v991
      %1262 = vmatprep.subr.bf16.mxu0 0
      %1263 = vmatpush1.bf16.msra.mxu0 %v992
      %1264 = vmatprep.subr.bf16.mxu0 0
      %1265 = vmatpush1.bf16.msra.mxu0 %v993
      %1266 = vmatprep.subr.bf16.mxu0 0
      %1267 = vmatpush1.bf16.msra.mxu0 %v994
      %1268 = vmatprep.subr.bf16.mxu0 0
      %1269 = vmatpush1.bf16.msra.mxu0 %v995
      %1270 = vmatprep.subr.bf16.mxu0 0
      %1271 = vmatpush1.bf16.msra.mxu0 %v996
      %1272 = vmatprep.subr.bf16.mxu0 0
      %1273 = vmatpush1.bf16.msra.mxu0 %v997
      %1274 = vmatprep.subr.bf16.mxu0 0
      %1275 = vmatpush1.bf16.msra.mxu0 %v998
      %1276 = vmatprep.subr.bf16.mxu0 0
      %1277 = vmatpush1.bf16.msra.mxu0 %v999
      %1278 = vmatprep.subr.bf16.mxu0 0
      %1279 = vmatpush1.bf16.msra.mxu0 %v1000
      %1280 = vmatprep.subr.bf16.mxu0 0
      %1281 = vmatpush1.bf16.msra.mxu0 %v1001
      %1282 = vmatprep.subr.bf16.mxu0 0
      %1283 = vmatpush1.bf16.msra.mxu0 %v1002
      %1284 = vmatprep.subr.bf16.mxu0 0
      %1285 = vmatpush1.bf16.msra.mxu0 %v1003
      %1286 = vmatprep.mubr.bf16.mxu0 %v687
      %1287 = vmatmul.mubr.bf16.gmra.mrb[0].mxu0 %v686
      %v1288 = vpop.f32.mrb[0].mxu0
      %v1289 = vadd.f32 %v1128, %v1288
      %v1290 = vpop.f32.mrb[0].mxu0
      %v1291 = vpop.f32.mrb[0].mxu0
      %v1292 = vadd.f32 %v1131, %v1291
      %v1293 = vpop.f32.mrb[0].mxu0
      %1294 = vmatprep.mubr.bf16.mxu0 %v692
      %1295 = vmatmul.mubr.bf16.gmra.mrb[0].mxu0 %v691
      %v1296 = vpop.f32.mrb[0].mxu0
      %v1297 = vadd.f32 %v1136, %v1296
      %v1298 = vpop.f32.mrb[0].mxu0
      %v1299 = vpop.f32.mrb[0].mxu0
      %v1300 = vadd.f32 %v1139, %v1299
      %v1301 = vpop.f32.mrb[0].mxu0
      %1302 = vmatprep.mubr.bf16.mxu0 %v697
      %1303 = vmatmul.mubr.bf16.gmra.mrb[0].mxu0 %v696
      %v1304 = vpop.f32.mrb[0].mxu0
      %v1305 = vadd.f32 %v1144, %v1304
      %v1306 = vpop.f32.mrb[0].mxu0
      %v1307 = vpop.f32.mrb[0].mxu0
      %v1308 = vadd.f32 %v1147, %v1307
      %v1309 = vpop.f32.mrb[0].mxu0
      %1310 = vmatprep.mubr.bf16.mxu0 %v702
      %1311 = vmatmul.mubr.bf16.gmra.mrb[0].mxu0 %v701
      %v1312 = vpop.f32.mrb[0].mxu0
      %v1313 = vadd.f32 %v1152, %v1312
      %v1314 = vpop.f32.mrb[0].mxu0
      %v1315 = vpop.f32.mrb[0].mxu0
      %v1316 = vadd.f32 %v1155, %v1315
      %v1317 = vpop.f32.mrb[0].mxu0
      %1318 = vmatprep.mubr.bf16.mxu0 %v707
      %1319 = vmatmul.mubr.bf16.gmra.mrb[0].mxu0 %v706
      %v1320 = vpop.f32.mrb[0].mxu0
      %v1321 = vadd.f32 %v1160, %v1320
      %v1322 = vpop.f32.mrb[0].mxu0
      %v1323 = vpop.f32.mrb[0].mxu0
      %v1324 = vadd.f32 %v1163, %v1323
      %v1325 = vpop.f32.mrb[0].mxu0
      %1326 = vmatprep.mubr.bf16.mxu0 %v712
      %1327 = vmatmul.mubr.bf16.gmra.mrb[0].mxu0 %v711
      %v1328 = vpop.f32.mrb[0].mxu0
      %v1329 = vadd.f32 %v1168, %v1328
      %v1330 = vpop.f32.mrb[0].mxu0
      %v1331 = vpop.f32.mrb[0].mxu0
      %v1332 = vadd.f32 %v1171, %v1331
      %v1333 = vpop.f32.mrb[0].mxu0
      %1334 = vmatprep.mubr.bf16.mxu0 %v717
      %1335 = vmatmul.mubr.bf16.gmra.mrb[0].mxu0 %v716
      %v1336 = vpop.f32.mrb[0].mxu0
      %v1337 = vadd.f32 %v1176, %v1336
      %v1338 = vpop.f32.mrb[0].mxu0
      %v1339 = vpop.f32.mrb[0].mxu0
      %v1340 = vadd.f32 %v1179, %v1339
      %v1341 = vpop.f32.mrb[0].mxu0
      %1342 = vmatprep.mubr.bf16.mxu0 %v722
      %1343 = vmatmul.mubr.bf16.gmra.mrb[0].mxu0 %v721
      %v1344 = vpop.f32.mrb[0].mxu0
      %v1345 = vadd.f32 %v1184, %v1344
      %v1346 = vpop.f32.mrb[0].mxu0
      %v1347 = vpop.f32.mrb[0].mxu0
      %v1348 = vadd.f32 %v1187, %v1347
      %v1349 = vpop.f32.mrb[0].mxu0
      %1350 = vmatprep.mubr.bf16.mxu0 %v727
      %1351 = vmatmul.mubr.bf16.gmra.mrb[0].mxu0 %v726
      %v1352 = vpop.f32.mrb[0].mxu0
      %v1353 = vadd.f32 %v1192, %v1352
      %v1354 = vpop.f32.mrb[0].mxu0
      %v1355 = vpop.f32.mrb[0].mxu0
      %v1356 = vadd.f32 %v1195, %v1355
      %v1357 = vpop.f32.mrb[0].mxu0
      %1358 = vmatprep.mubr.bf16.mxu0 %v732
      %1359 = vmatmul.mubr.bf16.gmra.mrb[0].mxu0 %v731
      %v1360 = vpop.f32.mrb[0].mxu0
      %v1361 = vadd.f32 %v1200, %v1360
      %v1362 = vpop.f32.mrb[0].mxu0
      %v1363 = vpop.f32.mrb[0].mxu0
      %v1364 = vadd.f32 %v1203, %v1363
      %v1365 = vpop.f32.mrb[0].mxu0
      %1366 = vmatprep.mubr.bf16.mxu0 %v737
      %1367 = vmatmul.mubr.bf16.gmra.mrb[0].mxu0 %v736
      %v1368 = vpop.f32.mrb[0].mxu0
      %v1369 = vadd.f32 %v1208, %v1368
      %v1370 = vpop.f32.mrb[0].mxu0
      %v1371 = vpop.f32.mrb[0].mxu0
      %v1372 = vadd.f32 %v1211, %v1371
      %v1373 = vpop.f32.mrb[0].mxu0
      %1374 = vmatprep.mubr.bf16.mxu0 %v742
      %1375 = vmatmul.mubr.bf16.gmra.mrb[0].mxu0 %v741
      %v1376 = vpop.f32.mrb[0].mxu0
      %v1377 = vadd.f32 %v1216, %v1376
      %v1378 = vpop.f32.mrb[0].mxu0
      %v1379 = vpop.f32.mrb[0].mxu0
      %v1380 = vadd.f32 %v1219, %v1379
      %v1381 = vpop.f32.mrb[0].mxu0
      %1382 = vmatprep.mubr.bf16.mxu0 %v747
      %1383 = vmatmul.mubr.bf16.gmra.mrb[0].mxu0 %v746
      %v1384 = vpop.f32.mrb[0].mxu0
      %v1385 = vadd.f32 %v1224, %v1384
      %v1386 = vpop.f32.mrb[0].mxu0
      %v1387 = vpop.f32.mrb[0].mxu0
      %v1388 = vadd.f32 %v1227, %v1387
      %v1389 = vpop.f32.mrb[0].mxu0
      %1390 = vmatprep.mubr.bf16.mxu0 %v752
      %1391 = vmatmul.mubr.bf16.gmra.mrb[0].mxu0 %v751
      %v1392 = vpop.f32.mrb[0].mxu0
      %v1393 = vadd.f32 %v1232, %v1392
      %v1394 = vpop.f32.mrb[0].mxu0
      %v1395 = vpop.f32.mrb[0].mxu0
      %v1396 = vadd.f32 %v1235, %v1395
      %v1397 = vpop.f32.mrb[0].mxu0
      %1398 = vmatprep.mubr.bf16.mxu0 %v757
      %1399 = vmatmul.mubr.bf16.gmra.mrb[0].mxu0 %v756
      %v1400 = vpop.f32.mrb[0].mxu0
      %v1401 = vadd.f32 %v1240, %v1400
      %v1402 = vpop.f32.mrb[0].mxu0
      %v1403 = vpop.f32.mrb[0].mxu0
      %v1404 = vadd.f32 %v1243, %v1403
      %v1405 = vpop.f32.mrb[0].mxu0
      %1406 = vmatprep.mubr.bf16.mxu0 %v762
      %1407 = vmatmul.mubr.bf16.gmra.mrb[0].mxu0 %v761
      %v1408 = vpop.f32.mrb[0].mxu0
      %v1409 = vadd.f32 %v1248, %v1408
      %v1410 = vpop.f32.mrb[0].mxu0
      %v1411 = vpop.f32.mrb[0].mxu0
      %v1412 = vadd.f32 %v1251, %v1411
      %v1413 = vpop.f32.mrb[0].mxu0
      %1414 = vdwg.mxu0
      %1415 = vmatprep.subr.bf16.mxu0 0
      %1416 = vmatpush1.bf16.msra.mxu0 %v1004
      %1417 = vmatprep.subr.bf16.mxu0 0
      %1418 = vmatpush1.bf16.msra.mxu0 %v1005
      %1419 = vmatprep.subr.bf16.mxu0 0
      %1420 = vmatpush1.bf16.msra.mxu0 %v1006
      %1421 = vmatprep.subr.bf16.mxu0 0
      %1422 = vmatpush1.bf16.msra.mxu0 %v1007
      %1423 = vmatprep.subr.bf16.mxu0 0
      %1424 = vmatpush1.bf16.msra.mxu0 0
      %1425 = vmatprep.subr.bf16.mxu0 0
      %1426 = vmatpush1.bf16.msra.mxu0 0
      %1427 = vmatprep.subr.bf16.mxu0 0
      %1428 = vmatpush1.bf16.msra.mxu0 0
      %1429 = vmatprep.subr.bf16.mxu0 0
      %1430 = vmatpush1.bf16.msra.mxu0 0
      %1431 = vmatprep.subr.bf16.mxu0 0
      %1432 = vmatpush1.bf16.msra.mxu0 0
      %1433 = vmatprep.subr.bf16.mxu0 0
      %1434 = vmatpush1.bf16.msra.mxu0 0
      %1435 = vmatprep.subr.bf16.mxu0 0
      %1436 = vmatpush1.bf16.msra.mxu0 0
      %1437 = vmatprep.subr.bf16.mxu0 0
      %1438 = vmatpush1.bf16.msra.mxu0 0
      %1439 = vmatprep.subr.bf16.mxu0 0
      %1440 = vmatpush1.bf16.msra.mxu0 0
      %1441 = vmatprep.subr.bf16.mxu0 0
      %1442 = vmatpush1.bf16.msra.mxu0 0
      %1443 = vmatprep.subr.bf16.mxu0 0
      %1444 = vmatpush1.bf16.msra.mxu0 0
      %1445 = vmatprep.subr.bf16.mxu0 0
      %1446 = vmatpush1.bf16.msra.mxu0 0
      %1447 = vmatprep.mubr.bf16.mxu0 0
      %1448 = vmatmul.mubr.bf16.gmra.mrb[0].mxu0 %v1046
      %v1449 = vpop.f32.mrb[0].mxu0
      %v1450 = vadd.f32 %v1289, %v1449
      %v1451 = vpop.f32.mrb[0].mxu0
      %v1452 = vpop.f32.mrb[0].mxu0
      %v1453 = vadd.f32 %v1292, %v1452
      %v1454 = vpop.f32.mrb[0].mxu0
      %1455 = vmatprep.mubr.bf16.mxu0 0
      %1456 = vmatmul.mubr.bf16.gmra.mrb[0].mxu0 %v1049
      %v1457 = vpop.f32.mrb[0].mxu0
      %v1458 = vadd.f32 %v1297, %v1457
      %v1459 = vpop.f32.mrb[0].mxu0
      %v1460 = vpop.f32.mrb[0].mxu0
      %v1461 = vadd.f32 %v1300, %v1460
      %v1462 = vpop.f32.mrb[0].mxu0
      %1463 = vmatprep.mubr.bf16.mxu0 0
      %1464 = vmatmul.mubr.bf16.gmra.mrb[0].mxu0 %v1052
      %v1465 = vpop.f32.mrb[0].mxu0
      %v1466 = vadd.f32 %v1305, %v1465
      %v1467 = vpop.f32.mrb[0].mxu0
      %v1468 = vpop.f32.mrb[0].mxu0
      %v1469 = vadd.f32 %v1308, %v1468
      %v1470 = vpop.f32.mrb[0].mxu0
      %1471 = vmatprep.mubr.bf16.mxu0 0
      %1472 = vmatmul.mubr.bf16.gmra.mrb[0].mxu0 %v1055
      %v1473 = vpop.f32.mrb[0].mxu0
      %v1474 = vadd.f32 %v1313, %v1473
      %v1475 = vpop.f32.mrb[0].mxu0
      %v1476 = vpop.f32.mrb[0].mxu0
      %v1477 = vadd.f32 %v1316, %v1476
      %v1478 = vpop.f32.mrb[0].mxu0
      %1479 = vmatprep.mubr.bf16.mxu0 0
      %1480 = vmatmul.mubr.bf16.gmra.mrb[0].mxu0 %v1058
      %v1481 = vpop.f32.mrb[0].mxu0
      %v1482 = vadd.f32 %v1321, %v1481
      %v1483 = vpop.f32.mrb[0].mxu0
      %v1484 = vpop.f32.mrb[0].mxu0
      %v1485 = vadd.f32 %v1324, %v1484
      %v1486 = vpop.f32.mrb[0].mxu0
      %1487 = vmatprep.mubr.bf16.mxu0 0
      %1488 = vmatmul.mubr.bf16.gmra.mrb[0].mxu0 %v1061
      %v1489 = vpop.f32.mrb[0].mxu0
      %v1490 = vadd.f32 %v1329, %v1489
      %v1491 = vpop.f32.mrb[0].mxu0
      %v1492 = vpop.f32.mrb[0].mxu0
      %v1493 = vadd.f32 %v1332, %v1492
      %v1494 = vpop.f32.mrb[0].mxu0
      %1495 = vmatprep.mubr.bf16.mxu0 0
      %1496 = vmatmul.mubr.bf16.gmra.mrb[0].mxu0 %v1064
      %v1497 = vpop.f32.mrb[0].mxu0
      %v1498 = vadd.f32 %v1337, %v1497
      %v1499 = vpop.f32.mrb[0].mxu0
      %v1500 = vpop.f32.mrb[0].mxu0
      %v1501 = vadd.f32 %v1340, %v1500
      %v1502 = vpop.f32.mrb[0].mxu0
      %1503 = vmatprep.mubr.bf16.mxu0 0
      %1504 = vmatmul.mubr.bf16.gmra.mrb[0].mxu0 %v1067
      %v1505 = vpop.f32.mrb[0].mxu0
      %v1506 = vadd.f32 %v1345, %v1505
      %v1507 = vpop.f32.mrb[0].mxu0
      %v1508 = vpop.f32.mrb[0].mxu0
      %v1509 = vadd.f32 %v1348, %v1508
      %v1510 = vpop.f32.mrb[0].mxu0
      %1511 = vmatprep.mubr.bf16.mxu0 0
      %1512 = vmatmul.mubr.bf16.gmra.mrb[0].mxu0 %v1070
      %v1513 = vpop.f32.mrb[0].mxu0
      %v1514 = vadd.f32 %v1353, %v1513
      %v1515 = vpop.f32.mrb[0].mxu0
      %v1516 = vpop.f32.mrb[0].mxu0
      %v1517 = vadd.f32 %v1356, %v1516
      %v1518 = vpop.f32.mrb[0].mxu0
      %1519 = vmatprep.mubr.bf16.mxu0 0
      %1520 = vmatmul.mubr.bf16.gmra.mrb[0].mxu0 %v1073
      %v1521 = vpop.f32.mrb[0].mxu0
      %v1522 = vadd.f32 %v1361, %v1521
      %v1523 = vpop.f32.mrb[0].mxu0
      %v1524 = vpop.f32.mrb[0].mxu0
      %v1525 = vadd.f32 %v1364, %v1524
      %v1526 = vpop.f32.mrb[0].mxu0
      %1527 = vmatprep.mubr.bf16.mxu0 0
      %1528 = vmatmul.mubr.bf16.gmra.mrb[0].mxu0 %v1076
      %v1529 = vpop.f32.mrb[0].mxu0
      %v1530 = vadd.f32 %v1369, %v1529
      %v1531 = vpop.f32.mrb[0].mxu0
      %v1532 = vpop.f32.mrb[0].mxu0
      %v1533 = vadd.f32 %v1372, %v1532
      %v1534 = vpop.f32.mrb[0].mxu0
      %1535 = vmatprep.mubr.bf16.mxu0 0
      %1536 = vmatmul.mubr.bf16.gmra.mrb[0].mxu0 %v1079
      %v1537 = vpop.f32.mrb[0].mxu0
      %v1538 = vadd.f32 %v1377, %v1537
      %v1539 = vpop.f32.mrb[0].mxu0
      %v1540 = vpop.f32.mrb[0].mxu0
      %v1541 = vadd.f32 %v1380, %v1540
      %v1542 = vpop.f32.mrb[0].mxu0
      %1543 = vmatprep.mubr.bf16.mxu0 0
      %1544 = vmatmul.mubr.bf16.gmra.mrb[0].mxu0 %v1082
      %v1545 = vpop.f32.mrb[0].mxu0
      %v1546 = vadd.f32 %v1385, %v1545
      %v1547 = vpop.f32.mrb[0].mxu0
      %v1548 = vpop.f32.mrb[0].mxu0
      %v1549 = vadd.f32 %v1388, %v1548
      %v1550 = vpop.f32.mrb[0].mxu0
      %1551 = vmatprep.mubr.bf16.mxu0 0
      %1552 = vmatmul.mubr.bf16.gmra.mrb[0].mxu0 %v1085
      %v1553 = vpop.f32.mrb[0].mxu0
      %v1554 = vadd.f32 %v1393, %v1553
      %v1555 = vpop.f32.mrb[0].mxu0
      %v1556 = vpop.f32.mrb[0].mxu0
      %v1557 = vadd.f32 %v1396, %v1556
      %v1558 = vpop.f32.mrb[0].mxu0
      %1559 = vmatprep.mubr.bf16.mxu0 0
      %1560 = vmatmul.mubr.bf16.gmra.mrb[0].mxu0 %v1088
      %v1561 = vpop.f32.mrb[0].mxu0
      %v1562 = vadd.f32 %v1401, %v1561
      %v1563 = vpop.f32.mrb[0].mxu0
      %v1564 = vpop.f32.mrb[0].mxu0
      %v1565 = vadd.f32 %v1404, %v1564
      %v1566 = vpop.f32.mrb[0].mxu0
      %1567 = vmatprep.mubr.bf16.mxu0 0
      %1568 = vmatmul.mubr.bf16.gmra.mrb[0].mxu0 %v1091
      %v1569 = vpop.f32.mrb[0].mxu0
      %v1570 = vadd.f32 %v1409, %v1569
      %v1571 = vpop.f32.mrb[0].mxu0
      %v1572 = vpop.f32.mrb[0].mxu0
      %v1573 = vadd.f32 %v1412, %v1572
      %v1574 = vpop.f32.mrb[0].mxu0
      %1575 = vdwg.mxu0
      %1576 = vst.msk [vmem:[%s242] sm:$0xff] %vm1044, %v1450
      %1577 = vst.msk [vmem:[%s242 + $0x8] sm:$0xff] %vm1044, %v1453
      %1578 = vst.msk [vmem:[%s242 + $0x10] sm:$0xff] %vm1044, %v1458
      %1579 = vst.msk [vmem:[%s242 + $0x18] sm:$0xff] %vm1044, %v1461
      %1580 = vst.msk [vmem:[%s242 + $0x20] sm:$0xff] %vm1044, %v1466
      %1581 = vst.msk [vmem:[%s242 + $0x28] sm:$0xff] %vm1044, %v1469
      %1582 = vst.msk [vmem:[%s242 + $0x30] sm:$0xff] %vm1044, %v1474
      %1583 = vst.msk [vmem:[%s242 + $0x38] sm:$0xff] %vm1044, %v1477
      %1584 = vst.msk [vmem:[%s242 + $0x40] sm:$0xff] %vm1044, %v1482
      %1585 = vst.msk [vmem:[%s242 + $0x48] sm:$0xff] %vm1044, %v1485
      %1586 = vst.msk [vmem:[%s242 + $0x50] sm:$0xff] %vm1044, %v1490
      %1587 = vst.msk [vmem:[%s242 + $0x58] sm:$0xff] %vm1044, %v1493
      %1588 = vst.msk [vmem:[%s242 + $0x60] sm:$0xff] %vm1044, %v1498
      %1589 = vst.msk [vmem:[%s242 + $0x68] sm:$0xff] %vm1044, %v1501
      %1590 = vst.msk [vmem:[%s242 + $0x70] sm:$0xff] %vm1044, %v1506
      %1591 = vst.msk [vmem:[%s242 + $0x78] sm:$0xff] %vm1044, %v1509
      %1592 = vst.msk [vmem:[%s242 + $0x80] sm:$0xff] %vm1044, %v1514
      %1593 = vst.msk [vmem:[%s242 + $0x88] sm:$0xff] %vm1044, %v1517
      %1594 = vst.msk [vmem:[%s242 + $0x90] sm:$0xff] %vm1044, %v1522
      %1595 = vst.msk [vmem:[%s242 + $0x98] sm:$0xff] %vm1044, %v1525
      %1596 = vst.msk [vmem:[%s242 + $0xa0] sm:$0xff] %vm1044, %v1530
      %1597 = vst.msk [vmem:[%s242 + $0xa8] sm:$0xff] %vm1044, %v1533
      %1598 = vst.msk [vmem:[%s242 + $0xb0] sm:$0xff] %vm1044, %v1538
      %1599 = vst.msk [vmem:[%s242 + $0xb8] sm:$0xff] %vm1044, %v1541
      %1600 = vst.msk [vmem:[%s242 + $0xc0] sm:$0xff] %vm1044, %v1546
      %1601 = vst.msk [vmem:[%s242 + $0xc8] sm:$0xff] %vm1044, %v1549
      %1602 = vst.msk [vmem:[%s242 + $0xd0] sm:$0xff] %vm1044, %v1554
      %1603 = vst.msk [vmem:[%s242 + $0xd8] sm:$0xff] %vm1044, %v1557
      %1604 = vst.msk [vmem:[%s242 + $0xe0] sm:$0xff] %vm1044, %v1562
      %1605 = vst.msk [vmem:[%s242 + $0xe8] sm:$0xff] %vm1044, %v1565
      %1606 = vst.msk [vmem:[%s242 + $0xf0] sm:$0xff] %vm1044, %v1570
      %1607 = vst.msk [vmem:[%s242 + $0xf8] sm:$0xff] %vm1044, %v1573
      %v1608 = vsel %vm1044, %v1450, 0.0
      %v1609 = vsel %vm1044, %v1453, 0.0
      %v1610 = vadd.f32 %v1608, %v1609
      %v1611 = vsel %vm1044, %v1458, 0.0
      %v1612 = vadd.f32 %v1610, %v1611
      %v1613 = vsel %vm1044, %v1461, 0.0
      %v1614 = vadd.f32 %v1612, %v1613
      %v1615 = vsel %vm1044, %v1466, 0.0
      %v1616 = vadd.f32 %v1614, %v1615
      %v1617 = vsel %vm1044, %v1469, 0.0
      %v1618 = vadd.f32 %v1616, %v1617
      %v1619 = vsel %vm1044, %v1474, 0.0
      %v1620 = vadd.f32 %v1618, %v1619
      %v1621 = vsel %vm1044, %v1477, 0.0
      %v1622 = vadd.f32 %v1620, %v1621
      %v1623 = vsel %vm1044, %v1482, 0.0
      %v1624 = vadd.f32 %v1622, %v1623
      %v1625 = vsel %vm1044, %v1485, 0.0
      %v1626 = vadd.f32 %v1624, %v1625
      %v1627 = vsel %vm1044, %v1490, 0.0
      %v1628 = vadd.f32 %v1626, %v1627
      %v1629 = vsel %vm1044, %v1493, 0.0
      %v1630 = vadd.f32 %v1628, %v1629
      %v1631 = vsel %vm1044, %v1498, 0.0
      %v1632 = vadd.f32 %v1630, %v1631
      %v1633 = vsel %vm1044, %v1501, 0.0
      %v1634 = vadd.f32 %v1632, %v1633
      %v1635 = vsel %vm1044, %v1506, 0.0
      %v1636 = vadd.f32 %v1634, %v1635
      %v1637 = vsel %vm1044, %v1509, 0.0
      %v1638 = vadd.f32 %v1636, %v1637
      %v1639 = vsel %vm1044, %v1514, 0.0
      %v1640 = vadd.f32 %v1638, %v1639
      %v1641 = vsel %vm1044, %v1517, 0.0
      %v1642 = vadd.f32 %v1640, %v1641
      %v1643 = vsel %vm1044, %v1522, 0.0
      %v1644 = vadd.f32 %v1642, %v1643
      %v1645 = vsel %vm1044, %v1525, 0.0
      %v1646 = vadd.f32 %v1644, %v1645
      %v1647 = vsel %vm1044, %v1530, 0.0
      %v1648 = vadd.f32 %v1646, %v1647
      %v1649 = vsel %vm1044, %v1533, 0.0
      %v1650 = vadd.f32 %v1648, %v1649
      %v1651 = vsel %vm1044, %v1538, 0.0
      %v1652 = vadd.f32 %v1650, %v1651
      %v1653 = vsel %vm1044, %v1541, 0.0
      %v1654 = vadd.f32 %v1652, %v1653
      %v1655 = vsel %vm1044, %v1546, 0.0
      %v1656 = vadd.f32 %v1654, %v1655
      %v1657 = vsel %vm1044, %v1549, 0.0
      %v1658 = vadd.f32 %v1656, %v1657
      %v1659 = vsel %vm1044, %v1554, 0.0
      %v1660 = vadd.f32 %v1658, %v1659
      %v1661 = vsel %vm1044, %v1557, 0.0
      %v1662 = vadd.f32 %v1660, %v1661
      %v1663 = vsel %vm1044, %v1562, 0.0
      %v1664 = vadd.f32 %v1662, %v1663
      %v1665 = vsel %vm1044, %v1565, 0.0
      %v1666 = vadd.f32 %v1664, %v1665
      %v1667 = vsel %vm1044, %v1570, 0.0
      %v1668 = vadd.f32 %v1666, %v1667
      %v1669 = vsel %vm1044, %v1573, 0.0
      %v1670 = vadd.f32 %v1668, %v1669
      %v1671 = vrot.slane %v1670, 4
      %v1672 = vadd.f32 %v1670, %v1671
      %v1673 = vrot.slane %v1672, 2
      %v1674 = vadd.f32 %v1672, %v1673
      %v1675 = vrot.slane %v1674, 1
      %v1676 = vadd.f32 %v1674, %v1675
      %v1677 = vmul.f32 %v1450, %v1450
      %v1678 = vmul.f32 %v1453, %v1453
      %v1679 = vmul.f32 %v1458, %v1458
      %v1680 = vmul.f32 %v1461, %v1461
      %v1681 = vmul.f32 %v1466, %v1466
      %v1682 = vmul.f32 %v1469, %v1469
      %v1683 = vmul.f32 %v1474, %v1474
      %v1684 = vmul.f32 %v1477, %v1477
      %v1685 = vmul.f32 %v1482, %v1482
      %v1686 = vmul.f32 %v1485, %v1485
      %v1687 = vmul.f32 %v1490, %v1490
      %v1688 = vmul.f32 %v1493, %v1493
      %v1689 = vmul.f32 %v1498, %v1498
      %v1690 = vmul.f32 %v1501, %v1501
      %v1691 = vmul.f32 %v1506, %v1506
      %v1692 = vmul.f32 %v1509, %v1509
      %v1693 = vmul.f32 %v1514, %v1514
      %v1694 = vmul.f32 %v1517, %v1517
      %v1695 = vmul.f32 %v1522, %v1522
      %v1696 = vmul.f32 %v1525, %v1525
      %v1697 = vmul.f32 %v1530, %v1530
      %v1698 = vmul.f32 %v1533, %v1533
      %v1699 = vmul.f32 %v1538, %v1538
      %v1700 = vmul.f32 %v1541, %v1541
      %v1701 = vmul.f32 %v1546, %v1546
      %v1702 = vmul.f32 %v1549, %v1549
      %v1703 = vmul.f32 %v1554, %v1554
      %v1704 = vmul.f32 %v1557, %v1557
      %v1705 = vmul.f32 %v1562, %v1562
      %v1706 = vmul.f32 %v1565, %v1565
      %v1707 = vmul.f32 %v1570, %v1570
      %v1708 = vmul.f32 %v1573, %v1573
      %v1709 = vsel %vm1044, %v1677, 0.0
      %v1710 = vsel %vm1044, %v1678, 0.0
      %v1711 = vadd.f32 %v1709, %v1710
      %v1712 = vsel %vm1044, %v1679, 0.0
      %v1713 = vadd.f32 %v1711, %v1712
      %v1714 = vsel %vm1044, %v1680, 0.0
      %v1715 = vadd.f32 %v1713, %v1714
      %v1716 = vsel %vm1044, %v1681, 0.0
      %v1717 = vadd.f32 %v1715, %v1716
      %v1718 = vsel %vm1044, %v1682, 0.0
      %v1719 = vadd.f32 %v1717, %v1718
      %v1720 = vsel %vm1044, %v1683, 0.0
      %v1721 = vadd.f32 %v1719, %v1720
      %v1722 = vsel %vm1044, %v1684, 0.0
      %v1723 = vadd.f32 %v1721, %v1722
      %v1724 = vsel %vm1044, %v1685, 0.0
      %v1725 = vadd.f32 %v1723, %v1724
      %v1726 = vsel %vm1044, %v1686, 0.0
      %v1727 = vadd.f32 %v1725, %v1726
      %v1728 = vsel %vm1044, %v1687, 0.0
      %v1729 = vadd.f32 %v1727, %v1728
      %v1730 = vsel %vm1044, %v1688, 0.0
      %v1731 = vadd.f32 %v1729, %v1730
      %v1732 = vsel %vm1044, %v1689, 0.0
      %v1733 = vadd.f32 %v1731, %v1732
      %v1734 = vsel %vm1044, %v1690, 0.0
      %v1735 = vadd.f32 %v1733, %v1734
      %v1736 = vsel %vm1044, %v1691, 0.0
      %v1737 = vadd.f32 %v1735, %v1736
      %v1738 = vsel %vm1044, %v1692, 0.0
      %v1739 = vadd.f32 %v1737, %v1738
      %v1740 = vsel %vm1044, %v1693, 0.0
      %v1741 = vadd.f32 %v1739, %v1740
      %v1742 = vsel %vm1044, %v1694, 0.0
      %v1743 = vadd.f32 %v1741, %v1742
      %v1744 = vsel %vm1044, %v1695, 0.0
      %v1745 = vadd.f32 %v1743, %v1744
      %v1746 = vsel %vm1044, %v1696, 0.0
      %v1747 = vadd.f32 %v1745, %v1746
      %v1748 = vsel %vm1044, %v1697, 0.0
      %v1749 = vadd.f32 %v1747, %v1748
      %v1750 = vsel %vm1044, %v1698, 0.0
      %v1751 = vadd.f32 %v1749, %v1750
      %v1752 = vsel %vm1044, %v1699, 0.0
      %v1753 = vadd.f32 %v1751, %v1752
      %v1754 = vsel %vm1044, %v1700, 0.0
      %v1755 = vadd.f32 %v1753, %v1754
      %v1756 = vsel %vm1044, %v1701, 0.0
      %v1757 = vadd.f32 %v1755, %v1756
      %v1758 = vsel %vm1044, %v1702, 0.0
      %v1759 = vadd.f32 %v1757, %v1758
      %v1760 = vsel %vm1044, %v1703, 0.0
      %v1761 = vadd.f32 %v1759, %v1760
      %v1762 = vsel %vm1044, %v1704, 0.0
      %v1763 = vadd.f32 %v1761, %v1762
      %v1764 = vsel %vm1044, %v1705, 0.0
      %v1765 = vadd.f32 %v1763, %v1764
      %v1766 = vsel %vm1044, %v1706, 0.0
      %v1767 = vadd.f32 %v1765, %v1766
      %v1768 = vsel %vm1044, %v1707, 0.0
      %v1769 = vadd.f32 %v1767, %v1768
      %v1770 = vsel %vm1044, %v1708, 0.0
      %v1771 = vadd.f32 %v1769, %v1770
      %v1772 = vrot.slane %v1771, 4
      %v1773 = vadd.f32 %v1771, %v1772
      %v1774 = vrot.slane %v1773, 2
      %v1775 = vadd.f32 %v1773, %v1774
      %v1776 = vrot.slane %v1775, 1
      %v1777 = vadd.f32 %v1775, %v1776
      %1778 = vst.msk [vmem:[%s247] sm:$0xff] %vm1044, %v1676
      %1779 = vst.msk [vmem:[%s251] sm:$0xff] %vm1044, %v1777
      %s1780 = smul.u32 32, %s17
      %p1781 = scmp.lt.s32.totalorder %s1780, 63
      %s1782 = scalar_select %p1781, %s1780, 63
      %s1783 = smul.addr %s1782, 8
      %s1784 = scalar_lea.vmem %s3, %s1783
      %p1785 = scmp.lt.s32.totalorder %s17, 1
      %s1786 = scalar_select %p1785, %s17, 1
      %s1787 = smul.addr %s1786, 8
      %s1788 = scalar_lea.vmem %s4, %s1787
      %p1789 = scmp.lt.s32.totalorder %s17, 1
      %s1790 = scalar_select %p1789, %s17, 1
      %s1791 = smul.addr %s1790, 8
      %s1792 = scalar_lea.vmem %s5, %s1791
      // Predicated region
      $region33: #{dncnn_forward.7} parent=31 // pred_check
        %p1793 = pneg %p103
      $region34: #{dncnn_forward.7} parent=31 // pred_check_branch
        %1795 = sbr.rel (%p1793) target = $region36
      $region35: #{dncnn_forward.7} parent=31 // pred_region
        %s1796 = smul.u32 32, %s17
      $region36: #{dncnn_forward.7} parent=31 // pred_fallthru
        _
      // Predicated region
      $region37: #{dncnn_forward.7} parent=31 // pred_check
        %p1797 = pneg %p129
      $region38: #{dncnn_forward.7} parent=31 // pred_check_branch
        %1799 = sbr.rel (%p1797) target = $region40
      $region39: #{dncnn_forward.7} parent=31 // pred_region
        _
      $region40: #{dncnn_forward.7} parent=31 // pred_fallthru
        _
      // Predicated region
      $region41: #{dncnn_forward.7} parent=31 // pred_check
        %p1800 = pneg %p155
      $region42: #{dncnn_forward.7} parent=31 // pred_check_branch
        %1802 = sbr.rel (%p1800) target = $region44
      $region43: #{dncnn_forward.7} parent=31 // pred_region
        _
      $region44: #{dncnn_forward.7} parent=31 // pred_fallthru
        _
    $region32: #{dncnn_forward.7} parent=5 // pred_fallthru
      _
    %p1803 = scmp.le.s32.totalorder 2, %s12
    // Predicated region
    $region45: #{dncnn_forward.7} parent=5 // pred_check
      %p1804 = pneg %p1803
    $region46: #{dncnn_forward.7} parent=5 // pred_check_branch
      %1806 = sbr.rel (%p1804) target = $region48
    $region47: #{dncnn_forward.7} parent=5 // pred_region
      %s1807 = ssub.s32 %s12, 2
      // Predicated region
      $region49: #{dncnn_forward.7} parent=47 // pred_check
        %p1808 = pneg %p109
      $region50: #{dncnn_forward.7} parent=47 // pred_check_branch
        %1810 = sbr.rel (%p1808) target = $region52
      $region51: #{dncnn_forward.7} parent=47 // pred_region
        %s1811 = smul.u32 32, %s18
        %p1812 = scmp.lt.s32.totalorder %s1811, 63
        %s1813 = scalar_select %p1812, %s1811, 63
        %s1814 = smul.addr %s1813, 8
        %s1815 = scalar_lea.vmem %s3, %s1814
      $region52: #{dncnn_forward.7} parent=47 // pred_fallthru
        _
      // Predicated region
      $region53: #{dncnn_forward.7} parent=47 // pred_check
        %p1816 = pneg %p135
      $region54: #{dncnn_forward.7} parent=47 // pred_check_branch
        %1818 = sbr.rel (%p1816) target = $region56
      $region55: #{dncnn_forward.7} parent=47 // pred_region
        %p1819 = scmp.lt.s32.totalorder %s18, 1
        %s1820 = scalar_select %p1819, %s18, 1
        %s1821 = smul.addr %s1820, 8
        %s1822 = scalar_lea.vmem %s4, %s1821
      $region56: #{dncnn_forward.7} parent=47 // pred_fallthru
        _
      // Predicated region
      $region57: #{dncnn_forward.7} parent=47 // pred_check
        %p1823 = pneg %p161
      $region58: #{dncnn_forward.7} parent=47 // pred_check_branch
        %1825 = sbr.rel (%p1823) target = $region60
      $region59: #{dncnn_forward.7} parent=47 // pred_region
        %p1826 = scmp.lt.s32.totalorder %s18, 1
        %s1827 = scalar_select %p1826, %s18, 1
        %s1828 = smul.addr %s1827, 8
        %s1829 = scalar_lea.vmem %s5, %s1828
      $region60: #{dncnn_forward.7} parent=47 // pred_fallthru
        _
    $region48: #{dncnn_forward.7} parent=5 // pred_fallthru
      _
  $region6: #{dncnn_forward.7} parent=0 // loop_footer
    %s16 = sadd.s32 1, %s12
  $region7: #{dncnn_forward.7} parent=0 // loop_footer_branch
    %11 = sbr.rel target = $region3
  $region8: #{dncnn_forward.7} parent=0 // loop_exit
    _

// kernel: dncnn_forward.11
$region0: #{dncnn_forward.11}
  #allocation0 [shape = 'u32[]', space=smem, size = 0x4, offset = 0x4, fixed_abs, tag = 'smem constant byte address 0x4 - core index']
  #allocation1 [shape = 'u32[144,128]{1,0:T(1,128)}', space=vmem, size = 0x12000, scoped, tag = 'internal scratch']
  %s0 = inlined_call_operand.vmem [shape: bf16[512,576], index: 0, kind: input, shape index: {}]
  %s1 = inlined_call_operand.vmem [shape: bf16[576,3], index: 1, kind: input, shape index: {}]
  %s2 = inlined_call_operand.vmem [shape: f32[1,3], index: 2, kind: input, shape index: {}]
  %s3 = inlined_call_operand.vmem [shape: f32[512,3], index: 3, kind: input, shape index: {}]
  %s4 = inlined_call_operand.vmem [shape: f32[512,3], index: 4, kind: output, shape index: {}]
  %s5 = sld [smem:[#allocation0]]
  $region49: #{dncnn_forward.11} parent=0
    _
  %s7 = ssub.s32 1, %s5
  %s8 = scalar_select 0, %s7, %s5
  loop: start=0, step=1, limit=4
  $region2: #{dncnn_forward.11} parent=0 // loop_pre_header
    _
  $region3: #{dncnn_forward.11} parent=0 // loop_header
    %s10 = sphi 0, %s14
    %p11 = scmp.ge.s32.totalorder %s10, 4
    %s20 = sphi 0, %s22
    %s23 = sphi 0, %s20
    %s24 = sphi 0, %s23
    %s40 = sphi 0, %s24
    %s44 = sphi 0, %s44
    %s46 = sphi 0, %s44
    %s47 = sphi 0, %s46
    %s61 = sphi 0, %s47
    %s65 = sphi 0, %s65
    %s67 = sphi 0, %s65
    %s68 = sphi 0, %s67
    %s82 = sphi 0, %s68
    %s88 = sphi 0, %s90
    %s91 = sphi 0, %s88
    %s92 = sphi 0, %s91
    %s108 = sphi 0, %s92
    %s114 = sphi 0, %s116
    %s117 = sphi 0, %s114
    %s118 = sphi 0, %s117
    %s134 = sphi 0, %s118
  $region4: #{dncnn_forward.11} parent=0 // loop_header_branch
    %13 = sbr.rel (%p11) target = $region8
  $region5: #{dncnn_forward.11} parent=0 // loop_body
    %s15 = ssub.s32 %s10, 1
    %s16 = ssub.s32 %s10, 2
    %s17 = sadd.s32 %s10, 1
    %s18 = ssub.s32 %s10, %s17
    %p19 = scmp.eq.s32.totalorder %s18, 0
    %s21 = sadd.s32 %s20, 1
    %s22 = scalar_select %p19, %s20, %s21
    %p25 = pneg %p19
    %p26 = scmp.eq.s32.totalorder %s10, 1
    %p27 = por %p25, %p26
    %p28 = scmp.ne.s32.totalorder %s20, %s23
    %p29 = scmp.eq.s32.totalorder %s10, 0
    %p30 = por %p28, %p29
    %p31 = scmp.ne.s32.totalorder %s20, %s23
    %p32 = scmp.eq.s32.totalorder %s15, 1
    %p33 = por %p31, %p32
    %p34 = scmp.ne.s32.totalorder %s23, %s24
    %p35 = scmp.eq.s32.totalorder %s15, 0
    %p36 = por %p34, %p35
    %p37 = scmp.ne.s32.totalorder %s23, %s24
    %p38 = scmp.eq.s32.totalorder %s16, 1
    %p39 = por %p37, %p38
    %p41 = scmp.ne.s32.totalorder %s24, %s40
    %p42 = scmp.eq.s32.totalorder %s16, 0
    %p43 = por %p41, %p42
    %s45 = sadd.s32 %s44, 1
    %p48 = scmp.eq.s32.totalorder %s10, 1
    %p49 = scmp.ne.s32.totalorder %s44, %s46
    %p50 = scmp.eq.s32.totalorder %s10, 0
    %p51 = por %p49, %p50
    %p52 = scmp.ne.s32.totalorder %s44, %s46
    %p53 = scmp.eq.s32.totalorder %s15, 1
    %p54 = por %p52, %p53
    %p55 = scmp.ne.s32.totalorder %s46, %s47
    %p56 = scmp.eq.s32.totalorder %s15, 0
    %p57 = por %p55, %p56
    %p58 = scmp.ne.s32.totalorder %s46, %s47
    %p59 = scmp.eq.s32.totalorder %s16, 1
    %p60 = por %p58, %p59
    %p62 = scmp.ne.s32.totalorder %s47, %s61
    %p63 = scmp.eq.s32.totalorder %s16, 0
    %p64 = por %p62, %p63
    %s66 = sadd.s32 %s65, 1
    %p69 = scmp.eq.s32.totalorder %s10, 1
    %p70 = scmp.ne.s32.totalorder %s65, %s67
    %p71 = scmp.eq.s32.totalorder %s10, 0
    %p72 = por %p70, %p71
    %p73 = scmp.ne.s32.totalorder %s65, %s67
    %p74 = scmp.eq.s32.totalorder %s15, 1
    %p75 = por %p73, %p74
    %p76 = scmp.ne.s32.totalorder %s67, %s68
    %p77 = scmp.eq.s32.totalorder %s15, 0
    %p78 = por %p76, %p77
    %p79 = scmp.ne.s32.totalorder %s67, %s68
    %p80 = scmp.eq.s32.totalorder %s16, 1
    %p81 = por %p79, %p80
    %p83 = scmp.ne.s32.totalorder %s68, %s82
    %p84 = scmp.eq.s32.totalorder %s16, 0
    %p85 = por %p83, %p84
    %s86 = ssub.s32 %s10, %s17
    %p87 = scmp.eq.s32.totalorder %s86, 0
    %s89 = sadd.s32 %s88, 1
    %s90 = scalar_select %p87, %s88, %s89
    %p93 = pneg %p87
    %p94 = scmp.eq.s32.totalorder %s10, 1
    %p95 = por %p93, %p94
    %p96 = scmp.ne.s32.totalorder %s88, %s91
    %p97 = scmp.eq.s32.totalorder %s10, 0
    %p98 = por %p96, %p97
    %p99 = scmp.ne.s32.totalorder %s88, %s91
    %p100 = scmp.eq.s32.totalorder %s15, 1
    %p101 = por %p99, %p100
    %p102 = scmp.ne.s32.totalorder %s91, %s92
    %p103 = scmp.eq.s32.totalorder %s15, 0
    %p104 = por %p102, %p103
    %p105 = scmp.ne.s32.totalorder %s91, %s92
    %p106 = scmp.eq.s32.totalorder %s16, 1
    %p107 = por %p105, %p106
    %p109 = scmp.ne.s32.totalorder %s92, %s108
    %p110 = scmp.eq.s32.totalorder %s16, 0
    %p111 = por %p109, %p110
    %s112 = ssub.s32 %s10, %s17
    %p113 = scmp.eq.s32.totalorder %s112, 0
    %s115 = sadd.s32 %s114, 1
    %s116 = scalar_select %p113, %s114, %s115
    %p119 = pneg %p113
    %p120 = scmp.eq.s32.totalorder %s10, 1
    %p121 = por %p119, %p120
    %p122 = scmp.ne.s32.totalorder %s114, %s117
    %p123 = scmp.eq.s32.totalorder %s10, 0
    %p124 = por %p122, %p123
    %p125 = scmp.ne.s32.totalorder %s114, %s117
    %p126 = scmp.eq.s32.totalorder %s15, 1
    %p127 = por %p125, %p126
    %p128 = scmp.ne.s32.totalorder %s117, %s118
    %p129 = scmp.eq.s32.totalorder %s15, 0
    %p130 = por %p128, %p129
    %p131 = scmp.ne.s32.totalorder %s117, %s118
    %p132 = scmp.eq.s32.totalorder %s16, 1
    %p133 = por %p131, %p132
    %p135 = scmp.ne.s32.totalorder %s118, %s134
    %p136 = scmp.eq.s32.totalorder %s16, 0
    %p137 = por %p135, %p136
    %p138 = scmp.le.s32.totalorder 1, %s10
    %p139 = scmp.lt.s32.totalorder %s10, 3
    %p140 = pnand %p138, %p139
    %p141 = pneg %p140
    // Predicated region
    $region9: #{dncnn_forward.11} parent=5 // pred_check
      _
    $region10: #{dncnn_forward.11} parent=5 // pred_check_branch
      %143 = sbr.rel (%p140) target = $region12
    $region11: #{dncnn_forward.11} parent=5 // pred_region
      %s144 = ssub.s32 %s10, 1
      // Predicated region
      $region13: #{dncnn_forward.11} parent=11 // pred_check
        %p145 = pneg %p57
      $region14: #{dncnn_forward.11} parent=11 // pred_check_branch
        %147 = sbr.rel (%p145) target = $region16
      $region15: #{dncnn_forward.11} parent=11 // pred_region
        _
      $region16: #{dncnn_forward.11} parent=11 // pred_fallthru
        _
      // Predicated region
      $region17: #{dncnn_forward.11} parent=11 // pred_check
        %p148 = pneg %p78
      $region18: #{dncnn_forward.11} parent=11 // pred_check_branch
        %150 = sbr.rel (%p148) target = $region20
      $region19: #{dncnn_forward.11} parent=11 // pred_region
        _
      $region20: #{dncnn_forward.11} parent=11 // pred_fallthru
        _
    $region12: #{dncnn_forward.11} parent=5 // pred_fallthru
      _
    %p151 = scmp.lt.s32.totalorder %s10, 2
    // Predicated region
    $region21: #{dncnn_forward.11} parent=5 // pred_check
      %p152 = pneg %p151
    $region22: #{dncnn_forward.11} parent=5 // pred_check_branch
      %154 = sbr.rel (%p152) target = $region24
    $region23: #{dncnn_forward.11} parent=5 // pred_region
      // Predicated region
      $region25: #{dncnn_forward.11} parent=23 // pred_check
        %p155 = pneg %p30
      $region26: #{dncnn_forward.11} parent=23 // pred_check_branch
        %157 = sbr.rel (%p155) target = $region28
      $region27: #{dncnn_forward.11} parent=23 // pred_region
        %s158 = smul.u32 32, %s10
        %p159 = scmp.lt.s32.totalorder %s158, 63
        %s160 = scalar_select %p159, %s158, 63
        %s161 = smul.addr %s160, 5
        %s162 = smul.addr %s161, 4
        %s163 = scalar_lea.vmem %s0, %s162
        %s164 = smul.u32 32, %s10
      $region28: #{dncnn_forward.11} parent=23 // pred_fallthru
        _
      // Predicated region
      $region29: #{dncnn_forward.11} parent=23 // pred_check
        %p165 = pneg %p98
      $region30: #{dncnn_forward.11} parent=23 // pred_check_branch
        %167 = sbr.rel (%p165) target = $region32
      $region31: #{dncnn_forward.11} parent=23 // pred_region
        %s168 = smul.u32 32, %s10
        %p169 = scmp.lt.s32.totalorder %s168, 63
        %s170 = scalar_select %p169, %s168, 63
        %s171 = smul.addr %s170, 8
        %s172 = scalar_lea.vmem %s3, %s171
        %s173 = smul.u32 32, %s10
      $region32: #{dncnn_forward.11} parent=23 // pred_fallthru
        _
    $region24: #{dncnn_forward.11} parent=5 // pred_fallthru
      _
    %p174 = scmp.le.s32.totalorder 1, %s10
    %p175 = scmp.lt.s32.totalorder %s10, 3
    %p176 = pnand %p174, %p175
    %p177 = pneg %p176
    // Predicated region
    $region33: #{dncnn_forward.11} parent=5 // pred_check
      _
    $region34: #{dncnn_forward.11} parent=5 // pred_check_branch
      %179 = sbr.rel (%p176) target = $region36
    $region35: #{dncnn_forward.11} parent=5 // pred_region
      %s180 = ssub.s32 %s10, 1
      %s181 = smul.u32 32, %s15
      %p182 = scmp.lt.s32.totalorder %s181, 63
      %s183 = scalar_select %p182, %s181, 63
      %s184 = smul.addr %s183, 5
      %s185 = smul.addr %s184, 4
      %s186 = scalar_lea.vmem %s0, %s185
      %p187 = pneg %p36
      %p188 = pneg %p33
      %p189 = pneg %p57
      %p190 = pneg %p54
      %p191 = pneg %p78
      %p192 = pneg %p75
      %s193 = smul.u32 32, %s15
      %p194 = scmp.lt.s32.totalorder %s193, 63
      %s195 = scalar_select %p194, %s193, 63
      %s196 = smul.addr %s195, 8
      %s197 = scalar_lea.vmem %s3, %s196
      %p198 = pneg %p104
      %p199 = pneg %p101
      %p200 = pneg %p130
      %p201 = pneg %p127
      %s202 = smul.u32 32, %s15
      %p203 = scmp.lt.s32.totalorder %s202, 63
      %s204 = scalar_select %p203, %s202, 63
      %s205 = smul.addr %s204, 8
      %s206 = scalar_lea.vmem %s4, %s205
      %s207 = smul.u32 32, %s15
      %p208 = scmp.lt.s32.totalorder %s207, 63
      %s209 = scalar_select %p208, %s207, 63
      %s210 = smul.addr %s209, 5
      %s211 = smul.addr %s210, 4
      %s212 = scalar_lea.vmem %s0, %s211
      %s213 = smul.u32 32, %s15
      %s214 = smul.u32 32, %s15
      %p215 = scmp.lt.s32.totalorder %s214, 63
      %s216 = scalar_select %p215, %s214, 63
      %s217 = smul.addr %s216, 8
      %s218 = scalar_lea.vmem %s3, %s217
      %s219 = smul.u32 32, %s15
      %s220 = smul.u32 32, %s15
      %p221 = scmp.lt.s32.totalorder %s220, 63
      %s222 = scalar_select %p221, %s220, 63
      %s223 = smul.addr %s222, 8
      %s224 = scalar_lea.vmem %s4, %s223
      %s225 = smul.u32 32, %s15
      %v227 = vld [vmem:[%s212] sm:$0xff]
      %v228 = vld [vmem:[%s212 + $0x8] sm:$0xff]
      %v229 = vld [vmem:[%s212 + $0x10] sm:$0xf]
      %v230 = vld [vmem:[%s212 + $0x14] sm:$0xff]
      %v231 = vld [vmem:[%s212 + $0x1c] sm:$0xff]
      %v232 = vld [vmem:[%s212 + $0x24] sm:$0xf]
      %v233 = vld [vmem:[%s212 + $0x28] sm:$0xff]
      %v234 = vld [vmem:[%s212 + $0x30] sm:$0xff]
      %v235 = vld [vmem:[%s212 + $0x38] sm:$0xf]
      %v236 = vld [vmem:[%s212 + $0x3c] sm:$0xff]
      %v237 = vld [vmem:[%s212 + $0x44] sm:$0xff]
      %v238 = vld [vmem:[%s212 + $0x4c] sm:$0xf]
      %v239 = vld [vmem:[%s212 + $0x50] sm:$0xff]
      %v240 = vld [vmem:[%s212 + $0x58] sm:$0xff]
      %v241 = vld [vmem:[%s212 + $0x60] sm:$0xf]
      %v242 = vld [vmem:[%s212 + $0x64] sm:$0xff]
      %v243 = vld [vmem:[%s212 + $0x6c] sm:$0xff]
      %v244 = vld [vmem:[%s212 + $0x74] sm:$0xf]
      %v245 = vld [vmem:[%s212 + $0x78] sm:$0xff]
      %v246 = vld [vmem:[%s212 + $0x80] sm:$0xff]
      %v247 = vld [vmem:[%s212 + $0x88] sm:$0xf]
      %v248 = vld [vmem:[%s212 + $0x8c] sm:$0xff]
      %v249 = vld [vmem:[%s212 + $0x94] sm:$0xff]
      %v250 = vld [vmem:[%s212 + $0x9c] sm:$0xf]
      %v251 = vld [vmem:[%s212 + $0xa0] sm:$0xff]
      %v252 = vld [vmem:[%s212 + $0xa8] sm:$0xff]
      %v253 = vld [vmem:[%s212 + $0xb0] sm:$0xf]
      %v254 = vld [vmem:[%s212 + $0xb4] sm:$0xff]
      %v255 = vld [vmem:[%s212 + $0xbc] sm:$0xff]
      %v256 = vld [vmem:[%s212 + $0xc4] sm:$0xf]
      %v257 = vld [vmem:[%s212 + $0xc8] sm:$0xff]
      %v258 = vld [vmem:[%s212 + $0xd0] sm:$0xff]
      %v259 = vld [vmem:[%s212 + $0xd8] sm:$0xf]
      %v260 = vld [vmem:[%s212 + $0xdc] sm:$0xff]
      %v261 = vld [vmem:[%s212 + $0xe4] sm:$0xff]
      %v262 = vld [vmem:[%s212 + $0xec] sm:$0xf]
      %v263 = vld [vmem:[%s212 + $0xf0] sm:$0xff]
      %v264 = vld [vmem:[%s212 + $0xf8] sm:$0xff]
      %v265 = vld [vmem:[%s212 + $0x100] sm:$0xf]
      %v266 = vld [vmem:[%s212 + $0x104] sm:$0xff]
      %v267 = vld [vmem:[%s212 + $0x10c] sm:$0xff]
      %v268 = vld [vmem:[%s212 + $0x114] sm:$0xf]
      %v269 = vld [vmem:[%s212 + $0x118] sm:$0xff]
      %v270 = vld [vmem:[%s212 + $0x120] sm:$0xff]
      %v271 = vld [vmem:[%s212 + $0x128] sm:$0xf]
      %v272 = vld [vmem:[%s212 + $0x12c] sm:$0xff]
      %v273 = vld [vmem:[%s212 + $0x134] sm:$0xff]
      %v274 = vld [vmem:[%s212 + $0x13c] sm:$0xf]
      %v275 = vld [vmem:[%s212 + $0x140] sm:$0xff]
      %v276 = vld [vmem:[%s212 + $0x148] sm:$0xff]
      %v277 = vld [vmem:[%s212 + $0x150] sm:$0xf]
      %v278 = vld [vmem:[%s212 + $0x154] sm:$0xff]
      %v279 = vld [vmem:[%s212 + $0x15c] sm:$0xff]
      %v280 = vld [vmem:[%s212 + $0x164] sm:$0xf]
      %v281 = vld [vmem:[%s212 + $0x168] sm:$0xff]
      %v282 = vld [vmem:[%s212 + $0x170] sm:$0xff]
      %v283 = vld [vmem:[%s212 + $0x178] sm:$0xf]
      %v284 = vld [vmem:[%s212 + $0x17c] sm:$0xff]
      %v285 = vld [vmem:[%s212 + $0x184] sm:$0xff]
      %v286 = vld [vmem:[%s212 + $0x18c] sm:$0xf]
      %v287 = vld [vmem:[%s212 + $0x190] sm:$0xff]
      %v288 = vld [vmem:[%s212 + $0x198] sm:$0xff]
      %v289 = vld [vmem:[%s212 + $0x1a0] sm:$0xf]
      %v290 = vld [vmem:[%s212 + $0x1a4] sm:$0xff]
      %v291 = vld [vmem:[%s212 + $0x1ac] sm:$0xff]
      %v292 = vld [vmem:[%s212 + $0x1b4] sm:$0xf]
      %v293 = vld [vmem:[%s212 + $0x1b8] sm:$0xff]
      %v294 = vld [vmem:[%s212 + $0x1c0] sm:$0xff]
      %v295 = vld [vmem:[%s212 + $0x1c8] sm:$0xf]
      %v296 = vld [vmem:[%s212 + $0x1cc] sm:$0xff]
      %v297 = vld [vmem:[%s212 + $0x1d4] sm:$0xff]
      %v298 = vld [vmem:[%s212 + $0x1dc] sm:$0xf]
      %v299 = vld [vmem:[%s212 + $0x1e0] sm:$0xff]
      %v300 = vld [vmem:[%s212 + $0x1e8] sm:$0xff]
      %v301 = vld [vmem:[%s212 + $0x1f0] sm:$0xf]
      %v302 = vld [vmem:[%s212 + $0x1f4] sm:$0xff]
      %v303 = vld [vmem:[%s212 + $0x1fc] sm:$0xff]
      %v304 = vld [vmem:[%s212 + $0x204] sm:$0xf]
      %v305 = vld [vmem:[%s212 + $0x208] sm:$0xff]
      %v306 = vld [vmem:[%s212 + $0x210] sm:$0xff]
      %v307 = vld [vmem:[%s212 + $0x218] sm:$0xf]
      %v308 = vld [vmem:[%s212 + $0x21c] sm:$0xff]
      %v309 = vld [vmem:[%s212 + $0x224] sm:$0xff]
      %v310 = vld [vmem:[%s212 + $0x22c] sm:$0xf]
      %v311 = vld [vmem:[%s212 + $0x230] sm:$0xff]
      %v312 = vld [vmem:[%s212 + $0x238] sm:$0xff]
      %v313 = vld [vmem:[%s212 + $0x240] sm:$0xf]
      %v314 = vld [vmem:[%s212 + $0x244] sm:$0xff]
      %v315 = vld [vmem:[%s212 + $0x24c] sm:$0xff]
      %v316 = vld [vmem:[%s212 + $0x254] sm:$0xf]
      %v317 = vld [vmem:[%s212 + $0x258] sm:$0xff]
      %v318 = vld [vmem:[%s212 + $0x260] sm:$0xff]
      %v319 = vld [vmem:[%s212 + $0x268] sm:$0xf]
      %v320 = vld [vmem:[%s212 + $0x26c] sm:$0xff]
      %v321 = vld [vmem:[%s212 + $0x274] sm:$0xff]
      %v322 = vld [vmem:[%s212 + $0x27c] sm:$0xf]
      %v323 = vld [vmem:[%s1] sm:$0xf]
      %v324 = vld [vmem:[%s1 + $0x4] sm:$0xf]
      %v325 = vld [vmem:[%s1 + $0x8] sm:$0xf]
      %v326 = vld [vmem:[%s1 + $0xc] sm:$0xf]
      %v327 = vld [vmem:[%s1 + $0x10] sm:$0xf]
      %v328 = vld [vmem:[%s1 + $0x14] sm:$0xf]
      %v329 = vld [vmem:[%s1 + $0x18] sm:$0xf]
      %v330 = vld [vmem:[%s1 + $0x1c] sm:$0xf]
      %v331 = vld [vmem:[%s1 + $0x20] sm:$0xf]
      %v332 = vld [vmem:[%s1 + $0x24] sm:$0xf]
      %v333 = vld [vmem:[%s1 + $0x28] sm:$0xf]
      %v334 = vld [vmem:[%s1 + $0x2c] sm:$0xf]
      %v335 = vld [vmem:[%s1 + $0x30] sm:$0xf]
      %v336 = vld [vmem:[%s1 + $0x34] sm:$0xf]
      %v337 = vld [vmem:[%s1 + $0x38] sm:$0xf]
      %v338 = vld [vmem:[%s1 + $0x3c] sm:$0xf]
      %v339 = vld [vmem:[%s1 + $0x40] sm:$0xf]
      %v340 = vld [vmem:[%s1 + $0x44] sm:$0xf]
      %v341 = vld [vmem:[%s1 + $0x48] sm:$0xf]
      %v342 = vld [vmem:[%s1 + $0x4c] sm:$0xf]
      %v343 = vld [vmem:[%s1 + $0x50] sm:$0xf]
      %v344 = vld [vmem:[%s1 + $0x54] sm:$0xf]
      %v345 = vld [vmem:[%s1 + $0x58] sm:$0xf]
      %v346 = vld [vmem:[%s1 + $0x5c] sm:$0xf]
      %v347 = vld [vmem:[%s1 + $0x60] sm:$0xf]
      %v348 = vld [vmem:[%s1 + $0x64] sm:$0xf]
      %v349 = vld [vmem:[%s1 + $0x68] sm:$0xf]
      %v350 = vld [vmem:[%s1 + $0x6c] sm:$0xf]
      %v351 = vld [vmem:[%s1 + $0x70] sm:$0xf]
      %v352 = vld [vmem:[%s1 + $0x74] sm:$0xf]
      %v353 = vld [vmem:[%s1 + $0x78] sm:$0xf]
      %v354 = vld [vmem:[%s1 + $0x7c] sm:$0xf]
      %v355 = vld [vmem:[%s1 + $0x80] sm:$0xf]
      %v356 = vld [vmem:[%s1 + $0x84] sm:$0xf]
      %v357 = vld [vmem:[%s1 + $0x88] sm:$0xf]
      %v358 = vld [vmem:[%s1 + $0x8c] sm:$0xf]
      %v359 = vld [vmem:[%s1 + $0x90] sm:$0xf]
      %v360 = vld [vmem:[%s1 + $0x94] sm:$0xf]
      %v361 = vld [vmem:[%s1 + $0x98] sm:$0xf]
      %v362 = vld [vmem:[%s1 + $0x9c] sm:$0xf]
      %v363 = vld [vmem:[%s1 + $0xa0] sm:$0xf]
      %v364 = vld [vmem:[%s1 + $0xa4] sm:$0xf]
      %v365 = vld [vmem:[%s1 + $0xa8] sm:$0xf]
      %v366 = vld [vmem:[%s1 + $0xac] sm:$0xf]
      %v367 = vld [vmem:[%s1 + $0xb0] sm:$0xf]
      %v368 = vld [vmem:[%s1 + $0xb4] sm:$0xf]
      %v369 = vld [vmem:[%s1 + $0xb8] sm:$0xf]
      %v370 = vld [vmem:[%s1 + $0xbc] sm:$0xf]
      %v371 = vld [vmem:[%s1 + $0xc0] sm:$0xf]
      %v372 = vld [vmem:[%s1 + $0xc4] sm:$0xf]
      %v373 = vld [vmem:[%s1 + $0xc8] sm:$0xf]
      %v374 = vld [vmem:[%s1 + $0xcc] sm:$0xf]
      %v375 = vld [vmem:[%s1 + $0xd0] sm:$0xf]
      %v376 = vld [vmem:[%s1 + $0xd4] sm:$0xf]
      %v377 = vld [vmem:[%s1 + $0xd8] sm:$0xf]
      %v378 = vld [vmem:[%s1 + $0xdc] sm:$0xf]
      %v379 = vld [vmem:[%s1 + $0xe0] sm:$0xf]
      %v380 = vld [vmem:[%s1 + $0xe4] sm:$0xf]
      %v381 = vld [vmem:[%s1 + $0xe8] sm:$0xf]
      %v382 = vld [vmem:[%s1 + $0xec] sm:$0xf]
      %v383 = vld [vmem:[%s1 + $0xf0] sm:$0xf]
      %v384 = vld [vmem:[%s1 + $0xf4] sm:$0xf]
      %v385 = vld [vmem:[%s1 + $0xf8] sm:$0xf]
      %v386 = vld [vmem:[%s1 + $0xfc] sm:$0xf]
      %v387 = vld [vmem:[%s1 + $0x100] sm:$0xf]
      %v388 = vld [vmem:[%s1 + $0x104] sm:$0xf]
      %v389 = vld [vmem:[%s1 + $0x108] sm:$0xf]
      %v390 = vld [vmem:[%s1 + $0x10c] sm:$0xf]
      %v391 = vld [vmem:[%s1 + $0x110] sm:$0xf]
      %v392 = vld [vmem:[%s1 + $0x114] sm:$0xf]
      %v393 = vld [vmem:[%s1 + $0x118] sm:$0xf]
      %v394 = vld [vmem:[%s1 + $0x11c] sm:$0xf]
      %v395 = vld [vmem:[%s2] sm:$0x1]
      %v397 = vlaneseq
      %v398 = vshrl.u32 %v397, 7
      %v399 = vsub.s32 0, %v398
      %v400 = vrot.slane %v395, %v399
      %v498 = vunpack.c.l.b16 %v227
      %v499 = vunpack.c.h.b16 %v227
      %v500 = vunpack.c.l.b16 %v228
      %v501 = vunpack.c.h.b16 %v228
      %v502 = vunpack.c.l.b16 %v229
      %v503 = vunpack.c.l.b16 %v230
      %v504 = vunpack.c.h.b16 %v230
      %v505 = vunpack.c.l.b16 %v231
      %v506 = vunpack.c.h.b16 %v231
      %v507 = vunpack.c.l.b16 %v232
      %v508 = vunpack.c.l.b16 %v233
      %v509 = vunpack.c.h.b16 %v233
      %v510 = vunpack.c.l.b16 %v234
      %v511 = vunpack.c.h.b16 %v234
      %v512 = vunpack.c.l.b16 %v235
      %v513 = vunpack.c.l.b16 %v236
      %v514 = vunpack.c.h.b16 %v236
      %v515 = vunpack.c.l.b16 %v237
      %v516 = vunpack.c.h.b16 %v237
      %v517 = vunpack.c.l.b16 %v238
      %v518 = vunpack.c.l.b16 %v239
      %v519 = vunpack.c.h.b16 %v239
      %v520 = vunpack.c.l.b16 %v240
      %v521 = vunpack.c.h.b16 %v240
      %v522 = vunpack.c.l.b16 %v241
      %v523 = vunpack.c.l.b16 %v242
      %v524 = vunpack.c.h.b16 %v242
      %v525 = vunpack.c.l.b16 %v243
      %v526 = vunpack.c.h.b16 %v243
      %v527 = vunpack.c.l.b16 %v244
      %v528 = vunpack.c.l.b16 %v245
      %v529 = vunpack.c.h.b16 %v245
      %v530 = vunpack.c.l.b16 %v246
      %v531 = vunpack.c.h.b16 %v246
      %v532 = vunpack.c.l.b16 %v247
      %v533 = vunpack.c.l.b16 %v248
      %v534 = vunpack.c.h.b16 %v248
      %v535 = vunpack.c.l.b16 %v249
      %v536 = vunpack.c.h.b16 %v249
      %v537 = vunpack.c.l.b16 %v250
      %v538 = vunpack.c.l.b16 %v251
      %v539 = vunpack.c.h.b16 %v251
      %v540 = vunpack.c.l.b16 %v252
      %v541 = vunpack.c.h.b16 %v252
      %v542 = vunpack.c.l.b16 %v253
      %v543 = vunpack.c.l.b16 %v254
      %v544 = vunpack.c.h.b16 %v254
      %v545 = vunpack.c.l.b16 %v255
      %v546 = vunpack.c.h.b16 %v255
      %v547 = vunpack.c.l.b16 %v256
      %v548 = vunpack.c.l.b16 %v257
      %v549 = vunpack.c.h.b16 %v257
      %v550 = vunpack.c.l.b16 %v258
      %v551 = vunpack.c.h.b16 %v258
      %v552 = vunpack.c.l.b16 %v259
      %v553 = vunpack.c.l.b16 %v260
      %v554 = vunpack.c.h.b16 %v260
      %v555 = vunpack.c.l.b16 %v261
      %v556 = vunpack.c.h.b16 %v261
      %v557 = vunpack.c.l.b16 %v262
      %v558 = vunpack.c.l.b16 %v263
      %v559 = vunpack.c.h.b16 %v263
      %v560 = vunpack.c.l.b16 %v264
      %v561 = vunpack.c.h.b16 %v264
      %v562 = vunpack.c.l.b16 %v265
      %v563 = vunpack.c.l.b16 %v266
      %v564 = vunpack.c.h.b16 %v266
      %v565 = vunpack.c.l.b16 %v267
      %v566 = vunpack.c.h.b16 %v267
      %v567 = vunpack.c.l.b16 %v268
      %v568 = vunpack.c.l.b16 %v269
      %v569 = vunpack.c.h.b16 %v269
      %v570 = vunpack.c.l.b16 %v270
      %v571 = vunpack.c.h.b16 %v270
      %v572 = vunpack.c.l.b16 %v271
      %v573 = vunpack.c.l.b16 %v272
      %v574 = vunpack.c.h.b16 %v272
      %v575 = vunpack.c.l.b16 %v273
      %v576 = vunpack.c.h.b16 %v273
      %v577 = vunpack.c.l.b16 %v274
      %v578 = vunpack.c.l.b16 %v275
      %v579 = vunpack.c.h.b16 %v275
      %v580 = vunpack.c.l.b16 %v276
      %v581 = vunpack.c.h.b16 %v276
      %v582 = vunpack.c.l.b16 %v277
      %v583 = vunpack.c.l.b16 %v278
      %v584 = vunpack.c.h.b16 %v278
      %v585 = vunpack.c.l.b16 %v279
      %v586 = vunpack.c.h.b16 %v279
      %v587 = vunpack.c.l.b16 %v280
      %v588 = vunpack.c.l.b16 %v281
      %v589 = vunpack.c.h.b16 %v281
      %v590 = vunpack.c.l.b16 %v282
      %v591 = vunpack.c.h.b16 %v282
      %v592 = vunpack.c.l.b16 %v283
      %v593 = vunpack.c.l.b16 %v284
      %v594 = vunpack.c.h.b16 %v284
      %v595 = vunpack.c.l.b16 %v285
      %v596 = vunpack.c.h.b16 %v285
      %v597 = vunpack.c.l.b16 %v286
      %v598 = vunpack.c.l.b16 %v287
      %v599 = vunpack.c.h.b16 %v287
      %v600 = vunpack.c.l.b16 %v288
      %v601 = vunpack.c.h.b16 %v288
      %v602 = vunpack.c.l.b16 %v289
      %v603 = vunpack.c.l.b16 %v290
      %v604 = vunpack.c.h.b16 %v290
      %v605 = vunpack.c.l.b16 %v291
      %v606 = vunpack.c.h.b16 %v291
      %v607 = vunpack.c.l.b16 %v292
      %v608 = vunpack.c.l.b16 %v293
      %v609 = vunpack.c.h.b16 %v293
      %v610 = vunpack.c.l.b16 %v294
      %v611 = vunpack.c.h.b16 %v294
      %v612 = vunpack.c.l.b16 %v295
      %v613 = vunpack.c.l.b16 %v296
      %v614 = vunpack.c.h.b16 %v296
      %v615 = vunpack.c.l.b16 %v297
      %v616 = vunpack.c.h.b16 %v297
      %v617 = vunpack.c.l.b16 %v298
      %v618 = vunpack.c.l.b16 %v299
      %v619 = vunpack.c.h.b16 %v299
      %v620 = vunpack.c.l.b16 %v300
      %v621 = vunpack.c.h.b16 %v300
      %v622 = vunpack.c.l.b16 %v301
      %v623 = vunpack.c.l.b16 %v302
      %v624 = vunpack.c.h.b16 %v302
      %v625 = vunpack.c.l.b16 %v303
      %v626 = vunpack.c.h.b16 %v303
      %v627 = vunpack.c.l.b16 %v304
      %v628 = vunpack.c.l.b16 %v305
      %v629 = vunpack.c.h.b16 %v305
      %v630 = vunpack.c.l.b16 %v306
      %v631 = vunpack.c.h.b16 %v306
      %v632 = vunpack.c.l.b16 %v307
      %v633 = vunpack.c.l.b16 %v308
      %v634 = vunpack.c.h.b16 %v308
      %v635 = vunpack.c.l.b16 %v309
      %v636 = vunpack.c.h.b16 %v309
      %v637 = vunpack.c.l.b16 %v310
      %v638 = vunpack.c.l.b16 %v311
      %v639 = vunpack.c.h.b16 %v311
      %v640 = vunpack.c.l.b16 %v312
      %v641 = vunpack.c.h.b16 %v312
      %v642 = vunpack.c.l.b16 %v313
      %v643 = vunpack.c.l.b16 %v314
      %v644 = vunpack.c.h.b16 %v314
      %v645 = vunpack.c.l.b16 %v315
      %v646 = vunpack.c.h.b16 %v315
      %v647 = vunpack.c.l.b16 %v316
      %v648 = vunpack.c.l.b16 %v317
      %v649 = vunpack.c.h.b16 %v317
      %v650 = vunpack.c.l.b16 %v318
      %v651 = vunpack.c.h.b16 %v318
      %v652 = vunpack.c.l.b16 %v319
      %v653 = vunpack.c.l.b16 %v320
      %v654 = vunpack.c.h.b16 %v320
      %v655 = vunpack.c.l.b16 %v321
      %v656 = vunpack.c.h.b16 %v321
      %v657 = vunpack.c.l.b16 %v322
      %v658 = vpack.c.b16 %v503, %v498
      %v659 = vpack.c.b16 %v504, %v499
      %v660 = vpack.c.b16 %v505, %v500
      %v661 = vpack.c.b16 %v506, %v501
      %v662 = vpack.c.b16 %v507, %v502
      %v663 = vpack.c.b16 %v513, %v508
      %v664 = vpack.c.b16 %v514, %v509
      %v665 = vpack.c.b16 %v515, %v510
      %v666 = vpack.c.b16 %v516, %v511
      %v667 = vpack.c.b16 %v517, %v512
      %v668 = vpack.c.b16 %v523, %v518
      %v669 = vpack.c.b16 %v524, %v519
      %v670 = vpack.c.b16 %v525, %v520
      %v671 = vpack.c.b16 %v526, %v521
      %v672 = vpack.c.b16 %v527, %v522
      %v673 = vpack.c.b16 %v533, %v528
      %v674 = vpack.c.b16 %v534, %v529
      %v675 = vpack.c.b16 %v535, %v530
      %v676 = vpack.c.b16 %v536, %v531
      %v677 = vpack.c.b16 %v537, %v532
      %v678 = vpack.c.b16 %v543, %v538
      %v679 = vpack.c.b16 %v544, %v539
      %v680 = vpack.c.b16 %v545, %v540
      %v681 = vpack.c.b16 %v546, %v541
      %v682 = vpack.c.b16 %v547, %v542
      %v683 = vpack.c.b16 %v553, %v548
      %v684 = vpack.c.b16 %v554, %v549
      %v685 = vpack.c.b16 %v555, %v550
      %v686 = vpack.c.b16 %v556, %v551
      %v687 = vpack.c.b16 %v557, %v552
      %v688 = vpack.c.b16 %v563, %v558
      %v689 = vpack.c.b16 %v564, %v559
      %v690 = vpack.c.b16 %v565, %v560
      %v691 = vpack.c.b16 %v566, %v561
      %v692 = vpack.c.b16 %v567, %v562
      %v693 = vpack.c.b16 %v573, %v568
      %v694 = vpack.c.b16 %v574, %v569
      %v695 = vpack.c.b16 %v575, %v570
      %v696 = vpack.c.b16 %v576, %v571
      %v697 = vpack.c.b16 %v577, %v572
      %v698 = vpack.c.b16 %v583, %v578
      %v699 = vpack.c.b16 %v584, %v579
      %v700 = vpack.c.b16 %v585, %v580
      %v701 = vpack.c.b16 %v586, %v581
      %v702 = vpack.c.b16 %v587, %v582
      %v703 = vpack.c.b16 %v593, %v588
      %v704 = vpack.c.b16 %v594, %v589
      %v705 = vpack.c.b16 %v595, %v590
      %v706 = vpack.c.b16 %v596, %v591
      %v707 = vpack.c.b16 %v597, %v592
      %v708 = vpack.c.b16 %v603, %v598
      %v709 = vpack.c.b16 %v604, %v599
      %v710 = vpack.c.b16 %v605, %v600
      %v711 = vpack.c.b16 %v606, %v601
      %v712 = vpack.c.b16 %v607, %v602
      %v713 = vpack.c.b16 %v613, %v608
      %v714 = vpack.c.b16 %v614, %v609
      %v715 = vpack.c.b16 %v615, %v610
      %v716 = vpack.c.b16 %v616, %v611
      %v717 = vpack.c.b16 %v617, %v612
      %v718 = vpack.c.b16 %v623, %v618
      %v719 = vpack.c.b16 %v624, %v619
      %v720 = vpack.c.b16 %v625, %v620
      %v721 = vpack.c.b16 %v626, %v621
      %v722 = vpack.c.b16 %v627, %v622
      %v723 = vpack.c.b16 %v633, %v628
      %v724 = vpack.c.b16 %v634, %v629
      %v725 = vpack.c.b16 %v635, %v630
      %v726 = vpack.c.b16 %v636, %v631
      %v727 = vpack.c.b16 %v637, %v632
      %v728 = vpack.c.b16 %v643, %v638
      %v729 = vpack.c.b16 %v644, %v639
      %v730 = vpack.c.b16 %v645, %v640
      %v731 = vpack.c.b16 %v646, %v641
      %v732 = vpack.c.b16 %v647, %v642
      %v733 = vpack.c.b16 %v653, %v648
      %v734 = vpack.c.b16 %v654, %v649
      %v735 = vpack.c.b16 %v655, %v650
      %v736 = vpack.c.b16 %v656, %v651
      %v737 = vpack.c.b16 %v657, %v652
      %v874 = vunpack.c.l.b16 %v323
      %v875 = vunpack.c.l.b16 %v324
      %v876 = vunpack.c.l.b16 %v325
      %v877 = vunpack.c.l.b16 %v326
      %v878 = vunpack.c.l.b16 %v327
      %v879 = vunpack.c.l.b16 %v328
      %v880 = vunpack.c.l.b16 %v329
      %v881 = vunpack.c.l.b16 %v330
      %v882 = vunpack.c.l.b16 %v331
      %v883 = vunpack.c.l.b16 %v332
      %v884 = vunpack.c.l.b16 %v333
      %v885 = vunpack.c.l.b16 %v334
      %v886 = vunpack.c.l.b16 %v335
      %v887 = vunpack.c.l.b16 %v336
      %v888 = vunpack.c.l.b16 %v337
      %v889 = vunpack.c.l.b16 %v338
      %v890 = vunpack.c.l.b16 %v339
      %v891 = vunpack.c.l.b16 %v340
      %v892 = vunpack.c.l.b16 %v341
      %v893 = vunpack.c.l.b16 %v342
      %v894 = vunpack.c.l.b16 %v343
      %v895 = vunpack.c.l.b16 %v344
      %v896 = vunpack.c.l.b16 %v345
      %v897 = vunpack.c.l.b16 %v346
      %v898 = vunpack.c.l.b16 %v347
      %v899 = vunpack.c.l.b16 %v348
      %v900 = vunpack.c.l.b16 %v349
      %v901 = vunpack.c.l.b16 %v350
      %v902 = vunpack.c.l.b16 %v351
      %v903 = vunpack.c.l.b16 %v352
      %v904 = vunpack.c.l.b16 %v353
      %v905 = vunpack.c.l.b16 %v354
      %v906 = vunpack.c.l.b16 %v355
      %v907 = vunpack.c.l.b16 %v356
      %v908 = vunpack.c.l.b16 %v357
      %v909 = vunpack.c.l.b16 %v358
      %v910 = vunpack.c.l.b16 %v359
      %v911 = vunpack.c.l.b16 %v360
      %v912 = vunpack.c.l.b16 %v361
      %v913 = vunpack.c.l.b16 %v362
      %v914 = vunpack.c.l.b16 %v363
      %v915 = vunpack.c.l.b16 %v364
      %v916 = vunpack.c.l.b16 %v365
      %v917 = vunpack.c.l.b16 %v366
      %v918 = vunpack.c.l.b16 %v367
      %v919 = vunpack.c.l.b16 %v368
      %v920 = vunpack.c.l.b16 %v369
      %v921 = vunpack.c.l.b16 %v370
      %v922 = vunpack.c.l.b16 %v371
      %v923 = vunpack.c.l.b16 %v372
      %v924 = vunpack.c.l.b16 %v373
      %v925 = vunpack.c.l.b16 %v374
      %v926 = vunpack.c.l.b16 %v375
      %v927 = vunpack.c.l.b16 %v376
      %v928 = vunpack.c.l.b16 %v377
      %v929 = vunpack.c.l.b16 %v378
      %v930 = vunpack.c.l.b16 %v379
      %v931 = vunpack.c.l.b16 %v380
      %v932 = vunpack.c.l.b16 %v381
      %v933 = vunpack.c.l.b16 %v382
      %v934 = vunpack.c.l.b16 %v383
      %v935 = vunpack.c.l.b16 %v384
      %v936 = vunpack.c.l.b16 %v385
      %v937 = vunpack.c.l.b16 %v386
      %v938 = vunpack.c.l.b16 %v387
      %v939 = vunpack.c.l.b16 %v388
      %v940 = vunpack.c.l.b16 %v389
      %v941 = vunpack.c.l.b16 %v390
      %v942 = vunpack.c.l.b16 %v391
      %v943 = vunpack.c.l.b16 %v392
      %v944 = vunpack.c.l.b16 %v393
      %v945 = vunpack.c.l.b16 %v394
      %v946 = vpack.c.b16 %v875, %v874
      %v947 = vpack.c.b16 %v877, %v876
      %v948 = vpack.c.b16 %v879, %v878
      %v949 = vpack.c.b16 %v881, %v880
      %v950 = vpack.c.b16 %v883, %v882
      %v951 = vpack.c.b16 %v885, %v884
      %v952 = vpack.c.b16 %v887, %v886
      %v953 = vpack.c.b16 %v889, %v888
      %v954 = vpack.c.b16 %v891, %v890
      %v955 = vpack.c.b16 %v893, %v892
      %v956 = vpack.c.b16 %v895, %v894
      %v957 = vpack.c.b16 %v897, %v896
      %v958 = vpack.c.b16 %v899, %v898
      %v959 = vpack.c.b16 %v901, %v900
      %v960 = vpack.c.b16 %v903, %v902
      %v961 = vpack.c.b16 %v905, %v904
      %v962 = vpack.c.b16 %v907, %v906
      %v963 = vpack.c.b16 %v909, %v908
      %v964 = vpack.c.b16 %v911, %v910
      %v965 = vpack.c.b16 %v913, %v912
      %v966 = vpack.c.b16 %v915, %v914
      %v967 = vpack.c.b16 %v917, %v916
      %v968 = vpack.c.b16 %v919, %v918
      %v969 = vpack.c.b16 %v921, %v920
      %v970 = vpack.c.b16 %v923, %v922
      %v971 = vpack.c.b16 %v925, %v924
      %v972 = vpack.c.b16 %v927, %v926
      %v973 = vpack.c.b16 %v929, %v928
      %v974 = vpack.c.b16 %v931, %v930
      %v975 = vpack.c.b16 %v933, %v932
      %v976 = vpack.c.b16 %v935, %v934
      %v977 = vpack.c.b16 %v937, %v936
      %v978 = vpack.c.b16 %v939, %v938
      %v979 = vpack.c.b16 %v941, %v940
      %v980 = vpack.c.b16 %v943, %v942
      %v981 = vpack.c.b16 %v945, %v944
      %vm1018 = vcmask 523264
      %v1020 = vsel %vm1018, %v662, 0
      %v1023 = vsel %vm1018, %v667, 0
      %v1026 = vsel %vm1018, %v672, 0
      %v1029 = vsel %vm1018, %v677, 0
      %v1032 = vsel %vm1018, %v682, 0
      %v1035 = vsel %vm1018, %v687, 0
      %v1038 = vsel %vm1018, %v692, 0
      %v1041 = vsel %vm1018, %v697, 0
      %v1044 = vsel %vm1018, %v702, 0
      %v1047 = vsel %vm1018, %v707, 0
      %v1050 = vsel %vm1018, %v712, 0
      %v1053 = vsel %vm1018, %v717, 0
      %v1056 = vsel %vm1018, %v722, 0
      %v1059 = vsel %vm1018, %v727, 0
      %v1062 = vsel %vm1018, %v732, 0
      %v1065 = vsel %vm1018, %v737, 0
      %1067 = vmatprep.subr.bf16.mxu0 0
      %1068 = vmatpush1.bf16.msra.mxu0 %v946
      %1069 = vmatprep.subr.bf16.mxu0 0
      %1070 = vmatpush1.bf16.msra.mxu0 %v947
      %1071 = vmatprep.subr.bf16.mxu0 0
      %1072 = vmatpush1.bf16.msra.mxu0 %v948
      %1073 = vmatprep.subr.bf16.mxu0 0
      %1074 = vmatpush1.bf16.msra.mxu0 %v949
      %1075 = vmatprep.subr.bf16.mxu0 0
      %1076 = vmatpush1.bf16.msra.mxu0 %v950
      %1077 = vmatprep.subr.bf16.mxu0 0
      %1078 = vmatpush1.bf16.msra.mxu0 %v951
      %1079 = vmatprep.subr.bf16.mxu0 0
      %1080 = vmatpush1.bf16.msra.mxu0 %v952
      %1081 = vmatprep.subr.bf16.mxu0 0
      %1082 = vmatpush1.bf16.msra.mxu0 %v953
      %1083 = vmatprep.subr.bf16.mxu0 0
      %1084 = vmatpush1.bf16.msra.mxu0 %v954
      %1085 = vmatprep.subr.bf16.mxu0 0
      %1086 = vmatpush1.bf16.msra.mxu0 %v955
      %1087 = vmatprep.subr.bf16.mxu0 0
      %1088 = vmatpush1.bf16.msra.mxu0 %v956
      %1089 = vmatprep.subr.bf16.mxu0 0
      %1090 = vmatpush1.bf16.msra.mxu0 %v957
      %1091 = vmatprep.subr.bf16.mxu0 0
      %1092 = vmatpush1.bf16.msra.mxu0 %v958
      %1093 = vmatprep.subr.bf16.mxu0 0
      %1094 = vmatpush1.bf16.msra.mxu0 %v959
      %1095 = vmatprep.subr.bf16.mxu0 0
      %1096 = vmatpush1.bf16.msra.mxu0 %v960
      %1097 = vmatprep.subr.bf16.mxu0 0
      %1098 = vmatpush1.bf16.msra.mxu0 %v961
      %1099 = vmatprep.mubr.bf16.mxu0 %v659
      %1100 = vmatmul.mubr.bf16.gmra.mrb[0].mxu0 %v658
      %v1101 = vpop.f32.mrb[0].mxu0
      %v1102 = vadd.f32 %v400, %v1101
      %v1103 = vpop.f32.mrb[0].mxu0
      %v1104 = vpop.f32.mrb[0].mxu0
      %v1105 = vadd.f32 %v400, %v1104
      %v1106 = vpop.f32.mrb[0].mxu0
      %1107 = vmatprep.mubr.bf16.mxu0 %v664
      %1108 = vmatmul.mubr.bf16.gmra.mrb[0].mxu0 %v663
      %v1109 = vpop.f32.mrb[0].mxu0
      %v1110 = vadd.f32 %v400, %v1109
      %v1111 = vpop.f32.mrb[0].mxu0
      %v1112 = vpop.f32.mrb[0].mxu0
      %v1113 = vadd.f32 %v400, %v1112
      %v1114 = vpop.f32.mrb[0].mxu0
      %1115 = vmatprep.mubr.bf16.mxu0 %v669
      %1116 = vmatmul.mubr.bf16.gmra.mrb[0].mxu0 %v668
      %v1117 = vpop.f32.mrb[0].mxu0
      %v1118 = vadd.f32 %v400, %v1117
      %v1119 = vpop.f32.mrb[0].mxu0
      %v1120 = vpop.f32.mrb[0].mxu0
      %v1121 = vadd.f32 %v400, %v1120
      %v1122 = vpop.f32.mrb[0].mxu0
      %1123 = vmatprep.mubr.bf16.mxu0 %v674
      %1124 = vmatmul.mubr.bf16.gmra.mrb[0].mxu0 %v673
      %v1125 = vpop.f32.mrb[0].mxu0
      %v1126 = vadd.f32 %v400, %v1125
      %v1127 = vpop.f32.mrb[0].mxu0
      %v1128 = vpop.f32.mrb[0].mxu0
      %v1129 = vadd.f32 %v400, %v1128
      %v1130 = vpop.f32.mrb[0].mxu0
      %1131 = vmatprep.mubr.bf16.mxu0 %v679
      %1132 = vmatmul.mubr.bf16.gmra.mrb[0].mxu0 %v678
      %v1133 = vpop.f32.mrb[0].mxu0
      %v1134 = vadd.f32 %v400, %v1133
      %v1135 = vpop.f32.mrb[0].mxu0
      %v1136 = vpop.f32.mrb[0].mxu0
      %v1137 = vadd.f32 %v400, %v1136
      %v1138 = vpop.f32.mrb[0].mxu0
      %1139 = vmatprep.mubr.bf16.mxu0 %v684
      %1140 = vmatmul.mubr.bf16.gmra.mrb[0].mxu0 %v683
      %v1141 = vpop.f32.mrb[0].mxu0
      %v1142 = vadd.f32 %v400, %v1141
      %v1143 = vpop.f32.mrb[0].mxu0
      %v1144 = vpop.f32.mrb[0].mxu0
      %v1145 = vadd.f32 %v400, %v1144
      %v1146 = vpop.f32.mrb[0].mxu0
      %1147 = vmatprep.mubr.bf16.mxu0 %v689
      %1148 = vmatmul.mubr.bf16.gmra.mrb[0].mxu0 %v688
      %v1149 = vpop.f32.mrb[0].mxu0
      %v1150 = vadd.f32 %v400, %v1149
      %v1151 = vpop.f32.mrb[0].mxu0
      %v1152 = vpop.f32.mrb[0].mxu0
      %v1153 = vadd.f32 %v400, %v1152
      %v1154 = vpop.f32.mrb[0].mxu0
      %1155 = vmatprep.mubr.bf16.mxu0 %v694
      %1156 = vmatmul.mubr.bf16.gmra.mrb[0].mxu0 %v693
      %v1157 = vpop.f32.mrb[0].mxu0
      %v1158 = vadd.f32 %v400, %v1157
      %v1159 = vpop.f32.mrb[0].mxu0
      %v1160 = vpop.f32.mrb[0].mxu0
      %v1161 = vadd.f32 %v400, %v1160
      %v1162 = vpop.f32.mrb[0].mxu0
      %1163 = vmatprep.mubr.bf16.mxu0 %v699
      %1164 = vmatmul.mubr.bf16.gmra.mrb[0].mxu0 %v698
      %v1165 = vpop.f32.mrb[0].mxu0
      %v1166 = vadd.f32 %v400, %v1165
      %v1167 = vpop.f32.mrb[0].mxu0
      %v1168 = vpop.f32.mrb[0].mxu0
      %v1169 = vadd.f32 %v400, %v1168
      %v1170 = vpop.f32.mrb[0].mxu0
      %1171 = vmatprep.mubr.bf16.mxu0 %v704
      %1172 = vmatmul.mubr.bf16.gmra.mrb[0].mxu0 %v703
      %v1173 = vpop.f32.mrb[0].mxu0
      %v1174 = vadd.f32 %v400, %v1173
      %v1175 = vpop.f32.mrb[0].mxu0
      %v1176 = vpop.f32.mrb[0].mxu0
      %v1177 = vadd.f32 %v400, %v1176
      %v1178 = vpop.f32.mrb[0].mxu0
      %1179 = vmatprep.mubr.bf16.mxu0 %v709
      %1180 = vmatmul.mubr.bf16.gmra.mrb[0].mxu0 %v708
      %v1181 = vpop.f32.mrb[0].mxu0
      %v1182 = vadd.f32 %v400, %v1181
      %v1183 = vpop.f32.mrb[0].mxu0
      %v1184 = vpop.f32.mrb[0].mxu0
      %v1185 = vadd.f32 %v400, %v1184
      %v1186 = vpop.f32.mrb[0].mxu0
      %1187 = vmatprep.mubr.bf16.mxu0 %v714
      %1188 = vmatmul.mubr.bf16.gmra.mrb[0].mxu0 %v713
      %v1189 = vpop.f32.mrb[0].mxu0
      %v1190 = vadd.f32 %v400, %v1189
      %v1191 = vpop.f32.mrb[0].mxu0
      %v1192 = vpop.f32.mrb[0].mxu0
      %v1193 = vadd.f32 %v400, %v1192
      %v1194 = vpop.f32.mrb[0].mxu0
      %1195 = vmatprep.mubr.bf16.mxu0 %v719
      %1196 = vmatmul.mubr.bf16.gmra.mrb[0].mxu0 %v718
      %v1197 = vpop.f32.mrb[0].mxu0
      %v1198 = vadd.f32 %v400, %v1197
      %v1199 = vpop.f32.mrb[0].mxu0
      %v1200 = vpop.f32.mrb[0].mxu0
      %v1201 = vadd.f32 %v400, %v1200
      %v1202 = vpop.f32.mrb[0].mxu0
      %1203 = vmatprep.mubr.bf16.mxu0 %v724
      %1204 = vmatmul.mubr.bf16.gmra.mrb[0].mxu0 %v723
      %v1205 = vpop.f32.mrb[0].mxu0
      %v1206 = vadd.f32 %v400, %v1205
      %v1207 = vpop.f32.mrb[0].mxu0
      %v1208 = vpop.f32.mrb[0].mxu0
      %v1209 = vadd.f32 %v400, %v1208
      %v1210 = vpop.f32.mrb[0].mxu0
      %1211 = vmatprep.mubr.bf16.mxu0 %v729
      %1212 = vmatmul.mubr.bf16.gmra.mrb[0].mxu0 %v728
      %v1213 = vpop.f32.mrb[0].mxu0
      %v1214 = vadd.f32 %v400, %v1213
      %v1215 = vpop.f32.mrb[0].mxu0
      %v1216 = vpop.f32.mrb[0].mxu0
      %v1217 = vadd.f32 %v400, %v1216
      %v1218 = vpop.f32.mrb[0].mxu0
      %1219 = vmatprep.mubr.bf16.mxu0 %v734
      %1220 = vmatmul.mubr.bf16.gmra.mrb[0].mxu0 %v733
      %v1221 = vpop.f32.mrb[0].mxu0
      %v1222 = vadd.f32 %v400, %v1221
      %v1223 = vpop.f32.mrb[0].mxu0
      %v1224 = vpop.f32.mrb[0].mxu0
      %v1225 = vadd.f32 %v400, %v1224
      %v1226 = vpop.f32.mrb[0].mxu0
      %1227 = vdwg.mxu0
      %1228 = vmatprep.subr.bf16.mxu0 0
      %1229 = vmatpush1.bf16.msra.mxu0 %v962
      %1230 = vmatprep.subr.bf16.mxu0 0
      %1231 = vmatpush1.bf16.msra.mxu0 %v963
      %1232 = vmatprep.subr.bf16.mxu0 0
      %1233 = vmatpush1.bf16.msra.mxu0 %v964
      %1234 = vmatprep.subr.bf16.mxu0 0
      %1235 = vmatpush1.bf16.msra.mxu0 %v965
      %1236 = vmatprep.subr.bf16.mxu0 0
      %1237 = vmatpush1.bf16.msra.mxu0 %v966
      %1238 = vmatprep.subr.bf16.mxu0 0
      %1239 = vmatpush1.bf16.msra.mxu0 %v967
      %1240 = vmatprep.subr.bf16.mxu0 0
      %1241 = vmatpush1.bf16.msra.mxu0 %v968
      %1242 = vmatprep.subr.bf16.mxu0 0
      %1243 = vmatpush1.bf16.msra.mxu0 %v969
      %1244 = vmatprep.subr.bf16.mxu0 0
      %1245 = vmatpush1.bf16.msra.mxu0 %v970
      %1246 = vmatprep.subr.bf16.mxu0 0
      %1247 = vmatpush1.bf16.msra.mxu0 %v971
      %1248 = vmatprep.subr.bf16.mxu0 0
      %1249 = vmatpush1.bf16.msra.mxu0 %v972
      %1250 = vmatprep.subr.bf16.mxu0 0
      %1251 = vmatpush1.bf16.msra.mxu0 %v973
      %1252 = vmatprep.subr.bf16.mxu0 0
      %1253 = vmatpush1.bf16.msra.mxu0 %v974
      %1254 = vmatprep.subr.bf16.mxu0 0
      %1255 = vmatpush1.bf16.msra.mxu0 %v975
      %1256 = vmatprep.subr.bf16.mxu0 0
      %1257 = vmatpush1.bf16.msra.mxu0 %v976
      %1258 = vmatprep.subr.bf16.mxu0 0
      %1259 = vmatpush1.bf16.msra.mxu0 %v977
      %1260 = vmatprep.mubr.bf16.mxu0 %v661
      %1261 = vmatmul.mubr.bf16.gmra.mrb[0].mxu0 %v660
      %v1262 = vpop.f32.mrb[0].mxu0
      %v1263 = vadd.f32 %v1102, %v1262
      %v1264 = vpop.f32.mrb[0].mxu0
      %v1265 = vpop.f32.mrb[0].mxu0
      %v1266 = vadd.f32 %v1105, %v1265
      %v1267 = vpop.f32.mrb[0].mxu0
      %1268 = vmatprep.mubr.bf16.mxu0 %v666
      %1269 = vmatmul.mubr.bf16.gmra.mrb[0].mxu0 %v665
      %v1270 = vpop.f32.mrb[0].mxu0
      %v1271 = vadd.f32 %v1110, %v1270
      %v1272 = vpop.f32.mrb[0].mxu0
      %v1273 = vpop.f32.mrb[0].mxu0
      %v1274 = vadd.f32 %v1113, %v1273
      %v1275 = vpop.f32.mrb[0].mxu0
      %1276 = vmatprep.mubr.bf16.mxu0 %v671
      %1277 = vmatmul.mubr.bf16.gmra.mrb[0].mxu0 %v670
      %v1278 = vpop.f32.mrb[0].mxu0
      %v1279 = vadd.f32 %v1118, %v1278
      %v1280 = vpop.f32.mrb[0].mxu0
      %v1281 = vpop.f32.mrb[0].mxu0
      %v1282 = vadd.f32 %v1121, %v1281
      %v1283 = vpop.f32.mrb[0].mxu0
      %1284 = vmatprep.mubr.bf16.mxu0 %v676
      %1285 = vmatmul.mubr.bf16.gmra.mrb[0].mxu0 %v675
      %v1286 = vpop.f32.mrb[0].mxu0
      %v1287 = vadd.f32 %v1126, %v1286
      %v1288 = vpop.f32.mrb[0].mxu0
      %v1289 = vpop.f32.mrb[0].mxu0
      %v1290 = vadd.f32 %v1129, %v1289
      %v1291 = vpop.f32.mrb[0].mxu0
      %1292 = vmatprep.mubr.bf16.mxu0 %v681
      %1293 = vmatmul.mubr.bf16.gmra.mrb[0].mxu0 %v680
      %v1294 = vpop.f32.mrb[0].mxu0
      %v1295 = vadd.f32 %v1134, %v1294
      %v1296 = vpop.f32.mrb[0].mxu0
      %v1297 = vpop.f32.mrb[0].mxu0
      %v1298 = vadd.f32 %v1137, %v1297
      %v1299 = vpop.f32.mrb[0].mxu0
      %1300 = vmatprep.mubr.bf16.mxu0 %v686
      %1301 = vmatmul.mubr.bf16.gmra.mrb[0].mxu0 %v685
      %v1302 = vpop.f32.mrb[0].mxu0
      %v1303 = vadd.f32 %v1142, %v1302
      %v1304 = vpop.f32.mrb[0].mxu0
      %v1305 = vpop.f32.mrb[0].mxu0
      %v1306 = vadd.f32 %v1145, %v1305
      %v1307 = vpop.f32.mrb[0].mxu0
      %1308 = vmatprep.mubr.bf16.mxu0 %v691
      %1309 = vmatmul.mubr.bf16.gmra.mrb[0].mxu0 %v690
      %v1310 = vpop.f32.mrb[0].mxu0
      %v1311 = vadd.f32 %v1150, %v1310
      %v1312 = vpop.f32.mrb[0].mxu0
      %v1313 = vpop.f32.mrb[0].mxu0
      %v1314 = vadd.f32 %v1153, %v1313
      %v1315 = vpop.f32.mrb[0].mxu0
      %1316 = vmatprep.mubr.bf16.mxu0 %v696
      %1317 = vmatmul.mubr.bf16.gmra.mrb[0].mxu0 %v695
      %v1318 = vpop.f32.mrb[0].mxu0
      %v1319 = vadd.f32 %v1158, %v1318
      %v1320 = vpop.f32.mrb[0].mxu0
      %v1321 = vpop.f32.mrb[0].mxu0
      %v1322 = vadd.f32 %v1161, %v1321
      %v1323 = vpop.f32.mrb[0].mxu0
      %1324 = vmatprep.mubr.bf16.mxu0 %v701
      %1325 = vmatmul.mubr.bf16.gmra.mrb[0].mxu0 %v700
      %v1326 = vpop.f32.mrb[0].mxu0
      %v1327 = vadd.f32 %v1166, %v1326
      %v1328 = vpop.f32.mrb[0].mxu0
      %v1329 = vpop.f32.mrb[0].mxu0
      %v1330 = vadd.f32 %v1169, %v1329
      %v1331 = vpop.f32.mrb[0].mxu0
      %1332 = vmatprep.mubr.bf16.mxu0 %v706
      %1333 = vmatmul.mubr.bf16.gmra.mrb[0].mxu0 %v705
      %v1334 = vpop.f32.mrb[0].mxu0
      %v1335 = vadd.f32 %v1174, %v1334
      %v1336 = vpop.f32.mrb[0].mxu0
      %v1337 = vpop.f32.mrb[0].mxu0
      %v1338 = vadd.f32 %v1177, %v1337
      %v1339 = vpop.f32.mrb[0].mxu0
      %1340 = vmatprep.mubr.bf16.mxu0 %v711
      %1341 = vmatmul.mubr.bf16.gmra.mrb[0].mxu0 %v710
      %v1342 = vpop.f32.mrb[0].mxu0
      %v1343 = vadd.f32 %v1182, %v1342
      %v1344 = vpop.f32.mrb[0].mxu0
      %v1345 = vpop.f32.mrb[0].mxu0
      %v1346 = vadd.f32 %v1185, %v1345
      %v1347 = vpop.f32.mrb[0].mxu0
      %1348 = vmatprep.mubr.bf16.mxu0 %v716
      %1349 = vmatmul.mubr.bf16.gmra.mrb[0].mxu0 %v715
      %v1350 = vpop.f32.mrb[0].mxu0
      %v1351 = vadd.f32 %v1190, %v1350
      %v1352 = vpop.f32.mrb[0].mxu0
      %v1353 = vpop.f32.mrb[0].mxu0
      %v1354 = vadd.f32 %v1193, %v1353
      %v1355 = vpop.f32.mrb[0].mxu0
      %1356 = vmatprep.mubr.bf16.mxu0 %v721
      %1357 = vmatmul.mubr.bf16.gmra.mrb[0].mxu0 %v720
      %v1358 = vpop.f32.mrb[0].mxu0
      %v1359 = vadd.f32 %v1198, %v1358
      %v1360 = vpop.f32.mrb[0].mxu0
      %v1361 = vpop.f32.mrb[0].mxu0
      %v1362 = vadd.f32 %v1201, %v1361
      %v1363 = vpop.f32.mrb[0].mxu0
      %1364 = vmatprep.mubr.bf16.mxu0 %v726
      %1365 = vmatmul.mubr.bf16.gmra.mrb[0].mxu0 %v725
      %v1366 = vpop.f32.mrb[0].mxu0
      %v1367 = vadd.f32 %v1206, %v1366
      %v1368 = vpop.f32.mrb[0].mxu0
      %v1369 = vpop.f32.mrb[0].mxu0
      %v1370 = vadd.f32 %v1209, %v1369
      %v1371 = vpop.f32.mrb[0].mxu0
      %1372 = vmatprep.mubr.bf16.mxu0 %v731
      %1373 = vmatmul.mubr.bf16.gmra.mrb[0].mxu0 %v730
      %v1374 = vpop.f32.mrb[0].mxu0
      %v1375 = vadd.f32 %v1214, %v1374
      %v1376 = vpop.f32.mrb[0].mxu0
      %v1377 = vpop.f32.mrb[0].mxu0
      %v1378 = vadd.f32 %v1217, %v1377
      %v1379 = vpop.f32.mrb[0].mxu0
      %1380 = vmatprep.mubr.bf16.mxu0 %v736
      %1381 = vmatmul.mubr.bf16.gmra.mrb[0].mxu0 %v735
      %v1382 = vpop.f32.mrb[0].mxu0
      %v1383 = vadd.f32 %v1222, %v1382
      %v1384 = vpop.f32.mrb[0].mxu0
      %v1385 = vpop.f32.mrb[0].mxu0
      %v1386 = vadd.f32 %v1225, %v1385
      %v1387 = vpop.f32.mrb[0].mxu0
      %1388 = vdwg.mxu0
      %1389 = vmatprep.subr.bf16.mxu0 0
      %1390 = vmatpush1.bf16.msra.mxu0 %v978
      %1391 = vmatprep.subr.bf16.mxu0 0
      %1392 = vmatpush1.bf16.msra.mxu0 %v979
      %1393 = vmatprep.subr.bf16.mxu0 0
      %1394 = vmatpush1.bf16.msra.mxu0 %v980
      %1395 = vmatprep.subr.bf16.mxu0 0
      %1396 = vmatpush1.bf16.msra.mxu0 %v981
      %1397 = vmatprep.subr.bf16.mxu0 0
      %1398 = vmatpush1.bf16.msra.mxu0 0
      %1399 = vmatprep.subr.bf16.mxu0 0
      %1400 = vmatpush1.bf16.msra.mxu0 0
      %1401 = vmatprep.subr.bf16.mxu0 0
      %1402 = vmatpush1.bf16.msra.mxu0 0
      %1403 = vmatprep.subr.bf16.mxu0 0
      %1404 = vmatpush1.bf16.msra.mxu0 0
      %1405 = vmatprep.subr.bf16.mxu0 0
      %1406 = vmatpush1.bf16.msra.mxu0 0
      %1407 = vmatprep.subr.bf16.mxu0 0
      %1408 = vmatpush1.bf16.msra.mxu0 0
      %1409 = vmatprep.subr.bf16.mxu0 0
      %1410 = vmatpush1.bf16.msra.mxu0 0
      %1411 = vmatprep.subr.bf16.mxu0 0
      %1412 = vmatpush1.bf16.msra.mxu0 0
      %1413 = vmatprep.subr.bf16.mxu0 0
      %1414 = vmatpush1.bf16.msra.mxu0 0
      %1415 = vmatprep.subr.bf16.mxu0 0
      %1416 = vmatpush1.bf16.msra.mxu0 0
      %1417 = vmatprep.subr.bf16.mxu0 0
      %1418 = vmatpush1.bf16.msra.mxu0 0
      %1419 = vmatprep.subr.bf16.mxu0 0
      %1420 = vmatpush1.bf16.msra.mxu0 0
      %1421 = vmatprep.mubr.bf16.mxu0 0
      %1422 = vmatmul.mubr.bf16.gmra.mrb[0].mxu0 %v1020
      %v1423 = vpop.f32.mrb[0].mxu0
      %v1424 = vadd.f32 %v1263, %v1423
      %v1425 = vpop.f32.mrb[0].mxu0
      %v1426 = vpop.f32.mrb[0].mxu0
      %v1427 = vadd.f32 %v1266, %v1426
      %v1428 = vpop.f32.mrb[0].mxu0
      %1429 = vmatprep.mubr.bf16.mxu0 0
      %1430 = vmatmul.mubr.bf16.gmra.mrb[0].mxu0 %v1023
      %v1431 = vpop.f32.mrb[0].mxu0
      %v1432 = vadd.f32 %v1271, %v1431
      %v1433 = vpop.f32.mrb[0].mxu0
      %v1434 = vpop.f32.mrb[0].mxu0
      %v1435 = vadd.f32 %v1274, %v1434
      %v1436 = vpop.f32.mrb[0].mxu0
      %1437 = vmatprep.mubr.bf16.mxu0 0
      %1438 = vmatmul.mubr.bf16.gmra.mrb[0].mxu0 %v1026
      %v1439 = vpop.f32.mrb[0].mxu0
      %v1440 = vadd.f32 %v1279, %v1439
      %v1441 = vpop.f32.mrb[0].mxu0
      %v1442 = vpop.f32.mrb[0].mxu0
      %v1443 = vadd.f32 %v1282, %v1442
      %v1444 = vpop.f32.mrb[0].mxu0
      %1445 = vmatprep.mubr.bf16.mxu0 0
      %1446 = vmatmul.mubr.bf16.gmra.mrb[0].mxu0 %v1029
      %v1447 = vpop.f32.mrb[0].mxu0
      %v1448 = vadd.f32 %v1287, %v1447
      %v1449 = vpop.f32.mrb[0].mxu0
      %v1450 = vpop.f32.mrb[0].mxu0
      %v1451 = vadd.f32 %v1290, %v1450
      %v1452 = vpop.f32.mrb[0].mxu0
      %1453 = vmatprep.mubr.bf16.mxu0 0
      %1454 = vmatmul.mubr.bf16.gmra.mrb[0].mxu0 %v1032
      %v1455 = vpop.f32.mrb[0].mxu0
      %v1456 = vadd.f32 %v1295, %v1455
      %v1457 = vpop.f32.mrb[0].mxu0
      %v1458 = vpop.f32.mrb[0].mxu0
      %v1459 = vadd.f32 %v1298, %v1458
      %v1460 = vpop.f32.mrb[0].mxu0
      %1461 = vmatprep.mubr.bf16.mxu0 0
      %1462 = vmatmul.mubr.bf16.gmra.mrb[0].mxu0 %v1035
      %v1463 = vpop.f32.mrb[0].mxu0
      %v1464 = vadd.f32 %v1303, %v1463
      %v1465 = vpop.f32.mrb[0].mxu0
      %v1466 = vpop.f32.mrb[0].mxu0
      %v1467 = vadd.f32 %v1306, %v1466
      %v1468 = vpop.f32.mrb[0].mxu0
      %1469 = vmatprep.mubr.bf16.mxu0 0
      %1470 = vmatmul.mubr.bf16.gmra.mrb[0].mxu0 %v1038
      %v1471 = vpop.f32.mrb[0].mxu0
      %v1472 = vadd.f32 %v1311, %v1471
      %v1473 = vpop.f32.mrb[0].mxu0
      %v1474 = vpop.f32.mrb[0].mxu0
      %v1475 = vadd.f32 %v1314, %v1474
      %v1476 = vpop.f32.mrb[0].mxu0
      %1477 = vmatprep.mubr.bf16.mxu0 0
      %1478 = vmatmul.mubr.bf16.gmra.mrb[0].mxu0 %v1041
      %v1479 = vpop.f32.mrb[0].mxu0
      %v1480 = vadd.f32 %v1319, %v1479
      %v1481 = vpop.f32.mrb[0].mxu0
      %v1482 = vpop.f32.mrb[0].mxu0
      %v1483 = vadd.f32 %v1322, %v1482
      %v1484 = vpop.f32.mrb[0].mxu0
      %1485 = vmatprep.mubr.bf16.mxu0 0
      %1486 = vmatmul.mubr.bf16.gmra.mrb[0].mxu0 %v1044
      %v1487 = vpop.f32.mrb[0].mxu0
      %v1488 = vadd.f32 %v1327, %v1487
      %v1489 = vpop.f32.mrb[0].mxu0
      %v1490 = vpop.f32.mrb[0].mxu0
      %v1491 = vadd.f32 %v1330, %v1490
      %v1492 = vpop.f32.mrb[0].mxu0
      %1493 = vmatprep.mubr.bf16.mxu0 0
      %1494 = vmatmul.mubr.bf16.gmra.mrb[0].mxu0 %v1047
      %v1495 = vpop.f32.mrb[0].mxu0
      %v1496 = vadd.f32 %v1335, %v1495
      %v1497 = vpop.f32.mrb[0].mxu0
      %v1498 = vpop.f32.mrb[0].mxu0
      %v1499 = vadd.f32 %v1338, %v1498
      %v1500 = vpop.f32.mrb[0].mxu0
      %1501 = vmatprep.mubr.bf16.mxu0 0
      %1502 = vmatmul.mubr.bf16.gmra.mrb[0].mxu0 %v1050
      %v1503 = vpop.f32.mrb[0].mxu0
      %v1504 = vadd.f32 %v1343, %v1503
      %v1505 = vpop.f32.mrb[0].mxu0
      %v1506 = vpop.f32.mrb[0].mxu0
      %v1507 = vadd.f32 %v1346, %v1506
      %v1508 = vpop.f32.mrb[0].mxu0
      %1509 = vmatprep.mubr.bf16.mxu0 0
      %1510 = vmatmul.mubr.bf16.gmra.mrb[0].mxu0 %v1053
      %v1511 = vpop.f32.mrb[0].mxu0
      %v1512 = vadd.f32 %v1351, %v1511
      %v1513 = vpop.f32.mrb[0].mxu0
      %v1514 = vpop.f32.mrb[0].mxu0
      %v1515 = vadd.f32 %v1354, %v1514
      %v1516 = vpop.f32.mrb[0].mxu0
      %1517 = vmatprep.mubr.bf16.mxu0 0
      %1518 = vmatmul.mubr.bf16.gmra.mrb[0].mxu0 %v1056
      %v1519 = vpop.f32.mrb[0].mxu0
      %v1520 = vadd.f32 %v1359, %v1519
      %v1521 = vpop.f32.mrb[0].mxu0
      %v1522 = vpop.f32.mrb[0].mxu0
      %v1523 = vadd.f32 %v1362, %v1522
      %v1524 = vpop.f32.mrb[0].mxu0
      %1525 = vmatprep.mubr.bf16.mxu0 0
      %1526 = vmatmul.mubr.bf16.gmra.mrb[0].mxu0 %v1059
      %v1527 = vpop.f32.mrb[0].mxu0
      %v1528 = vadd.f32 %v1367, %v1527
      %v1529 = vpop.f32.mrb[0].mxu0
      %v1530 = vpop.f32.mrb[0].mxu0
      %v1531 = vadd.f32 %v1370, %v1530
      %v1532 = vpop.f32.mrb[0].mxu0
      %1533 = vmatprep.mubr.bf16.mxu0 0
      %1534 = vmatmul.mubr.bf16.gmra.mrb[0].mxu0 %v1062
      %v1535 = vpop.f32.mrb[0].mxu0
      %v1536 = vadd.f32 %v1375, %v1535
      %v1537 = vpop.f32.mrb[0].mxu0
      %v1538 = vpop.f32.mrb[0].mxu0
      %v1539 = vadd.f32 %v1378, %v1538
      %v1540 = vpop.f32.mrb[0].mxu0
      %1541 = vmatprep.mubr.bf16.mxu0 0
      %1542 = vmatmul.mubr.bf16.gmra.mrb[0].mxu0 %v1065
      %v1543 = vpop.f32.mrb[0].mxu0
      %v1544 = vadd.f32 %v1383, %v1543
      %v1545 = vpop.f32.mrb[0].mxu0
      %v1546 = vpop.f32.mrb[0].mxu0
      %v1547 = vadd.f32 %v1386, %v1546
      %v1548 = vpop.f32.mrb[0].mxu0
      %1549 = vdwg.mxu0
      %v1550 = vld [vmem:[%s218] sm:$0xff]
      %v1551 = vld [vmem:[%s218 + $0x8] sm:$0xff]
      %v1552 = vld [vmem:[%s218 + $0x10] sm:$0xff]
      %v1553 = vld [vmem:[%s218 + $0x18] sm:$0xff]
      %v1554 = vld [vmem:[%s218 + $0x20] sm:$0xff]
      %v1555 = vld [vmem:[%s218 + $0x28] sm:$0xff]
      %v1556 = vld [vmem:[%s218 + $0x30] sm:$0xff]
      %v1557 = vld [vmem:[%s218 + $0x38] sm:$0xff]
      %v1558 = vld [vmem:[%s218 + $0x40] sm:$0xff]
      %v1559 = vld [vmem:[%s218 + $0x48] sm:$0xff]
      %v1560 = vld [vmem:[%s218 + $0x50] sm:$0xff]
      %v1561 = vld [vmem:[%s218 + $0x58] sm:$0xff]
      %v1562 = vld [vmem:[%s218 + $0x60] sm:$0xff]
      %v1563 = vld [vmem:[%s218 + $0x68] sm:$0xff]
      %v1564 = vld [vmem:[%s218 + $0x70] sm:$0xff]
      %v1565 = vld [vmem:[%s218 + $0x78] sm:$0xff]
      %v1566 = vld [vmem:[%s218 + $0x80] sm:$0xff]
      %v1567 = vld [vmem:[%s218 + $0x88] sm:$0xff]
      %v1568 = vld [vmem:[%s218 + $0x90] sm:$0xff]
      %v1569 = vld [vmem:[%s218 + $0x98] sm:$0xff]
      %v1570 = vld [vmem:[%s218 + $0xa0] sm:$0xff]
      %v1571 = vld [vmem:[%s218 + $0xa8] sm:$0xff]
      %v1572 = vld [vmem:[%s218 + $0xb0] sm:$0xff]
      %v1573 = vld [vmem:[%s218 + $0xb8] sm:$0xff]
      %v1574 = vld [vmem:[%s218 + $0xc0] sm:$0xff]
      %v1575 = vld [vmem:[%s218 + $0xc8] sm:$0xff]
      %v1576 = vld [vmem:[%s218 + $0xd0] sm:$0xff]
      %v1577 = vld [vmem:[%s218 + $0xd8] sm:$0xff]
      %v1578 = vld [vmem:[%s218 + $0xe0] sm:$0xff]
      %v1579 = vld [vmem:[%s218 + $0xe8] sm:$0xff]
      %v1580 = vld [vmem:[%s218 + $0xf0] sm:$0xff]
      %v1581 = vld [vmem:[%s218 + $0xf8] sm:$0xff]
      %v1582 = vadd.f32 %v1424, %v1550
      %v1583 = vadd.f32 %v1427, %v1551
      %v1584 = vadd.f32 %v1432, %v1552
      %v1585 = vadd.f32 %v1435, %v1553
      %v1586 = vadd.f32 %v1440, %v1554
      %v1587 = vadd.f32 %v1443, %v1555
      %v1588 = vadd.f32 %v1448, %v1556
      %v1589 = vadd.f32 %v1451, %v1557
      %v1590 = vadd.f32 %v1456, %v1558
      %v1591 = vadd.f32 %v1459, %v1559
      %v1592 = vadd.f32 %v1464, %v1560
      %v1593 = vadd.f32 %v1467, %v1561
      %v1594 = vadd.f32 %v1472, %v1562
      %v1595 = vadd.f32 %v1475, %v1563
      %v1596 = vadd.f32 %v1480, %v1564
      %v1597 = vadd.f32 %v1483, %v1565
      %v1598 = vadd.f32 %v1488, %v1566
      %v1599 = vadd.f32 %v1491, %v1567
      %v1600 = vadd.f32 %v1496, %v1568
      %v1601 = vadd.f32 %v1499, %v1569
      %v1602 = vadd.f32 %v1504, %v1570
      %v1603 = vadd.f32 %v1507, %v1571
      %v1604 = vadd.f32 %v1512, %v1572
      %v1605 = vadd.f32 %v1515, %v1573
      %v1606 = vadd.f32 %v1520, %v1574
      %v1607 = vadd.f32 %v1523, %v1575
      %v1608 = vadd.f32 %v1528, %v1576
      %v1609 = vadd.f32 %v1531, %v1577
      %v1610 = vadd.f32 %v1536, %v1578
      %v1611 = vadd.f32 %v1539, %v1579
      %v1612 = vadd.f32 %v1544, %v1580
      %v1613 = vadd.f32 %v1547, %v1581
      %vm1614 = vcmask 23552
      %1615 = vst.msk [vmem:[%s224] sm:$0xff] %vm1614, %v1582
      %1616 = vst.msk [vmem:[%s224 + $0x8] sm:$0xff] %vm1614, %v1583
      %1617 = vst.msk [vmem:[%s224 + $0x10] sm:$0xff] %vm1614, %v1584
      %1618 = vst.msk [vmem:[%s224 + $0x18] sm:$0xff] %vm1614, %v1585
      %1619 = vst.msk [vmem:[%s224 + $0x20] sm:$0xff] %vm1614, %v1586
      %1620 = vst.msk [vmem:[%s224 + $0x28] sm:$0xff] %vm1614, %v1587
      %1621 = vst.msk [vmem:[%s224 + $0x30] sm:$0xff] %vm1614, %v1588
      %1622 = vst.msk [vmem:[%s224 + $0x38] sm:$0xff] %vm1614, %v1589
      %1623 = vst.msk [vmem:[%s224 + $0x40] sm:$0xff] %vm1614, %v1590
      %1624 = vst.msk [vmem:[%s224 + $0x48] sm:$0xff] %vm1614, %v1591
      %1625 = vst.msk [vmem:[%s224 + $0x50] sm:$0xff] %vm1614, %v1592
      %1626 = vst.msk [vmem:[%s224 + $0x58] sm:$0xff] %vm1614, %v1593
      %1627 = vst.msk [vmem:[%s224 + $0x60] sm:$0xff] %vm1614, %v1594
      %1628 = vst.msk [vmem:[%s224 + $0x68] sm:$0xff] %vm1614, %v1595
      %1629 = vst.msk [vmem:[%s224 + $0x70] sm:$0xff] %vm1614, %v1596
      %1630 = vst.msk [vmem:[%s224 + $0x78] sm:$0xff] %vm1614, %v1597
      %1631 = vst.msk [vmem:[%s224 + $0x80] sm:$0xff] %vm1614, %v1598
      %1632 = vst.msk [vmem:[%s224 + $0x88] sm:$0xff] %vm1614, %v1599
      %1633 = vst.msk [vmem:[%s224 + $0x90] sm:$0xff] %vm1614, %v1600
      %1634 = vst.msk [vmem:[%s224 + $0x98] sm:$0xff] %vm1614, %v1601
      %1635 = vst.msk [vmem:[%s224 + $0xa0] sm:$0xff] %vm1614, %v1602
      %1636 = vst.msk [vmem:[%s224 + $0xa8] sm:$0xff] %vm1614, %v1603
      %1637 = vst.msk [vmem:[%s224 + $0xb0] sm:$0xff] %vm1614, %v1604
      %1638 = vst.msk [vmem:[%s224 + $0xb8] sm:$0xff] %vm1614, %v1605
      %1639 = vst.msk [vmem:[%s224 + $0xc0] sm:$0xff] %vm1614, %v1606
      %1640 = vst.msk [vmem:[%s224 + $0xc8] sm:$0xff] %vm1614, %v1607
      %1641 = vst.msk [vmem:[%s224 + $0xd0] sm:$0xff] %vm1614, %v1608
      %1642 = vst.msk [vmem:[%s224 + $0xd8] sm:$0xff] %vm1614, %v1609
      %1643 = vst.msk [vmem:[%s224 + $0xe0] sm:$0xff] %vm1614, %v1610
      %1644 = vst.msk [vmem:[%s224 + $0xe8] sm:$0xff] %vm1614, %v1611
      %1645 = vst.msk [vmem:[%s224 + $0xf0] sm:$0xff] %vm1614, %v1612
      %1646 = vst.msk [vmem:[%s224 + $0xf8] sm:$0xff] %vm1614, %v1613
      %s1647 = smul.u32 32, %s15
      %p1648 = scmp.lt.s32.totalorder %s1647, 63
      %s1649 = scalar_select %p1648, %s1647, 63
      %s1650 = smul.addr %s1649, 8
      %s1651 = scalar_lea.vmem %s4, %s1650
      // Predicated region
      $region37: #{dncnn_forward.11} parent=35 // pred_check
        %p1652 = pneg %p127
      $region38: #{dncnn_forward.11} parent=35 // pred_check_branch
        %1654 = sbr.rel (%p1652) target = $region40
      $region39: #{dncnn_forward.11} parent=35 // pred_region
        %s1655 = smul.u32 32, %s15
      $region40: #{dncnn_forward.11} parent=35 // pred_fallthru
        _
    $region36: #{dncnn_forward.11} parent=5 // pred_fallthru
      _
    %p1656 = scmp.le.s32.totalorder 2, %s10
    // Predicated region
    $region41: #{dncnn_forward.11} parent=5 // pred_check
      %p1657 = pneg %p1656
    $region42: #{dncnn_forward.11} parent=5 // pred_check_branch
      %1659 = sbr.rel (%p1657) target = $region44
    $region43: #{dncnn_forward.11} parent=5 // pred_region
      %s1660 = ssub.s32 %s10, 2
      // Predicated region
      $region45: #{dncnn_forward.11} parent=43 // pred_check
        %p1661 = pneg %p133
      $region46: #{dncnn_forward.11} parent=43 // pred_check_branch
        %1663 = sbr.rel (%p1661) target = $region48
      $region47: #{dncnn_forward.11} parent=43 // pred_region
        %s1664 = smul.u32 32, %s16
        %p1665 = scmp.lt.s32.totalorder %s1664, 63
        %s1666 = scalar_select %p1665, %s1664, 63
        %s1667 = smul.addr %s1666, 8
        %s1668 = scalar_lea.vmem %s4, %s1667
      $region48: #{dncnn_forward.11} parent=43 // pred_fallthru
        _
    $region44: #{dncnn_forward.11} parent=5 // pred_fallthru
      _
  $region6: #{dncnn_forward.11} parent=0 // loop_footer
    %s14 = sadd.s32 1, %s10
  $region7: #{dncnn_forward.11} parent=0 // loop_footer_branch
    %9 = sbr.rel target = $region3
  $region8: #{dncnn_forward.11} parent=0 // loop_exit
    _

</llo_original>
